<compile_context>
chip_gen: v5e
topology: v5e:2x2
jax: 0.10.0
libtpu: 0.0.40
codegen_flags: <defaults>
</compile_context>

<pallas_src>
import functools

import jax
import jax.numpy as jnp
from jax import lax
from jax.experimental import pallas as pl
from jax.experimental.pallas import tpu as pltpu


# ------------------------------ small helpers ------------------------------ #

def _round_up(x, m):
    return -(-x // m) * m


def _choose_spatial_tile(P, target=2048):
    """Rows of the im2col matrix per grid step (multiple of 8, ~target).

    target ~2048 keeps per-step fixed overhead (~0.35 us) well below the DMA
    time of a patch tile while double-buffered bf16 tiles stay ~1.2 MiB.
    """
    n_tiles = max(1, -(-P // target))
    return _round_up(-(-P // n_tiles), 8)


# ------------------ kernel 1: stem conv matmul + global pool ---------------- #

def _stem_pool_kernel(patches_ref, wc_ref, bc_ref, pooled_ref, pool_acc,
                      *, n_pad_rows, inv_pool):
    """[TP, 147] @ [147, 64] + bias, ReLU, accumulate row-sum into pool_acc;
    finalize (pad-row bias correction + 1/P) on the last spatial tile."""
    pj = pl.program_id(1)

    @pl.when(pj == 0)
    def _init():
        pool_acc[...] = jnp.zeros_like(pool_acc)

    x = patches_ref[0]                                           # [TP, CKK] bf16
    acc = jnp.dot(x, wc_ref[...], preferred_element_type=jnp.float32)
    act = jnp.maximum(acc + bc_ref[...], 0.0)                    # [TP, COUT] f32

    # Global average pool folded into the spatial (reduction) grid axis.
    # TODO(synk): if XLU ever binds, accumulate into an [8, COUT] scratch and
    # reduce once in the finalize instead of a per-tile cross-sublane sum.
    pool_acc[...] += jnp.sum(act, axis=0, keepdims=True)         # [1, COUT]

    @pl.when(pj == pl.num_programs(1) - 1)
    def _finalize():
        total = pool_acc[...]
        if n_pad_rows:
            # Zero-padded rows contribute exactly relu(bias) each; remove once
            # here instead of masking every tile with an iota/where.
            total = total - float(n_pad_rows) * jnp.maximum(bc_ref[...], 0.0)
        pooled_ref[0] = total * inv_pool                         # [1, COUT]


# ---------------- kernel 2: proj + bbox_pred MLP, batched over N ------------ #

def _mlp_kernel(pooled_ref, wp_ref, bp_ref, w1_ref, b1_ref, w2_ref, b2_ref,
                w3_ref, b3_ref, out_ref):
    h = pooled_ref[...].astype(jnp.bfloat16)                     # [N, COUT]
    h = jnp.maximum(jnp.dot(h, wp_ref[...],
                            preferred_element_type=jnp.float32) + bp_ref[...], 0.0)
    h = jnp.maximum(jnp.dot(h.astype(jnp.bfloat16), w1_ref[...],
                            preferred_element_type=jnp.float32) + b1_ref[...], 0.0)
    h = jnp.maximum(jnp.dot(h.astype(jnp.bfloat16), w2_ref[...],
                            preferred_element_type=jnp.float32) + b2_ref[...], 0.0)
    out_ref[...] = jnp.dot(h.astype(jnp.bfloat16), w3_ref[...],
                           preferred_element_type=jnp.float32) + b3_ref[...]


# --------------------------------- wrapper ---------------------------------- #

def faster_rcnn_encoder_forward(x_nchw, p):
    # TODO(synk): the full ResNet50-FPN backbone, RPN proposal/anchor
    # generation, NMS, RoIAlign and per-image transforms/postprocess are
    # data-dependent / dynamic-shape and are not translated; only the dense
    # stem-conv -> pooled-feature -> bbox_pred MLP hot-path runs in Pallas.
    N = x_nchw.shape[0]
    Cout, Cin, K, _ = p["stem_w"].shape
    stride, pad = 2, 3

    # im2col directly in channels-last layout; feature ordering is
    # channel-major / filter-spatial-minor, matching the OIHW weight flatten.
    # TODO(synk): form the 7x7 taps in-kernel from halo'd NHWC row tiles to
    # remove the ~12x im2col HBM read expansion entirely (biggest remaining
    # win while the streaming loop is HBM-bound).
    patches = lax.conv_general_dilated_patches(
        x_nchw,
        filter_shape=(K, K),
        window_strides=(stride, stride),
        padding=((pad, pad), (pad, pad)),
        dimension_numbers=("NCHW", "OIHW", "NHWC"),
    )                                                   # [N, Ho, Wo, Cin*K*K]
    _, Ho, Wo, CKK = patches.shape
    P = Ho * Wo

    TP = _choose_spatial_tile(P)
    P_pad = _round_up(P, TP)
    n_tiles = P_pad // TP

    # No contraction-dim padding in HBM: last block dim == full array dim (147)
    # is legal and saves 1.74x streamed bytes vs padding to 256.
    patches = jnp.pad(
        patches.reshape(N, P, CKK),
        ((0, 0), (0, P_pad - P), (0, 0))).astype(jnp.bfloat16)

    # Stem weights: bf16 for the MXU; bias stays f32 (f32 accumulate/epilogue).
    w_conv = p["stem_w"].reshape(Cout, CKK).T.astype(jnp.bfloat16)   # [CKK, Cout]
    b_conv = p["stem_b"].reshape(1, Cout)

    kernel1 = functools.partial(
        _stem_pool_kernel,
        n_pad_rows=int(P_pad - P),
        inv_pool=1.0 / float(P))

    flops1 = 2 * N * P_pad * CKK * Cout
    bytes1 = (N * P_pad * CKK * 2 + CKK * Cout * 2 + Cout * 4 + N * Cout * 4)

    # TODO(synk): on v7x with per-chip batch N < 2, add a parallel spatial
    # split (per-core partial pool accumulators) so both TensorCores are busy.
    pooled = pl.pallas_call(
        kernel1,
        out_shape=jax.ShapeDtypeStruct((N, 1, Cout), jnp.float32),
        grid_spec=pltpu.PrefetchScalarGridSpec(
            num_scalar_prefetch=0,
            grid=(N, n_tiles),
            in_specs=[
                pl.BlockSpec((1, TP, CKK), lambda b, pj: (b, pj, 0)),    # patches
                pl.BlockSpec((CKK, Cout), lambda b, pj: (0, 0)),         # w_conv
                pl.BlockSpec((1, Cout), lambda b, pj: (0, 0)),           # b_conv
            ],
            out_specs=pl.BlockSpec((1, 1, Cout), lambda b, pj: (b, 0, 0)),
            scratch_shapes=[pltpu.VMEM((1, Cout), jnp.float32)],         # pool acc
        ),
        compiler_params=pltpu.CompilerParams(
            dimension_semantics=("parallel", "arbitrary"),   # batch across TCs
            vmem_limit_bytes=32 * 1024 * 1024),
        cost_estimate=pl.CostEstimate(flops=int(flops1), transcendentals=0,
                                      bytes_accessed=int(bytes1)),
    )(patches, w_conv, b_conv)

    pooled = pooled.reshape(N, Cout)

    # bbox_pred MLP weights (bf16 MXU inputs, f32 biases).
    w_proj = p["proj_w"].astype(jnp.bfloat16)
    b_proj = p["proj_b"].reshape(1, -1)
    w1 = p["fc1_w"].astype(jnp.bfloat16)
    b1 = p["fc1_b"].reshape(1, -1)
    w2 = p["fc2_w"].astype(jnp.bfloat16)
    b2 = p["fc2_b"].reshape(1, -1)
    w3 = p["fc3_w"].astype(jnp.bfloat16)
    b3 = p["fc3_b"].reshape(1, -1)
    D_proj, H1, H2, H3 = w_proj.shape[1], w1.shape[1], w2.shape[1], w3.shape[1]

    flops2 = 2 * N * (Cout * D_proj + D_proj * H1 + H1 * H2 + H2 * H3)
    bytes2 = (N * Cout * 4
              + (Cout * D_proj + D_proj * H1 + H1 * H2 + H2 * H3) * 2
              + (D_proj + H1 + H2 + H3) * 4 + N * H3 * 4)

    out = pl.pallas_call(
        _mlp_kernel,
        out_shape=jax.ShapeDtypeStruct((N, H3), jnp.float32),
        grid=(1,),
        in_specs=[
            pl.BlockSpec((N, Cout), lambda i: (0, 0)),        # pooled
            pl.BlockSpec((Cout, D_proj), lambda i: (0, 0)),   # w_proj
            pl.BlockSpec((1, D_proj), lambda i: (0, 0)),      # b_proj
            pl.BlockSpec((D_proj, H1), lambda i: (0, 0)),     # w1
            pl.BlockSpec((1, H1), lambda i: (0, 0)),          # b1
            pl.BlockSpec((H1, H2), lambda i: (0, 0)),         # w2
            pl.BlockSpec((1, H2), lambda i: (0, 0)),          # b2
            pl.BlockSpec((H2, H3), lambda i: (0, 0)),         # w3
            pl.BlockSpec((1, H3), lambda i: (0, 0)),          # b3
        ],
        out_specs=pl.BlockSpec((N, H3), lambda i: (0, 0)),
        compiler_params=pltpu.CompilerParams(
            dimension_semantics=("arbitrary",),
            vmem_limit_bytes=32 * 1024 * 1024),
        cost_estimate=pl.CostEstimate(flops=int(flops2), transcendentals=0,
                                      bytes_accessed=int(bytes2)),
    )(pooled, w_proj, b_proj, w1, b1, w2, b2, w3, b3)

    return out


# ------------------------------ pure-JAX reference -------------------------- #

def _reference_forward(x_nchw, p):
    conv = lax.conv_general_dilated(
        x_nchw, p["stem_w"], window_strides=(2, 2), padding=((3, 3), (3, 3)),
        dimension_numbers=("NCHW", "OIHW", "NHWC"))
    conv = jax.nn.relu(conv + p["stem_b"])                        # [N, Ho, Wo, 64]
    pooled = conv.reshape(conv.shape[0], -1, conv.shape[-1]).mean(axis=1)
    h = jax.nn.relu(pooled @ p["proj_w"] + p["proj_b"])
    h = jax.nn.relu(h @ p["fc1_w"] + p["fc1_b"])
    h = jax.nn.relu(h @ p["fc2_w"] + p["fc2_b"])
    return h @ p["fc3_w"] + p["fc3_b"]


# --------------------------------- parameters -------------------------------- #

def init_params(key):
    ks = jax.random.split(key, 5)

    def dense(k, fan_in, shape):
        return jax.random.normal(k, shape, jnp.float32) * (1.0 / float(fan_in) ** 0.5)

    return {
        # stem conv: Conv2d(3, 64, kernel_size=7, stride=2, padding=3) (OIHW)
        "stem_w": dense(ks[0], 3 * 7 * 7, (64, 3, 7, 7)),
        "stem_b": jnp.zeros((64,), jnp.float32),
        # projection of pooled stem features into the 1024-d RoI-head space
        "proj_w": dense(ks[1], 64, (64, 1024)),
        "proj_b": jnp.zeros((1024,), jnp.float32),
        # custom bbox_pred MLP: Linear(1024,512)->ReLU->Linear(512,256)->ReLU->Linear(256,128)
        "fc1_w": dense(ks[2], 1024, (1024, 512)),
        "fc1_b": jnp.zeros((512,), jnp.float32),
        "fc2_w": dense(ks[3], 512, (512, 256)),
        "fc2_b": jnp.zeros((256,), jnp.float32),
        "fc3_w": dense(ks[4], 256, (256, 128)),
        "fc3_b": jnp.zeros((128,), jnp.float32),
    }


# ----------------------------------- main ------------------------------------ #

if __name__ == "__main__":
    key = jax.random.PRNGKey(0)
    k_params, k_x = jax.random.split(key)

    params = init_params(k_params)
    # Small detector-style input: batch=2, 3-channel image, 32x32 spatial (NCHW).
    x = jax.random.normal(k_x, (2, 3, 32, 32), jnp.float32)

    fwd = jax.jit(faster_rcnn_encoder_forward)
    out = jax.block_until_ready(fwd(x, params))

    assert out.shape == (2, 128), out.shape
    assert bool(jnp.all(jnp.isfinite(out)))

    # Correctness check of the Pallas path vs an independent f32 reference.
    ref = jax.block_until_ready(jax.jit(_reference_forward)(x, params))
    rel_err = float(jnp.max(jnp.abs(out - ref)) / (jnp.max(jnp.abs(ref)) + 1e-6))
    assert rel_err < 5e-2, rel_err

    print("KERNEL_OK")
</pallas_src>

<mosaic_0001>
module attributes {stable_mosaic.version = 11 : i64} {
  func.func @_stem_pool_kernel(%arg0: i32, %arg1: i32, %arg2: memref<1x256x147xbf16, #tpu.memory_space<vmem>>, %arg3: memref<147x64xbf16, #tpu.memory_space<vmem>>, %arg4: memref<1x64xf32, #tpu.memory_space<vmem>>, %arg5: memref<1x1x64xf32, #tpu.memory_space<vmem>>, %arg6: memref<1x64xf32, #tpu.memory_space<vmem>>) attributes {dimension_semantics = [#tpu.dimension_semantics<parallel>, #tpu.dimension_semantics<arbitrary>], iteration_bounds = array<i64: 2, 1>, scalar_prefetch = 0 : i64, scratch_operands = 1 : i64, tpu.core_type = #tpu.core_type<tc>, window_params = [{transform_indices = @transform_0, window_bounds = array<i64: 1, 256, 147>}, {pipeline_mode = #tpu.pipeline_mode<synchronous>, transform_indices = @transform_1, window_bounds = array<i64: 147, 64>}, {pipeline_mode = #tpu.pipeline_mode<synchronous>, transform_indices = @transform_2, window_bounds = array<i64: 1, 64>}, {transform_indices = @transform_3, window_bounds = array<i64: 1, 1, 64>}]} {
    %c0_i32 = arith.constant 0 : i32
    %0 = arith.cmpi eq, %arg1, %c0_i32 : i32
    %1 = arith.extui %0 : i1 to i32
    %c0_i32_0 = arith.constant 0 : i32
    %2 = arith.cmpi ne, %1, %c0_i32_0 : i32
    scf.if %2 {
      %cst_15 = arith.constant 0.000000e+00 : f32
      %20 = vector.broadcast %cst_15 : f32 to vector<1x64xf32>
      %c0_16 = arith.constant 0 : index
      %c0_17 = arith.constant 0 : index
      %21 = vector.load %arg6[%c0_16, %c0_17] : memref<1x64xf32, #tpu.memory_space<vmem>>, vector<1x64xf32>
      tpu.vector_store %arg6[%c0_16, %c0_17], %20 {strides = array<i32>} : memref<1x64xf32, #tpu.memory_space<vmem>>, vector<1x64xf32>,
    } else {
    }
    %c0 = arith.constant 0 : index
    %c0_1 = arith.constant 0 : index
    %c0_2 = arith.constant 0 : index
    %3 = vector.load %arg2[%c0, %c0_1, %c0_2] : memref<1x256x147xbf16, #tpu.memory_space<vmem>>, vector<1x256x147xbf16>
    %4 = vector.shape_cast %3 : vector<1x256x147xbf16> to vector<256x147xbf16>
    %c0_3 = arith.constant 0 : index
    %c0_4 = arith.constant 0 : index
    %5 = vector.load %arg3[%c0_3, %c0_4] : memref<147x64xbf16, #tpu.memory_space<vmem>>, vector<147x64xbf16>
    %cst = arith.constant dense<0.000000e+00> : vector<256x64xf32>
    %6 = tpu.matmul %4, %5, %cst {dimension_numbers = #tpu.dot_dimension_numbers<[1], [0], [0], [1], [0, 0, 1, 1], [], []>} : vector<256x147xbf16>, vector<147x64xbf16>, vector<256x64xf32> -> vector<256x64xf32>
    %c0_5 = arith.constant 0 : index
    %c0_6 = arith.constant 0 : index
    %7 = vector.load %arg4[%c0_5, %c0_6] : memref<1x64xf32, #tpu.memory_space<vmem>>, vector<1x64xf32>
    %8 = vector.broadcast %7 : vector<1x64xf32> to vector<256x64xf32>
    %9 = arith.addf %6, %8 : vector<256x64xf32>
    %cst_7 = arith.constant 0.000000e+00 : f32
    %10 = vector.broadcast %cst_7 : f32 to vector<256x64xf32>
    %11 = arith.maximumf %9, %10 : vector<256x64xf32>
    %c0_8 = arith.constant 0 : index
    %c0_9 = arith.constant 0 : index
    %12 = vector.load %arg6[%c0_8, %c0_9] : memref<1x64xf32, #tpu.memory_space<vmem>>, vector<1x64xf32>
    %cst_10 = arith.constant dense<0.000000e+00> : vector<64xf32>
    %13 = vector.multi_reduction <add>, %11, %cst_10 [0] : vector<256x64xf32> to vector<64xf32>
    %14 = vector.shape_cast %13 : vector<64xf32> to vector<1x64xf32>
    %15 = arith.addf %12, %14 : vector<1x64xf32>
    %c0_11 = arith.constant 0 : index
    %c0_12 = arith.constant 0 : index
    %16 = vector.load %arg6[%c0_11, %c0_12] : memref<1x64xf32, #tpu.memory_space<vmem>>, vector<1x64xf32>
    tpu.vector_store %arg6[%c0_11, %c0_12], %15 {strides = array<i32>} : memref<1x64xf32, #tpu.memory_space<vmem>>, vector<1x64xf32>,
    %c0_i32_13 = arith.constant 0 : i32
    %17 = arith.cmpi eq, %arg1, %c0_i32_13 : i32
    %18 = arith.extui %17 : i1 to i32
    %c0_i32_14 = arith.constant 0 : i32
    %19 = arith.cmpi ne, %18, %c0_i32_14 : i32
    scf.if %19 {
      %c0_15 = arith.constant 0 : index
      %c0_16 = arith.constant 0 : index
      %20 = vector.load %arg6[%c0_15, %c0_16] : memref<1x64xf32, #tpu.memory_space<vmem>>, vector<1x64xf32>
      %cst_17 = arith.constant 3.906250e-03 : f32
      %21 = vector.broadcast %cst_17 : f32 to vector<1x64xf32>
      %22 = arith.mulf %20, %21 : vector<1x64xf32>
      %c0_18 = arith.constant 0 : index
      %c0_19 = arith.constant 0 : index
      %c0_20 = arith.constant 0 : index
      %23 = vector.load %arg5[%c0_18, %c0_19, %c0_20] : memref<1x1x64xf32, #tpu.memory_space<vmem>>, vector<1x1x64xf32>
      %24 = vector.shape_cast %23 : vector<1x1x64xf32> to vector<1x64xf32>
      %25 = vector.shape_cast %22 : vector<1x64xf32> to vector<1x1x64xf32>
      tpu.vector_store %arg5[%c0_18, %c0_19, %c0_20], %25 {strides = array<i32>} : memref<1x1x64xf32, #tpu.memory_space<vmem>>, vector<1x1x64xf32>,
    } else {
    }
    return
  }
  func.func @transform_0(%arg0: i32, %arg1: i32) -> (i32, i32, i32) {
    %c0_i32 = arith.constant 0 : i32
    %c0_i32_0 = arith.constant 0 : i32
    return %arg0, %arg1, %c0_i32 : i32, i32, i32
  }
  func.func @transform_1(%arg0: i32, %arg1: i32) -> (i32, i32) {
    %c0_i32 = arith.constant 0 : i32
    %c0_i32_0 = arith.constant 0 : i32
    %c0_i32_1 = arith.constant 0 : i32
    return %c0_i32, %c0_i32_0 : i32, i32
  }
  func.func @transform_2(%arg0: i32, %arg1: i32) -> (i32, i32) {
    %c0_i32 = arith.constant 0 : i32
    %c0_i32_0 = arith.constant 0 : i32
    %c0_i32_1 = arith.constant 0 : i32
    return %c0_i32, %c0_i32_0 : i32, i32
  }
  func.func @transform_3(%arg0: i32, %arg1: i32) -> (i32, i32, i32) {
    %c0_i32 = arith.constant 0 : i32
    %c0_i32_0 = arith.constant 0 : i32
    %c0_i32_1 = arith.constant 0 : i32
    return %arg0, %c0_i32, %c0_i32_0 : i32, i32, i32
  }
}

module attributes {stable_mosaic.version = 11 : i64} {
  func.func @_mlp_kernel(%arg0: i32, %arg1: memref<2x64xf32, #tpu.memory_space<vmem>>, %arg2: memref<64x1024xbf16, #tpu.memory_space<vmem>>, %arg3: memref<1x1024xf32, #tpu.memory_space<vmem>>, %arg4: memref<1024x512xbf16, #tpu.memory_space<vmem>>, %arg5: memref<1x512xf32, #tpu.memory_space<vmem>>, %arg6: memref<512x256xbf16, #tpu.memory_space<vmem>>, %arg7: memref<1x256xf32, #tpu.memory_space<vmem>>, %arg8: memref<256x128xbf16, #tpu.memory_space<vmem>>, %arg9: memref<1x128xf32, #tpu.memory_space<vmem>>, %arg10: memref<2x128xf32, #tpu.memory_space<vmem>>) attributes {dimension_semantics = [#tpu.dimension_semantics<arbitrary>], iteration_bounds = array<i64: 1>, scalar_prefetch = 0 : i64, scratch_operands = 0 : i64, tpu.core_type = #tpu.core_type<tc>, window_params = [{pipeline_mode = #tpu.pipeline_mode<synchronous>, transform_indices = @transform_0, window_bounds = array<i64: 2, 64>}, {pipeline_mode = #tpu.pipeline_mode<synchronous>, transform_indices = @transform_1, window_bounds = array<i64: 64, 1024>}, {pipeline_mode = #tpu.pipeline_mode<synchronous>, transform_indices = @transform_2, window_bounds = array<i64: 1, 1024>}, {pipeline_mode = #tpu.pipeline_mode<synchronous>, transform_indices = @transform_3, window_bounds = array<i64: 1024, 512>}, {pipeline_mode = #tpu.pipeline_mode<synchronous>, transform_indices = @transform_4, window_bounds = array<i64: 1, 512>}, {pipeline_mode = #tpu.pipeline_mode<synchronous>, transform_indices = @transform_5, window_bounds = array<i64: 512, 256>}, {pipeline_mode = #tpu.pipeline_mode<synchronous>, transform_indices = @transform_6, window_bounds = array<i64: 1, 256>}, {pipeline_mode = #tpu.pipeline_mode<synchronous>, transform_indices = @transform_7, window_bounds = array<i64: 256, 128>}, {pipeline_mode = #tpu.pipeline_mode<synchronous>, transform_indices = @transform_8, window_bounds = array<i64: 1, 128>}, {pipeline_mode = #tpu.pipeline_mode<synchronous>, transform_indices = @transform_9, window_bounds = array<i64: 2, 128>}]} {
    %c0 = arith.constant 0 : index
    %c0_0 = arith.constant 0 : index
    %0 = vector.load %arg1[%c0, %c0_0] : memref<2x64xf32, #tpu.memory_space<vmem>>, vector<2x64xf32>
    %1 = arith.truncf %0 : vector<2x64xf32> to vector<2x64xbf16>
    %c0_1 = arith.constant 0 : index
    %c0_2 = arith.constant 0 : index
    %2 = vector.load %arg2[%c0_1, %c0_2] : memref<64x1024xbf16, #tpu.memory_space<vmem>>, vector<64x1024xbf16>
    %cst = arith.constant dense<0.000000e+00> : vector<2x1024xf32>
    %3 = tpu.matmul %1, %2, %cst {dimension_numbers = #tpu.dot_dimension_numbers<[1], [0], [0], [1], [0, 0, 1, 1], [], []>} : vector<2x64xbf16>, vector<64x1024xbf16>, vector<2x1024xf32> -> vector<2x1024xf32>
    %c0_3 = arith.constant 0 : index
    %c0_4 = arith.constant 0 : index
    %4 = vector.load %arg3[%c0_3, %c0_4] : memref<1x1024xf32, #tpu.memory_space<vmem>>, vector<1x1024xf32>
    %5 = vector.broadcast %4 : vector<1x1024xf32> to vector<2x1024xf32>
    %6 = arith.addf %3, %5 : vector<2x1024xf32>
    %cst_5 = arith.constant 0.000000e+00 : f32
    %7 = vector.broadcast %cst_5 : f32 to vector<2x1024xf32>
    %8 = arith.maximumf %6, %7 : vector<2x1024xf32>
    %9 = arith.truncf %8 : vector<2x1024xf32> to vector<2x1024xbf16>
    %c0_6 = arith.constant 0 : index
    %c0_7 = arith.constant 0 : index
    %10 = vector.load %arg4[%c0_6, %c0_7] : memref<1024x512xbf16, #tpu.memory_space<vmem>>, vector<1024x512xbf16>
    %cst_8 = arith.constant dense<0.000000e+00> : vector<2x512xf32>
    %11 = tpu.matmul %9, %10, %cst_8 {dimension_numbers = #tpu.dot_dimension_numbers<[1], [0], [0], [1], [0, 0, 1, 1], [], []>} : vector<2x1024xbf16>, vector<1024x512xbf16>, vector<2x512xf32> -> vector<2x512xf32>
    %c0_9 = arith.constant 0 : index
    %c0_10 = arith.constant 0 : index
    %12 = vector.load %arg5[%c0_9, %c0_10] : memref<1x512xf32, #tpu.memory_space<vmem>>, vector<1x512xf32>
    %13 = vector.broadcast %12 : vector<1x512xf32> to vector<2x512xf32>
    %14 = arith.addf %11, %13 : vector<2x512xf32>
    %cst_11 = arith.constant 0.000000e+00 : f32
    %15 = vector.broadcast %cst_11 : f32 to vector<2x512xf32>
    %16 = arith.maximumf %14, %15 : vector<2x512xf32>
    %17 = arith.truncf %16 : vector<2x512xf32> to vector<2x512xbf16>
    %c0_12 = arith.constant 0 : index
    %c0_13 = arith.constant 0 : index
    %18 = vector.load %arg6[%c0_12, %c0_13] : memref<512x256xbf16, #tpu.memory_space<vmem>>, vector<512x256xbf16>
    %cst_14 = arith.constant dense<0.000000e+00> : vector<2x256xf32>
    %19 = tpu.matmul %17, %18, %cst_14 {dimension_numbers = #tpu.dot_dimension_numbers<[1], [0], [0], [1], [0, 0, 1, 1], [], []>} : vector<2x512xbf16>, vector<512x256xbf16>, vector<2x256xf32> -> vector<2x256xf32>
    %c0_15 = arith.constant 0 : index
    %c0_16 = arith.constant 0 : index
    %20 = vector.load %arg7[%c0_15, %c0_16] : memref<1x256xf32, #tpu.memory_space<vmem>>, vector<1x256xf32>
    %21 = vector.broadcast %20 : vector<1x256xf32> to vector<2x256xf32>
    %22 = arith.addf %19, %21 : vector<2x256xf32>
    %cst_17 = arith.constant 0.000000e+00 : f32
    %23 = vector.broadcast %cst_17 : f32 to vector<2x256xf32>
    %24 = arith.maximumf %22, %23 : vector<2x256xf32>
    %25 = arith.truncf %24 : vector<2x256xf32> to vector<2x256xbf16>
    %c0_18 = arith.constant 0 : index
    %c0_19 = arith.constant 0 : index
    %26 = vector.load %arg8[%c0_18, %c0_19] : memref<256x128xbf16, #tpu.memory_space<vmem>>, vector<256x128xbf16>
    %cst_20 = arith.constant dense<0.000000e+00> : vector<2x128xf32>
    %27 = tpu.matmul %25, %26, %cst_20 {dimension_numbers = #tpu.dot_dimension_numbers<[1], [0], [0], [1], [0, 0, 1, 1], [], []>} : vector<2x256xbf16>, vector<256x128xbf16>, vector<2x128xf32> -> vector<2x128xf32>
    %c0_21 = arith.constant 0 : index
    %c0_22 = arith.constant 0 : index
    %28 = vector.load %arg9[%c0_21, %c0_22] : memref<1x128xf32, #tpu.memory_space<vmem>>, vector<1x128xf32>
    %29 = vector.broadcast %28 : vector<1x128xf32> to vector<2x128xf32>
    %30 = arith.addf %27, %29 : vector<2x128xf32>
    %c0_23 = arith.constant 0 : index
    %c0_24 = arith.constant 0 : index
    %31 = vector.load %arg10[%c0_23, %c0_24] : memref<2x128xf32, #tpu.memory_space<vmem>>, vector<2x128xf32>
    tpu.vector_store %arg10[%c0_23, %c0_24], %30 {strides = array<i32>} : memref<2x128xf32, #tpu.memory_space<vmem>>, vector<2x128xf32>,
    return
  }
  func.func @transform_0(%arg0: i32) -> (i32, i32) {
    %c0_i32 = arith.constant 0 : i32
    %c0_i32_0 = arith.constant 0 : i32
    %c0_i32_1 = arith.constant 0 : i32
    return %c0_i32, %c0_i32_0 : i32, i32
  }
  func.func @transform_1(%arg0: i32) -> (i32, i32) {
    %c0_i32 = arith.constant 0 : i32
    %c0_i32_0 = arith.constant 0 : i32
    %c0_i32_1 = arith.constant 0 : i32
    return %c0_i32, %c0_i32_0 : i32, i32
  }
  func.func @transform_2(%arg0: i32) -> (i32, i32) {
    %c0_i32 = arith.constant 0 : i32
    %c0_i32_0 = arith.constant 0 : i32
    %c0_i32_1 = arith.constant 0 : i32
    return %c0_i32, %c0_i32_0 : i32, i32
  }
  func.func @transform_3(%arg0: i32) -> (i32, i32) {
    %c0_i32 = arith.constant 0 : i32
    %c0_i32_0 = arith.constant 0 : i32
    %c0_i32_1 = arith.constant 0 : i32
    return %c0_i32, %c0_i32_0 : i32, i32
  }
  func.func @transform_4(%arg0: i32) -> (i32, i32) {
    %c0_i32 = arith.constant 0 : i32
    %c0_i32_0 = arith.constant 0 : i32
    %c0_i32_1 = arith.constant 0 : i32
    return %c0_i32, %c0_i32_0 : i32, i32
  }
  func.func @transform_5(%arg0: i32) -> (i32, i32) {
    %c0_i32 = arith.constant 0 : i32
    %c0_i32_0 = arith.constant 0 : i32
    %c0_i32_1 = arith.constant 0 : i32
    return %c0_i32, %c0_i32_0 : i32, i32
  }
  func.func @transform_6(%arg0: i32) -> (i32, i32) {
    %c0_i32 = arith.constant 0 : i32
    %c0_i32_0 = arith.constant 0 : i32
    %c0_i32_1 = arith.constant 0 : i32
    return %c0_i32, %c0_i32_0 : i32, i32
  }
  func.func @transform_7(%arg0: i32) -> (i32, i32) {
    %c0_i32 = arith.constant 0 : i32
    %c0_i32_0 = arith.constant 0 : i32
    %c0_i32_1 = arith.constant 0 : i32
    return %c0_i32, %c0_i32_0 : i32, i32
  }
  func.func @transform_8(%arg0: i32) -> (i32, i32) {
    %c0_i32 = arith.constant 0 : i32
    %c0_i32_0 = arith.constant 0 : i32
    %c0_i32_1 = arith.constant 0 : i32
    return %c0_i32, %c0_i32_0 : i32, i32
  }
  func.func @transform_9(%arg0: i32) -> (i32, i32) {
    %c0_i32 = arith.constant 0 : i32
    %c0_i32_0 = arith.constant 0 : i32
    %c0_i32_1 = arith.constant 0 : i32
    return %c0_i32, %c0_i32_0 : i32, i32
  }
}

</mosaic_0001>

<llo_original>
// kernel: faster_rcnn_encoder_forward.2
$region0: #{faster_rcnn_encoder_forward.2}
  #allocation0 [shape = 'u32[]', space=smem, size = 0x4, offset = 0x4, fixed_abs, tag = 'smem constant byte address 0x4 - core index']
  #allocation1 [shape = 'u32[72,128]{1,0:T(1,128)}', space=vmem, size = 0x9000, scoped, tag = 'internal scratch']
  #allocation2 [shape = 'f32[1,64]{1,0:T(1,128)}', space=vmem, size = 0x200, scoped, tag = 'scratch operand']
  %s0 = inlined_call_operand.vmem [shape: bf16[2,256,147], index: 0, kind: input, shape index: {}]
  %s1 = inlined_call_operand.vmem [shape: bf16[147,64], index: 1, kind: input, shape index: {}]
  %s2 = inlined_call_operand.vmem [shape: f32[1,64], index: 2, kind: input, shape index: {}]
  %s3 = inlined_call_operand.vmem [shape: f32[2,1,64], index: 3, kind: output, shape index: {}]
  %s4 = sld [smem:[#allocation0]]
  $region53: #{faster_rcnn_encoder_forward.2} parent=0
    _
  %s6 = ssub.s32 1, %s4
  %s7 = scalar_select 0, %s6, %s4
  loop: start=0, step=1, limit=4
  $region2: #{faster_rcnn_encoder_forward.2} parent=0 // loop_pre_header
    _
  $region3: #{faster_rcnn_encoder_forward.2} parent=0 // loop_header
    %s9 = sphi 0, %s13
    %p10 = scmp.ge.s32.totalorder %s9, 4
    %s16 = sphi 0, %s28
    %s17 = sphi 0, %s24
    %s18 = sphi 0, %s16
    %s19 = sphi 0, %s17
    %s20 = sphi 0, %s18
    %s21 = sphi 0, %s19
    %s33 = sphi 0, %s35
    %s36 = sphi 0, %s33
    %s37 = sphi 0, %s36
    %s53 = sphi 0, %s37
    %s57 = sphi 0, %s57
    %s59 = sphi 0, %s57
    %s60 = sphi 0, %s59
    %s74 = sphi 0, %s60
    %s78 = sphi 0, %s78
    %s80 = sphi 0, %s78
    %s81 = sphi 0, %s80
    %s95 = sphi 0, %s81
    %s101 = sphi 0, %s103
    %s104 = sphi 0, %s101
    %s105 = sphi 0, %s104
    %s121 = sphi 0, %s105
  $region4: #{faster_rcnn_encoder_forward.2} parent=0 // loop_header_branch
    %12 = sbr.rel (%p10) target = $region8
  $region5: #{faster_rcnn_encoder_forward.2} parent=0 // loop_body
    %s14 = ssub.s32 %s9, 1
    %s15 = ssub.s32 %s9, 2
    %s22 = sadd.s32 1, %s17
    %p23 = scmp.ge.s32.totalorder %s22, 1
    %s24 = scalar_select %p23, 0, %s22
    %s25 = sadd.s32 1, %s16
    %s26 = scalar_select %p23, %s25, %s16
    %p27 = scmp.ge.s32.totalorder %s26, 2
    %s28 = scalar_select %p27, 0, %s26
    %s29 = ssub.s32 %s16, %s28
    %s30 = ssub.s32 %s17, %s24
    %s31 = sor.u32 %s29, %s30
    %p32 = scmp.eq.s32.totalorder %s31, 0
    %s34 = sadd.s32 %s33, 1
    %s35 = scalar_select %p32, %s33, %s34
    %p38 = pneg %p32
    %p39 = scmp.eq.s32.totalorder %s9, 1
    %p40 = por %p38, %p39
    %p41 = scmp.ne.s32.totalorder %s33, %s36
    %p42 = scmp.eq.s32.totalorder %s9, 0
    %p43 = por %p41, %p42
    %p44 = scmp.ne.s32.totalorder %s33, %s36
    %p45 = scmp.eq.s32.totalorder %s14, 1
    %p46 = por %p44, %p45
    %p47 = scmp.ne.s32.totalorder %s36, %s37
    %p48 = scmp.eq.s32.totalorder %s14, 0
    %p49 = por %p47, %p48
    %p50 = scmp.ne.s32.totalorder %s36, %s37
    %p51 = scmp.eq.s32.totalorder %s15, 1
    %p52 = por %p50, %p51
    %p54 = scmp.ne.s32.totalorder %s37, %s53
    %p55 = scmp.eq.s32.totalorder %s15, 0
    %p56 = por %p54, %p55
    %s58 = sadd.s32 %s57, 1
    %p61 = scmp.eq.s32.totalorder %s9, 1
    %p62 = scmp.ne.s32.totalorder %s57, %s59
    %p63 = scmp.eq.s32.totalorder %s9, 0
    %p64 = por %p62, %p63
    %p65 = scmp.ne.s32.totalorder %s57, %s59
    %p66 = scmp.eq.s32.totalorder %s14, 1
    %p67 = por %p65, %p66
    %p68 = scmp.ne.s32.totalorder %s59, %s60
    %p69 = scmp.eq.s32.totalorder %s14, 0
    %p70 = por %p68, %p69
    %p71 = scmp.ne.s32.totalorder %s59, %s60
    %p72 = scmp.eq.s32.totalorder %s15, 1
    %p73 = por %p71, %p72
    %p75 = scmp.ne.s32.totalorder %s60, %s74
    %p76 = scmp.eq.s32.totalorder %s15, 0
    %p77 = por %p75, %p76
    %s79 = sadd.s32 %s78, 1
    %p82 = scmp.eq.s32.totalorder %s9, 1
    %p83 = scmp.ne.s32.totalorder %s78, %s80
    %p84 = scmp.eq.s32.totalorder %s9, 0
    %p85 = por %p83, %p84
    %p86 = scmp.ne.s32.totalorder %s78, %s80
    %p87 = scmp.eq.s32.totalorder %s14, 1
    %p88 = por %p86, %p87
    %p89 = scmp.ne.s32.totalorder %s80, %s81
    %p90 = scmp.eq.s32.totalorder %s14, 0
    %p91 = por %p89, %p90
    %p92 = scmp.ne.s32.totalorder %s80, %s81
    %p93 = scmp.eq.s32.totalorder %s15, 1
    %p94 = por %p92, %p93
    %p96 = scmp.ne.s32.totalorder %s81, %s95
    %p97 = scmp.eq.s32.totalorder %s15, 0
    %p98 = por %p96, %p97
    %s99 = ssub.s32 %s16, %s28
    %p100 = scmp.eq.s32.totalorder %s99, 0
    %s102 = sadd.s32 %s101, 1
    %s103 = scalar_select %p100, %s101, %s102
    %p106 = pneg %p100
    %p107 = scmp.eq.s32.totalorder %s9, 1
    %p108 = por %p106, %p107
    %p109 = scmp.ne.s32.totalorder %s101, %s104
    %p110 = scmp.eq.s32.totalorder %s9, 0
    %p111 = por %p109, %p110
    %p112 = scmp.ne.s32.totalorder %s101, %s104
    %p113 = scmp.eq.s32.totalorder %s14, 1
    %p114 = por %p112, %p113
    %p115 = scmp.ne.s32.totalorder %s104, %s105
    %p116 = scmp.eq.s32.totalorder %s14, 0
    %p117 = por %p115, %p116
    %p118 = scmp.ne.s32.totalorder %s104, %s105
    %p119 = scmp.eq.s32.totalorder %s15, 1
    %p120 = por %p118, %p119
    %p122 = scmp.ne.s32.totalorder %s105, %s121
    %p123 = scmp.eq.s32.totalorder %s15, 0
    %p124 = por %p122, %p123
    %p125 = scmp.le.s32.totalorder 1, %s9
    %p126 = scmp.lt.s32.totalorder %s9, 3
    %p127 = pnand %p125, %p126
    %p128 = pneg %p127
    // Predicated region
    $region9: #{faster_rcnn_encoder_forward.2} parent=5 // pred_check
      _
    $region10: #{faster_rcnn_encoder_forward.2} parent=5 // pred_check_branch
      %130 = sbr.rel (%p127) target = $region12
    $region11: #{faster_rcnn_encoder_forward.2} parent=5 // pred_region
      %s131 = ssub.s32 %s9, 1
      // Predicated region
      $region13: #{faster_rcnn_encoder_forward.2} parent=11 // pred_check
        %p132 = pneg %p70
      $region14: #{faster_rcnn_encoder_forward.2} parent=11 // pred_check_branch
        %134 = sbr.rel (%p132) target = $region16
      $region15: #{faster_rcnn_encoder_forward.2} parent=11 // pred_region
        _
      $region16: #{faster_rcnn_encoder_forward.2} parent=11 // pred_fallthru
        _
      // Predicated region
      $region17: #{faster_rcnn_encoder_forward.2} parent=11 // pred_check
        %p135 = pneg %p91
      $region18: #{faster_rcnn_encoder_forward.2} parent=11 // pred_check_branch
        %137 = sbr.rel (%p135) target = $region20
      $region19: #{faster_rcnn_encoder_forward.2} parent=11 // pred_region
        _
      $region20: #{faster_rcnn_encoder_forward.2} parent=11 // pred_fallthru
        _
    $region12: #{faster_rcnn_encoder_forward.2} parent=5 // pred_fallthru
      _
    %p138 = scmp.lt.s32.totalorder %s9, 2
    // Predicated region
    $region21: #{faster_rcnn_encoder_forward.2} parent=5 // pred_check
      %p139 = pneg %p138
    $region22: #{faster_rcnn_encoder_forward.2} parent=5 // pred_check_branch
      %141 = sbr.rel (%p139) target = $region24
    $region23: #{faster_rcnn_encoder_forward.2} parent=5 // pred_region
      // Predicated region
      $region25: #{faster_rcnn_encoder_forward.2} parent=23 // pred_check
        %p142 = pneg %p43
      $region26: #{faster_rcnn_encoder_forward.2} parent=23 // pred_check_branch
        %144 = sbr.rel (%p142) target = $region28
      $region27: #{faster_rcnn_encoder_forward.2} parent=23 // pred_region
        %s145 = smul.u32 32, %s17
        %p146 = scmp.lt.s32.totalorder %s16, 1
        %s147 = scalar_select %p146, %s16, 1
        %p148 = scmp.lt.s32.totalorder %s145, 31
        %s149 = scalar_select %p148, %s145, 31
        %s150 = smul.addr %s149, 2
        %s151 = smul.addr %s147, 64
        %s152 = sadd.s32 %s150, %s151
        %s153 = smul.addr %s152, 4
        %s154 = scalar_lea.vmem %s0, %s153
        %s155 = smul.u32 32, %s17
      $region28: #{faster_rcnn_encoder_forward.2} parent=23 // pred_fallthru
        _
    $region24: #{faster_rcnn_encoder_forward.2} parent=5 // pred_fallthru
      _
    %p156 = scmp.le.s32.totalorder 1, %s9
    %p157 = scmp.lt.s32.totalorder %s9, 3
    %p158 = pnand %p156, %p157
    %p159 = pneg %p158
    // Predicated region
    $region29: #{faster_rcnn_encoder_forward.2} parent=5 // pred_check
      _
    $region30: #{faster_rcnn_encoder_forward.2} parent=5 // pred_check_branch
      %161 = sbr.rel (%p158) target = $region32
    $region31: #{faster_rcnn_encoder_forward.2} parent=5 // pred_region
      %s162 = ssub.s32 %s9, 1
      %s163 = smul.u32 32, %s19
      %p164 = scmp.lt.s32.totalorder %s18, 1
      %s165 = scalar_select %p164, %s18, 1
      %p166 = scmp.lt.s32.totalorder %s163, 31
      %s167 = scalar_select %p166, %s163, 31
      %s168 = smul.addr %s167, 2
      %s169 = smul.addr %s165, 64
      %s170 = sadd.s32 %s168, %s169
      %s171 = smul.addr %s170, 4
      %s172 = scalar_lea.vmem %s0, %s171
      %p173 = pneg %p49
      %p174 = pneg %p46
      %p175 = pneg %p70
      %p176 = pneg %p67
      %p177 = pneg %p91
      %p178 = pneg %p88
      %p179 = pneg %p117
      %p180 = pneg %p114
      %p181 = scmp.lt.s32.totalorder %s18, 1
      %s182 = scalar_select %p181, %s18, 1
      %s183 = scalar_lea.vmem %s3, %s182
      %s184 = smul.u32 32, %s19
      %p185 = scmp.lt.s32.totalorder %s18, 1
      %s186 = scalar_select %p185, %s18, 1
      %p187 = scmp.lt.s32.totalorder %s184, 31
      %s188 = scalar_select %p187, %s184, 31
      %s189 = smul.addr %s188, 2
      %s190 = smul.addr %s186, 64
      %s191 = sadd.s32 %s189, %s190
      %s192 = smul.addr %s191, 4
      %s193 = scalar_lea.vmem %s0, %s192
      %s194 = smul.u32 32, %s19
      %p195 = scmp.lt.s32.totalorder %s18, 1
      %s196 = scalar_select %p195, %s18, 1
      %s197 = scalar_lea.vmem %s3, %s196
      %p199 = scmp.eq.s32.totalorder %s19, 0
      // Predicated region
      $region33: #{faster_rcnn_encoder_forward.2} parent=31 // pred_check
        %p200 = pneg %p199
      $region34: #{faster_rcnn_encoder_forward.2} parent=31 // pred_check_branch
        %202 = sbr.rel (%p200) target = $region36
      $region35: #{faster_rcnn_encoder_forward.2} parent=31 // pred_region
        %vm203 = vcmask 516096
        %204 = vst.msk [vmem:[#allocation2] sm:$0x1] %vm203, 0.0
      $region36: #{faster_rcnn_encoder_forward.2} parent=31 // pred_fallthru
        _
      %v205 = vld [vmem:[%s193] sm:$0xff]
      %v206 = vld [vmem:[%s193 + $0x8] sm:$0xff]
      %v207 = vld [vmem:[%s193 + $0x10] sm:$0xff]
      %v208 = vld [vmem:[%s193 + $0x18] sm:$0xff]
      %v209 = vld [vmem:[%s193 + $0x20] sm:$0xff]
      %v210 = vld [vmem:[%s193 + $0x28] sm:$0xff]
      %v211 = vld [vmem:[%s193 + $0x30] sm:$0xff]
      %v212 = vld [vmem:[%s193 + $0x38] sm:$0xff]
      %v213 = vld [vmem:[%s193 + $0x40] sm:$0xff]
      %v214 = vld [vmem:[%s193 + $0x48] sm:$0xff]
      %v215 = vld [vmem:[%s193 + $0x50] sm:$0xff]
      %v216 = vld [vmem:[%s193 + $0x58] sm:$0xff]
      %v217 = vld [vmem:[%s193 + $0x60] sm:$0xff]
      %v218 = vld [vmem:[%s193 + $0x68] sm:$0xff]
      %v219 = vld [vmem:[%s193 + $0x70] sm:$0xff]
      %v220 = vld [vmem:[%s193 + $0x78] sm:$0xff]
      %v221 = vld [vmem:[%s193 + $0x80] sm:$0xff]
      %v222 = vld [vmem:[%s193 + $0x88] sm:$0xff]
      %v223 = vld [vmem:[%s193 + $0x90] sm:$0xff]
      %v224 = vld [vmem:[%s193 + $0x98] sm:$0xff]
      %v225 = vld [vmem:[%s193 + $0xa0] sm:$0xff]
      %v226 = vld [vmem:[%s193 + $0xa8] sm:$0xff]
      %v227 = vld [vmem:[%s193 + $0xb0] sm:$0xff]
      %v228 = vld [vmem:[%s193 + $0xb8] sm:$0xff]
      %v229 = vld [vmem:[%s193 + $0xc0] sm:$0xff]
      %v230 = vld [vmem:[%s193 + $0xc8] sm:$0xff]
      %v231 = vld [vmem:[%s193 + $0xd0] sm:$0xff]
      %v232 = vld [vmem:[%s193 + $0xd8] sm:$0xff]
      %v233 = vld [vmem:[%s193 + $0xe0] sm:$0xff]
      %v234 = vld [vmem:[%s193 + $0xe8] sm:$0xff]
      %v235 = vld [vmem:[%s193 + $0xf0] sm:$0xff]
      %v236 = vld [vmem:[%s193 + $0xf8] sm:$0xff]
      %v237 = vld [vmem:[%s1] sm:$0xf]
      %v238 = vld [vmem:[%s1 + $0x4] sm:$0xf]
      %v239 = vld [vmem:[%s1 + $0x8] sm:$0xf]
      %v240 = vld [vmem:[%s1 + $0xc] sm:$0xf]
      %v241 = vld [vmem:[%s1 + $0x10] sm:$0xf]
      %v242 = vld [vmem:[%s1 + $0x14] sm:$0xf]
      %v243 = vld [vmem:[%s1 + $0x18] sm:$0xf]
      %v244 = vld [vmem:[%s1 + $0x1c] sm:$0xf]
      %v245 = vld [vmem:[%s1 + $0x20] sm:$0xf]
      %v246 = vld [vmem:[%s1 + $0x24] sm:$0xf]
      %v247 = vld [vmem:[%s1 + $0x28] sm:$0xf]
      %v248 = vld [vmem:[%s1 + $0x2c] sm:$0xf]
      %v249 = vld [vmem:[%s1 + $0x30] sm:$0xf]
      %v250 = vld [vmem:[%s1 + $0x34] sm:$0xf]
      %v251 = vld [vmem:[%s1 + $0x38] sm:$0xf]
      %v252 = vld [vmem:[%s1 + $0x3c] sm:$0xf]
      %v253 = vld [vmem:[%s1 + $0x40] sm:$0xf]
      %v254 = vld [vmem:[%s1 + $0x44] sm:$0xf]
      %v255 = vld [vmem:[%s1 + $0x48] sm:$0x3]
      %v256 = vld [vmem:[%s2] sm:$0x1]
      %v258 = vperm.slane %v256, 0
      %v292 = vunpack.c.l.b16 %v205
      %v293 = vunpack.c.h.b16 %v205
      %v294 = vunpack.c.l.b16 %v206
      %v295 = vunpack.c.h.b16 %v206
      %v296 = vunpack.c.l.b16 %v207
      %v297 = vunpack.c.h.b16 %v207
      %v298 = vunpack.c.l.b16 %v208
      %v299 = vunpack.c.h.b16 %v208
      %v300 = vunpack.c.l.b16 %v209
      %v301 = vunpack.c.h.b16 %v209
      %v302 = vunpack.c.l.b16 %v210
      %v303 = vunpack.c.h.b16 %v210
      %v304 = vunpack.c.l.b16 %v211
      %v305 = vunpack.c.h.b16 %v211
      %v306 = vunpack.c.l.b16 %v212
      %v307 = vunpack.c.h.b16 %v212
      %v308 = vunpack.c.l.b16 %v213
      %v309 = vunpack.c.h.b16 %v213
      %v310 = vunpack.c.l.b16 %v214
      %v311 = vunpack.c.h.b16 %v214
      %v312 = vunpack.c.l.b16 %v215
      %v313 = vunpack.c.h.b16 %v215
      %v314 = vunpack.c.l.b16 %v216
      %v315 = vunpack.c.h.b16 %v216
      %v316 = vunpack.c.l.b16 %v217
      %v317 = vunpack.c.h.b16 %v217
      %v318 = vunpack.c.l.b16 %v218
      %v319 = vunpack.c.h.b16 %v218
      %v320 = vunpack.c.l.b16 %v219
      %v321 = vunpack.c.h.b16 %v219
      %v322 = vunpack.c.l.b16 %v220
      %v323 = vunpack.c.h.b16 %v220
      %v324 = vunpack.c.l.b16 %v221
      %v325 = vunpack.c.h.b16 %v221
      %v326 = vunpack.c.l.b16 %v222
      %v327 = vunpack.c.h.b16 %v222
      %v328 = vunpack.c.l.b16 %v223
      %v329 = vunpack.c.h.b16 %v223
      %v330 = vunpack.c.l.b16 %v224
      %v331 = vunpack.c.h.b16 %v224
      %v332 = vunpack.c.l.b16 %v225
      %v333 = vunpack.c.h.b16 %v225
      %v334 = vunpack.c.l.b16 %v226
      %v335 = vunpack.c.h.b16 %v226
      %v336 = vunpack.c.l.b16 %v227
      %v337 = vunpack.c.h.b16 %v227
      %v338 = vunpack.c.l.b16 %v228
      %v339 = vunpack.c.h.b16 %v228
      %v340 = vunpack.c.l.b16 %v229
      %v341 = vunpack.c.h.b16 %v229
      %v342 = vunpack.c.l.b16 %v230
      %v343 = vunpack.c.h.b16 %v230
      %v344 = vunpack.c.l.b16 %v231
      %v345 = vunpack.c.h.b16 %v231
      %v346 = vunpack.c.l.b16 %v232
      %v347 = vunpack.c.h.b16 %v232
      %v348 = vunpack.c.l.b16 %v233
      %v349 = vunpack.c.h.b16 %v233
      %v350 = vunpack.c.l.b16 %v234
      %v351 = vunpack.c.h.b16 %v234
      %v352 = vunpack.c.l.b16 %v235
      %v353 = vunpack.c.h.b16 %v235
      %v354 = vunpack.c.l.b16 %v236
      %v355 = vunpack.c.h.b16 %v236
      %v356 = vpack.c.b16 %v294, %v292
      %v357 = vpack.c.b16 %v295, %v293
      %v358 = vpack.c.b16 %v298, %v296
      %v359 = vpack.c.b16 %v299, %v297
      %v360 = vpack.c.b16 %v302, %v300
      %v361 = vpack.c.b16 %v303, %v301
      %v362 = vpack.c.b16 %v306, %v304
      %v363 = vpack.c.b16 %v307, %v305
      %v364 = vpack.c.b16 %v310, %v308
      %v365 = vpack.c.b16 %v311, %v309
      %v366 = vpack.c.b16 %v314, %v312
      %v367 = vpack.c.b16 %v315, %v313
      %v368 = vpack.c.b16 %v318, %v316
      %v369 = vpack.c.b16 %v319, %v317
      %v370 = vpack.c.b16 %v322, %v320
      %v371 = vpack.c.b16 %v323, %v321
      %v372 = vpack.c.b16 %v326, %v324
      %v373 = vpack.c.b16 %v327, %v325
      %v374 = vpack.c.b16 %v330, %v328
      %v375 = vpack.c.b16 %v331, %v329
      %v376 = vpack.c.b16 %v334, %v332
      %v377 = vpack.c.b16 %v335, %v333
      %v378 = vpack.c.b16 %v338, %v336
      %v379 = vpack.c.b16 %v339, %v337
      %v380 = vpack.c.b16 %v342, %v340
      %v381 = vpack.c.b16 %v343, %v341
      %v382 = vpack.c.b16 %v346, %v344
      %v383 = vpack.c.b16 %v347, %v345
      %v384 = vpack.c.b16 %v350, %v348
      %v385 = vpack.c.b16 %v351, %v349
      %v386 = vpack.c.b16 %v354, %v352
      %v387 = vpack.c.b16 %v355, %v353
      %v423 = vunpack.c.l.b16 %v237
      %v424 = vunpack.c.l.b16 %v238
      %v425 = vunpack.c.l.b16 %v239
      %v426 = vunpack.c.l.b16 %v240
      %v427 = vunpack.c.l.b16 %v241
      %v428 = vunpack.c.l.b16 %v242
      %v429 = vunpack.c.l.b16 %v243
      %v430 = vunpack.c.l.b16 %v244
      %v431 = vunpack.c.l.b16 %v245
      %v432 = vunpack.c.l.b16 %v246
      %v433 = vunpack.c.l.b16 %v247
      %v434 = vunpack.c.l.b16 %v248
      %v435 = vunpack.c.l.b16 %v249
      %v436 = vunpack.c.l.b16 %v250
      %v437 = vunpack.c.l.b16 %v251
      %v438 = vunpack.c.l.b16 %v252
      %v439 = vunpack.c.l.b16 %v253
      %v440 = vunpack.c.l.b16 %v254
      %v441 = vunpack.c.l.b16 %v255
      %v442 = vpack.c.b16 %v424, %v423
      %v443 = vpack.c.b16 %v426, %v425
      %v444 = vpack.c.b16 %v428, %v427
      %v445 = vpack.c.b16 %v430, %v429
      %v446 = vpack.c.b16 %v432, %v431
      %v447 = vpack.c.b16 %v434, %v433
      %v448 = vpack.c.b16 %v436, %v435
      %v449 = vpack.c.b16 %v438, %v437
      %v450 = vpack.c.b16 %v440, %v439
      %v451 = vpack.c.b16 %v441, %v441
      %vm461 = vcmask 154624
      %v463 = vsel %vm461, %v357, 0
      %v466 = vsel %vm461, %v359, 0
      %v469 = vsel %vm461, %v361, 0
      %v472 = vsel %vm461, %v363, 0
      %v475 = vsel %vm461, %v365, 0
      %v478 = vsel %vm461, %v367, 0
      %v481 = vsel %vm461, %v369, 0
      %v484 = vsel %vm461, %v371, 0
      %v487 = vsel %vm461, %v373, 0
      %v490 = vsel %vm461, %v375, 0
      %v493 = vsel %vm461, %v377, 0
      %v496 = vsel %vm461, %v379, 0
      %v499 = vsel %vm461, %v381, 0
      %v502 = vsel %vm461, %v383, 0
      %v505 = vsel %vm461, %v385, 0
      %v508 = vsel %vm461, %v387, 0
      %vm510 = vcmask 1040384
      %vm511 = vcmask 1041408
      %v512 = vsel %vm510, 4294967295, 65535
      %v513 = vsel %vm511, %v512, 0
      %v515 = vand.u32 %v451, %v513
      %517 = vmatpush.bf16.msra.mxu0 %v449
      %518 = vmatpush.bf16.msra.mxu0 %v448
      %519 = vmatpush.bf16.msra.mxu0 %v447
      %520 = vmatpush.bf16.msra.mxu0 %v446
      %521 = vmatpush.bf16.msra.mxu0 %v445
      %522 = vmatpush.bf16.msra.mxu0 %v444
      %523 = vmatpush.bf16.msra.mxu0 %v443
      %524 = vmatpush.bf16.msra.mxu0 %v442
      %525 = vmatmul.bf16.gmra.mxu0 %v356
      %v526 = vpop.f32.mrf.mxu0
      %v527 = vadd.f32 %v258, %v526
      %v528 = vpop.f32.mrf.mxu0
      %v529 = vadd.f32 %v258, %v528
      %530 = vmatmul.bf16.gmra.mxu0 %v358
      %v531 = vpop.f32.mrf.mxu0
      %v532 = vadd.f32 %v258, %v531
      %v533 = vpop.f32.mrf.mxu0
      %v534 = vadd.f32 %v258, %v533
      %535 = vmatmul.bf16.gmra.mxu0 %v360
      %v536 = vpop.f32.mrf.mxu0
      %v537 = vadd.f32 %v258, %v536
      %v538 = vpop.f32.mrf.mxu0
      %v539 = vadd.f32 %v258, %v538
      %540 = vmatmul.bf16.gmra.mxu0 %v362
      %v541 = vpop.f32.mrf.mxu0
      %v542 = vadd.f32 %v258, %v541
      %v543 = vpop.f32.mrf.mxu0
      %v544 = vadd.f32 %v258, %v543
      %545 = vmatmul.bf16.gmra.mxu0 %v364
      %v546 = vpop.f32.mrf.mxu0
      %v547 = vadd.f32 %v258, %v546
      %v548 = vpop.f32.mrf.mxu0
      %v549 = vadd.f32 %v258, %v548
      %550 = vmatmul.bf16.gmra.mxu0 %v366
      %v551 = vpop.f32.mrf.mxu0
      %v552 = vadd.f32 %v258, %v551
      %v553 = vpop.f32.mrf.mxu0
      %v554 = vadd.f32 %v258, %v553
      %555 = vmatmul.bf16.gmra.mxu0 %v368
      %v556 = vpop.f32.mrf.mxu0
      %v557 = vadd.f32 %v258, %v556
      %v558 = vpop.f32.mrf.mxu0
      %v559 = vadd.f32 %v258, %v558
      %560 = vmatmul.bf16.gmra.mxu0 %v370
      %v561 = vpop.f32.mrf.mxu0
      %v562 = vadd.f32 %v258, %v561
      %v563 = vpop.f32.mrf.mxu0
      %v564 = vadd.f32 %v258, %v563
      %565 = vmatmul.bf16.gmra.mxu0 %v372
      %v566 = vpop.f32.mrf.mxu0
      %v567 = vadd.f32 %v258, %v566
      %v568 = vpop.f32.mrf.mxu0
      %v569 = vadd.f32 %v258, %v568
      %570 = vmatmul.bf16.gmra.mxu0 %v374
      %v571 = vpop.f32.mrf.mxu0
      %v572 = vadd.f32 %v258, %v571
      %v573 = vpop.f32.mrf.mxu0
      %v574 = vadd.f32 %v258, %v573
      %575 = vmatmul.bf16.gmra.mxu0 %v376
      %v576 = vpop.f32.mrf.mxu0
      %v577 = vadd.f32 %v258, %v576
      %v578 = vpop.f32.mrf.mxu0
      %v579 = vadd.f32 %v258, %v578
      %580 = vmatmul.bf16.gmra.mxu0 %v378
      %v581 = vpop.f32.mrf.mxu0
      %v582 = vadd.f32 %v258, %v581
      %v583 = vpop.f32.mrf.mxu0
      %v584 = vadd.f32 %v258, %v583
      %585 = vmatmul.bf16.gmra.mxu0 %v380
      %v586 = vpop.f32.mrf.mxu0
      %v587 = vadd.f32 %v258, %v586
      %v588 = vpop.f32.mrf.mxu0
      %v589 = vadd.f32 %v258, %v588
      %590 = vmatmul.bf16.gmra.mxu0 %v382
      %v591 = vpop.f32.mrf.mxu0
      %v592 = vadd.f32 %v258, %v591
      %v593 = vpop.f32.mrf.mxu0
      %v594 = vadd.f32 %v258, %v593
      %595 = vmatmul.bf16.gmra.mxu0 %v384
      %v596 = vpop.f32.mrf.mxu0
      %v597 = vadd.f32 %v258, %v596
      %v598 = vpop.f32.mrf.mxu0
      %v599 = vadd.f32 %v258, %v598
      %600 = vmatmul.bf16.gmra.mxu0 %v386
      %v601 = vpop.f32.mrf.mxu0
      %v602 = vadd.f32 %v258, %v601
      %v603 = vpop.f32.mrf.mxu0
      %v604 = vadd.f32 %v258, %v603
      %605 = vdwg.mxu0
      %606 = vmatpush.bf16.msra.mxu0 0
      %607 = vmatpush.bf16.msra.mxu0 0
      %608 = vmatpush.bf16.msra.mxu0 0
      %609 = vmatpush.bf16.msra.mxu0 0
      %610 = vmatpush.bf16.msra.mxu0 0
      %611 = vmatpush.bf16.msra.mxu0 0
      %612 = vmatpush.bf16.msra.mxu0 %v515
      %613 = vmatpush.bf16.msra.mxu0 %v450
      %614 = vmatmul.bf16.gmra.mxu0 %v463
      %v615 = vpop.f32.mrf.mxu0
      %v616 = vadd.f32 %v527, %v615
      %v617 = vpop.f32.mrf.mxu0
      %v618 = vadd.f32 %v529, %v617
      %619 = vmatmul.bf16.gmra.mxu0 %v466
      %v620 = vpop.f32.mrf.mxu0
      %v621 = vadd.f32 %v532, %v620
      %v622 = vpop.f32.mrf.mxu0
      %v623 = vadd.f32 %v534, %v622
      %624 = vmatmul.bf16.gmra.mxu0 %v469
      %v625 = vpop.f32.mrf.mxu0
      %v626 = vadd.f32 %v537, %v625
      %v627 = vpop.f32.mrf.mxu0
      %v628 = vadd.f32 %v539, %v627
      %629 = vmatmul.bf16.gmra.mxu0 %v472
      %v630 = vpop.f32.mrf.mxu0
      %v631 = vadd.f32 %v542, %v630
      %v632 = vpop.f32.mrf.mxu0
      %v633 = vadd.f32 %v544, %v632
      %634 = vmatmul.bf16.gmra.mxu0 %v475
      %v635 = vpop.f32.mrf.mxu0
      %v636 = vadd.f32 %v547, %v635
      %v637 = vpop.f32.mrf.mxu0
      %v638 = vadd.f32 %v549, %v637
      %639 = vmatmul.bf16.gmra.mxu0 %v478
      %v640 = vpop.f32.mrf.mxu0
      %v641 = vadd.f32 %v552, %v640
      %v642 = vpop.f32.mrf.mxu0
      %v643 = vadd.f32 %v554, %v642
      %644 = vmatmul.bf16.gmra.mxu0 %v481
      %v645 = vpop.f32.mrf.mxu0
      %v646 = vadd.f32 %v557, %v645
      %v647 = vpop.f32.mrf.mxu0
      %v648 = vadd.f32 %v559, %v647
      %649 = vmatmul.bf16.gmra.mxu0 %v484
      %v650 = vpop.f32.mrf.mxu0
      %v651 = vadd.f32 %v562, %v650
      %v652 = vpop.f32.mrf.mxu0
      %v653 = vadd.f32 %v564, %v652
      %654 = vmatmul.bf16.gmra.mxu0 %v487
      %v655 = vpop.f32.mrf.mxu0
      %v656 = vadd.f32 %v567, %v655
      %v657 = vpop.f32.mrf.mxu0
      %v658 = vadd.f32 %v569, %v657
      %659 = vmatmul.bf16.gmra.mxu0 %v490
      %v660 = vpop.f32.mrf.mxu0
      %v661 = vadd.f32 %v572, %v660
      %v662 = vpop.f32.mrf.mxu0
      %v663 = vadd.f32 %v574, %v662
      %664 = vmatmul.bf16.gmra.mxu0 %v493
      %v665 = vpop.f32.mrf.mxu0
      %v666 = vadd.f32 %v577, %v665
      %v667 = vpop.f32.mrf.mxu0
      %v668 = vadd.f32 %v579, %v667
      %669 = vmatmul.bf16.gmra.mxu0 %v496
      %v670 = vpop.f32.mrf.mxu0
      %v671 = vadd.f32 %v582, %v670
      %v672 = vpop.f32.mrf.mxu0
      %v673 = vadd.f32 %v584, %v672
      %674 = vmatmul.bf16.gmra.mxu0 %v499
      %v675 = vpop.f32.mrf.mxu0
      %v676 = vadd.f32 %v587, %v675
      %v677 = vpop.f32.mrf.mxu0
      %v678 = vadd.f32 %v589, %v677
      %679 = vmatmul.bf16.gmra.mxu0 %v502
      %v680 = vpop.f32.mrf.mxu0
      %v681 = vadd.f32 %v592, %v680
      %v682 = vpop.f32.mrf.mxu0
      %v683 = vadd.f32 %v594, %v682
      %684 = vmatmul.bf16.gmra.mxu0 %v505
      %v685 = vpop.f32.mrf.mxu0
      %v686 = vadd.f32 %v597, %v685
      %v687 = vpop.f32.mrf.mxu0
      %v688 = vadd.f32 %v599, %v687
      %689 = vmatmul.bf16.gmra.mxu0 %v508
      %v690 = vpop.f32.mrf.mxu0
      %v691 = vadd.f32 %v602, %v690
      %v692 = vpop.f32.mrf.mxu0
      %v693 = vadd.f32 %v604, %v692
      %694 = vdwg.mxu0
      %v695 = vmax.f32 %v616, 0.0
      %v696 = vmax.f32 %v618, 0.0
      %v697 = vmax.f32 %v621, 0.0
      %v698 = vmax.f32 %v623, 0.0
      %v699 = vmax.f32 %v626, 0.0
      %v700 = vmax.f32 %v628, 0.0
      %v701 = vmax.f32 %v631, 0.0
      %v702 = vmax.f32 %v633, 0.0
      %v703 = vmax.f32 %v636, 0.0
      %v704 = vmax.f32 %v638, 0.0
      %v705 = vmax.f32 %v641, 0.0
      %v706 = vmax.f32 %v643, 0.0
      %v707 = vmax.f32 %v646, 0.0
      %v708 = vmax.f32 %v648, 0.0
      %v709 = vmax.f32 %v651, 0.0
      %v710 = vmax.f32 %v653, 0.0
      %v711 = vmax.f32 %v656, 0.0
      %v712 = vmax.f32 %v658, 0.0
      %v713 = vmax.f32 %v661, 0.0
      %v714 = vmax.f32 %v663, 0.0
      %v715 = vmax.f32 %v666, 0.0
      %v716 = vmax.f32 %v668, 0.0
      %v717 = vmax.f32 %v671, 0.0
      %v718 = vmax.f32 %v673, 0.0
      %v719 = vmax.f32 %v676, 0.0
      %v720 = vmax.f32 %v678, 0.0
      %v721 = vmax.f32 %v681, 0.0
      %v722 = vmax.f32 %v683, 0.0
      %v723 = vmax.f32 %v686, 0.0
      %v724 = vmax.f32 %v688, 0.0
      %v725 = vmax.f32 %v691, 0.0
      %v726 = vmax.f32 %v693, 0.0
      %v727 = vld [vmem:[#allocation2] sm:$0x1]
      %vm728 = vcmask 523264
      %v729 = vsel %vm728, %v695, 0.0
      %v730 = vsel %vm728, %v696, 0.0
      %v731 = vadd.f32 %v729, %v730
      %v732 = vsel %vm728, %v697, 0.0
      %v733 = vadd.f32 %v731, %v732
      %v734 = vsel %vm728, %v698, 0.0
      %v735 = vadd.f32 %v733, %v734
      %v736 = vsel %vm728, %v699, 0.0
      %v737 = vadd.f32 %v735, %v736
      %v738 = vsel %vm728, %v700, 0.0
      %v739 = vadd.f32 %v737, %v738
      %v740 = vsel %vm728, %v701, 0.0
      %v741 = vadd.f32 %v739, %v740
      %v742 = vsel %vm728, %v702, 0.0
      %v743 = vadd.f32 %v741, %v742
      %v744 = vsel %vm728, %v703, 0.0
      %v745 = vadd.f32 %v743, %v744
      %v746 = vsel %vm728, %v704, 0.0
      %v747 = vadd.f32 %v745, %v746
      %v748 = vsel %vm728, %v705, 0.0
      %v749 = vadd.f32 %v747, %v748
      %v750 = vsel %vm728, %v706, 0.0
      %v751 = vadd.f32 %v749, %v750
      %v752 = vsel %vm728, %v707, 0.0
      %v753 = vadd.f32 %v751, %v752
      %v754 = vsel %vm728, %v708, 0.0
      %v755 = vadd.f32 %v753, %v754
      %v756 = vsel %vm728, %v709, 0.0
      %v757 = vadd.f32 %v755, %v756
      %v758 = vsel %vm728, %v710, 0.0
      %v759 = vadd.f32 %v757, %v758
      %v760 = vsel %vm728, %v711, 0.0
      %v761 = vadd.f32 %v759, %v760
      %v762 = vsel %vm728, %v712, 0.0
      %v763 = vadd.f32 %v761, %v762
      %v764 = vsel %vm728, %v713, 0.0
      %v765 = vadd.f32 %v763, %v764
      %v766 = vsel %vm728, %v714, 0.0
      %v767 = vadd.f32 %v765, %v766
      %v768 = vsel %vm728, %v715, 0.0
      %v769 = vadd.f32 %v767, %v768
      %v770 = vsel %vm728, %v716, 0.0
      %v771 = vadd.f32 %v769, %v770
      %v772 = vsel %vm728, %v717, 0.0
      %v773 = vadd.f32 %v771, %v772
      %v774 = vsel %vm728, %v718, 0.0
      %v775 = vadd.f32 %v773, %v774
      %v776 = vsel %vm728, %v719, 0.0
      %v777 = vadd.f32 %v775, %v776
      %v778 = vsel %vm728, %v720, 0.0
      %v779 = vadd.f32 %v777, %v778
      %v780 = vsel %vm728, %v721, 0.0
      %v781 = vadd.f32 %v779, %v780
      %v782 = vsel %vm728, %v722, 0.0
      %v783 = vadd.f32 %v781, %v782
      %v784 = vsel %vm728, %v723, 0.0
      %v785 = vadd.f32 %v783, %v784
      %v786 = vsel %vm728, %v724, 0.0
      %v787 = vadd.f32 %v785, %v786
      %v788 = vsel %vm728, %v725, 0.0
      %v789 = vadd.f32 %v787, %v788
      %v790 = vsel %vm728, %v726, 0.0
      %v791 = vadd.f32 %v789, %v790
      %v792 = vrot.slane %v791, 4
      %v793 = vadd.f32 %v791, %v792
      %v794 = vrot.slane %v793, 2
      %v795 = vadd.f32 %v793, %v794
      %v796 = vrot.slane %v795, 1
      %v797 = vadd.f32 %v795, %v796
      %v798 = vadd.f32 %v727, %v797
      %vm799 = vcmask 516096
      %800 = vst.msk [vmem:[#allocation2] sm:$0x1] %vm799, %v798
      // Predicated region
      $region37: #{faster_rcnn_encoder_forward.2} parent=31 // pred_check
        %p801 = pneg %p199
      $region38: #{faster_rcnn_encoder_forward.2} parent=31 // pred_check_branch
        %803 = sbr.rel (%p801) target = $region40
      $region39: #{faster_rcnn_encoder_forward.2} parent=31 // pred_region
        %v804 = vld [vmem:[#allocation2] sm:$0x1]
        %v805 = vmul.f32 %v804, 0.00390625
        %806 = vst.msk [vmem:[%s197] sm:$0x1] %vm799, %v805
      $region40: #{faster_rcnn_encoder_forward.2} parent=31 // pred_fallthru
        _
      %p807 = scmp.lt.s32.totalorder %s18, 1
      %s808 = scalar_select %p807, %s18, 1
      %s809 = scalar_lea.vmem %s3, %s808
      // Predicated region
      $region41: #{faster_rcnn_encoder_forward.2} parent=31 // pred_check
        %p810 = pneg %p114
      $region42: #{faster_rcnn_encoder_forward.2} parent=31 // pred_check_branch
        %812 = sbr.rel (%p810) target = $region44
      $region43: #{faster_rcnn_encoder_forward.2} parent=31 // pred_region
        _
      $region44: #{faster_rcnn_encoder_forward.2} parent=31 // pred_fallthru
        _
    $region32: #{faster_rcnn_encoder_forward.2} parent=5 // pred_fallthru
      _
    %p813 = scmp.le.s32.totalorder 2, %s9
    // Predicated region
    $region45: #{faster_rcnn_encoder_forward.2} parent=5 // pred_check
      %p814 = pneg %p813
    $region46: #{faster_rcnn_encoder_forward.2} parent=5 // pred_check_branch
      %816 = sbr.rel (%p814) target = $region48
    $region47: #{faster_rcnn_encoder_forward.2} parent=5 // pred_region
      %s817 = ssub.s32 %s9, 2
      // Predicated region
      $region49: #{faster_rcnn_encoder_forward.2} parent=47 // pred_check
        %p818 = pneg %p120
      $region50: #{faster_rcnn_encoder_forward.2} parent=47 // pred_check_branch
        %820 = sbr.rel (%p818) target = $region52
      $region51: #{faster_rcnn_encoder_forward.2} parent=47 // pred_region
        %p821 = scmp.lt.s32.totalorder %s20, 1
        %s822 = scalar_select %p821, %s20, 1
        %s823 = scalar_lea.vmem %s3, %s822
      $region52: #{faster_rcnn_encoder_forward.2} parent=47 // pred_fallthru
        _
    $region48: #{faster_rcnn_encoder_forward.2} parent=5 // pred_fallthru
      _
  $region6: #{faster_rcnn_encoder_forward.2} parent=0 // loop_footer
    %s13 = sadd.s32 1, %s9
  $region7: #{faster_rcnn_encoder_forward.2} parent=0 // loop_footer_branch
    %8 = sbr.rel target = $region3
  $region8: #{faster_rcnn_encoder_forward.2} parent=0 // loop_exit
    _

// kernel: faster_rcnn_encoder_forward.3
$region0: #{faster_rcnn_encoder_forward.3}
  #allocation0 [shape = 'u32[]', space=smem, size = 0x4, offset = 0x4, fixed_abs, tag = 'smem constant byte address 0x4 - core index']
  #allocation1 [shape = 'u32[72,128]{1,0:T(1,128)}', space=vmem, size = 0x9000, scoped, tag = 'internal scratch']
  %s0 = inlined_call_operand.vmem [shape: f32[2,64], index: 0, kind: input, shape index: {}]
  %s1 = inlined_call_operand.vmem [shape: bf16[64,1024], index: 1, kind: input, shape index: {}]
  %s2 = inlined_call_operand.vmem [shape: f32[1,1024], index: 2, kind: input, shape index: {}]
  %s3 = inlined_call_operand.vmem [shape: bf16[1024,512], index: 3, kind: input, shape index: {}]
  %s4 = inlined_call_operand.vmem [shape: f32[1,512], index: 4, kind: input, shape index: {}]
  %s5 = inlined_call_operand.vmem [shape: bf16[512,256], index: 5, kind: input, shape index: {}]
  %s6 = inlined_call_operand.vmem [shape: f32[1,256], index: 6, kind: input, shape index: {}]
  %s7 = inlined_call_operand.vmem [shape: bf16[256,128], index: 7, kind: input, shape index: {}]
  %s8 = inlined_call_operand.vmem [shape: f32[1,128], index: 8, kind: input, shape index: {}]
  %s9 = inlined_call_operand.hbm [shape: f32[2,128], index: 9, kind: output, shape index: {}]
  %s10 = sld [smem:[#allocation0]]
  $region46: #{faster_rcnn_encoder_forward.3} parent=0
    _
  %s12 = ssub.s32 1, %s10
  %s13 = scalar_select 0, %s12, %s10
  $region1: #{faster_rcnn_encoder_forward.3} parent=0
    #allocation2 [shape = 'u8[1024]{0}', space=vmem, size = 0x400, scoped, tag = 'output window, operand 0, single buffered']
    #allocation3 [shape = 's32[1]{0}', space=sflag, size = 0x4, scoped, tag = 'scoped memory for faster_rcnn_encoder_forward.3']
    %14 = vsyncpa [#allocation3], 0
    // Predicated region
    $region2: #{faster_rcnn_encoder_forward.3} parent=1 // pred_check
      _
    $region3: #{faster_rcnn_encoder_forward.3} parent=1 // pred_check_branch
      %16 = sbr.rel (0) target = $region5
    $region4: #{faster_rcnn_encoder_forward.3} parent=1 // pred_region
      _
    $region5: #{faster_rcnn_encoder_forward.3} parent=1 // pred_fallthru
      _
    // Predicated region
    $region6: #{faster_rcnn_encoder_forward.3} parent=1 // pred_check
      _
    $region7: #{faster_rcnn_encoder_forward.3} parent=1 // pred_check_branch
      %18 = sbr.rel (0) target = $region9
    $region8: #{faster_rcnn_encoder_forward.3} parent=1 // pred_region
      _
    $region9: #{faster_rcnn_encoder_forward.3} parent=1 // pred_fallthru
      _
    // Predicated region
    $region10: #{faster_rcnn_encoder_forward.3} parent=1 // pred_check
      _
    $region11: #{faster_rcnn_encoder_forward.3} parent=1 // pred_check_branch
      %20 = sbr.rel (0) target = $region13
    $region12: #{faster_rcnn_encoder_forward.3} parent=1 // pred_region
      _
    $region13: #{faster_rcnn_encoder_forward.3} parent=1 // pred_fallthru
      _
    // Predicated region
    $region14: #{faster_rcnn_encoder_forward.3} parent=1 // pred_check
      _
    $region15: #{faster_rcnn_encoder_forward.3} parent=1 // pred_check_branch
      %22 = sbr.rel (0) target = $region17
    $region16: #{faster_rcnn_encoder_forward.3} parent=1 // pred_region
      _
    $region17: #{faster_rcnn_encoder_forward.3} parent=1 // pred_fallthru
      _
    // Predicated region
    $region18: #{faster_rcnn_encoder_forward.3} parent=1 // pred_check
      _
    $region19: #{faster_rcnn_encoder_forward.3} parent=1 // pred_check_branch
      %24 = sbr.rel (0) target = $region21
    $region20: #{faster_rcnn_encoder_forward.3} parent=1 // pred_region
      _
    $region21: #{faster_rcnn_encoder_forward.3} parent=1 // pred_fallthru
      _
    // Predicated region
    $region22: #{faster_rcnn_encoder_forward.3} parent=1 // pred_check
      _
    $region23: #{faster_rcnn_encoder_forward.3} parent=1 // pred_check_branch
      %26 = sbr.rel (0) target = $region25
    $region24: #{faster_rcnn_encoder_forward.3} parent=1 // pred_region
      _
    $region25: #{faster_rcnn_encoder_forward.3} parent=1 // pred_fallthru
      _
    // Predicated region
    $region26: #{faster_rcnn_encoder_forward.3} parent=1 // pred_check
      _
    $region27: #{faster_rcnn_encoder_forward.3} parent=1 // pred_check_branch
      %28 = sbr.rel (0) target = $region29
    $region28: #{faster_rcnn_encoder_forward.3} parent=1 // pred_region
      _
    $region29: #{faster_rcnn_encoder_forward.3} parent=1 // pred_fallthru
      _
    // Predicated region
    $region30: #{faster_rcnn_encoder_forward.3} parent=1 // pred_check
      _
    $region31: #{faster_rcnn_encoder_forward.3} parent=1 // pred_check_branch
      %30 = sbr.rel (0) target = $region33
    $region32: #{faster_rcnn_encoder_forward.3} parent=1 // pred_region
      _
    $region33: #{faster_rcnn_encoder_forward.3} parent=1 // pred_fallthru
      _
    // Predicated region
    $region34: #{faster_rcnn_encoder_forward.3} parent=1 // pred_check
      _
    $region35: #{faster_rcnn_encoder_forward.3} parent=1 // pred_check_branch
      %32 = sbr.rel (0) target = $region37
    $region36: #{faster_rcnn_encoder_forward.3} parent=1 // pred_region
      _
    $region37: #{faster_rcnn_encoder_forward.3} parent=1 // pred_fallthru
      _
    %v34 = vld [vmem:[%s0] sm:$0x3]
    %v35 = vpack.c.bf16 %v34, %v34
    %v36 = vld [vmem:[%s1] sm:$0xff]
    %v37 = vld [vmem:[%s1 + $0x8] sm:$0xff]
    %v38 = vld [vmem:[%s1 + $0x10] sm:$0xff]
    %v39 = vld [vmem:[%s1 + $0x18] sm:$0xff]
    %v40 = vld [vmem:[%s1 + $0x20] sm:$0xff]
    %v41 = vld [vmem:[%s1 + $0x28] sm:$0xff]
    %v42 = vld [vmem:[%s1 + $0x30] sm:$0xff]
    %v43 = vld [vmem:[%s1 + $0x38] sm:$0xff]
    %v44 = vld [vmem:[%s1 + $0x40] sm:$0xff]
    %v45 = vld [vmem:[%s1 + $0x48] sm:$0xff]
    %v46 = vld [vmem:[%s1 + $0x50] sm:$0xff]
    %v47 = vld [vmem:[%s1 + $0x58] sm:$0xff]
    %v48 = vld [vmem:[%s1 + $0x60] sm:$0xff]
    %v49 = vld [vmem:[%s1 + $0x68] sm:$0xff]
    %v50 = vld [vmem:[%s1 + $0x70] sm:$0xff]
    %v51 = vld [vmem:[%s1 + $0x78] sm:$0xff]
    %v52 = vld [vmem:[%s1 + $0x80] sm:$0xff]
    %v53 = vld [vmem:[%s1 + $0x88] sm:$0xff]
    %v54 = vld [vmem:[%s1 + $0x90] sm:$0xff]
    %v55 = vld [vmem:[%s1 + $0x98] sm:$0xff]
    %v56 = vld [vmem:[%s1 + $0xa0] sm:$0xff]
    %v57 = vld [vmem:[%s1 + $0xa8] sm:$0xff]
    %v58 = vld [vmem:[%s1 + $0xb0] sm:$0xff]
    %v59 = vld [vmem:[%s1 + $0xb8] sm:$0xff]
    %v60 = vld [vmem:[%s1 + $0xc0] sm:$0xff]
    %v61 = vld [vmem:[%s1 + $0xc8] sm:$0xff]
    %v62 = vld [vmem:[%s1 + $0xd0] sm:$0xff]
    %v63 = vld [vmem:[%s1 + $0xd8] sm:$0xff]
    %v64 = vld [vmem:[%s1 + $0xe0] sm:$0xff]
    %v65 = vld [vmem:[%s1 + $0xe8] sm:$0xff]
    %v66 = vld [vmem:[%s1 + $0xf0] sm:$0xff]
    %v67 = vld [vmem:[%s1 + $0xf8] sm:$0xff]
    %v68 = vld [vmem:[%s2] sm:$0xff]
    %v70 = vperm.slane %v68, 0
    %v71 = vperm.slane %v68, 1
    %v72 = vperm.slane %v68, 2
    %v73 = vperm.slane %v68, 3
    %v74 = vperm.slane %v68, 4
    %v75 = vperm.slane %v68, 5
    %v76 = vperm.slane %v68, 6
    %v77 = vperm.slane %v68, 7
    %v118 = vunpack.c.l.b16 %v36
    %v119 = vunpack.c.h.b16 %v36
    %v120 = vunpack.c.l.b16 %v37
    %v121 = vunpack.c.h.b16 %v37
    %v122 = vunpack.c.l.b16 %v38
    %v123 = vunpack.c.h.b16 %v38
    %v124 = vunpack.c.l.b16 %v39
    %v125 = vunpack.c.h.b16 %v39
    %v126 = vunpack.c.l.b16 %v40
    %v127 = vunpack.c.h.b16 %v40
    %v128 = vunpack.c.l.b16 %v41
    %v129 = vunpack.c.h.b16 %v41
    %v130 = vunpack.c.l.b16 %v42
    %v131 = vunpack.c.h.b16 %v42
    %v132 = vunpack.c.l.b16 %v43
    %v133 = vunpack.c.h.b16 %v43
    %v134 = vunpack.c.l.b16 %v44
    %v135 = vunpack.c.h.b16 %v44
    %v136 = vunpack.c.l.b16 %v45
    %v137 = vunpack.c.h.b16 %v45
    %v138 = vunpack.c.l.b16 %v46
    %v139 = vunpack.c.h.b16 %v46
    %v140 = vunpack.c.l.b16 %v47
    %v141 = vunpack.c.h.b16 %v47
    %v142 = vunpack.c.l.b16 %v48
    %v143 = vunpack.c.h.b16 %v48
    %v144 = vunpack.c.l.b16 %v49
    %v145 = vunpack.c.h.b16 %v49
    %v146 = vunpack.c.l.b16 %v50
    %v147 = vunpack.c.h.b16 %v50
    %v148 = vunpack.c.l.b16 %v51
    %v149 = vunpack.c.h.b16 %v51
    %v150 = vunpack.c.l.b16 %v52
    %v151 = vunpack.c.h.b16 %v52
    %v152 = vunpack.c.l.b16 %v53
    %v153 = vunpack.c.h.b16 %v53
    %v154 = vunpack.c.l.b16 %v54
    %v155 = vunpack.c.h.b16 %v54
    %v156 = vunpack.c.l.b16 %v55
    %v157 = vunpack.c.h.b16 %v55
    %v158 = vunpack.c.l.b16 %v56
    %v159 = vunpack.c.h.b16 %v56
    %v160 = vunpack.c.l.b16 %v57
    %v161 = vunpack.c.h.b16 %v57
    %v162 = vunpack.c.l.b16 %v58
    %v163 = vunpack.c.h.b16 %v58
    %v164 = vunpack.c.l.b16 %v59
    %v165 = vunpack.c.h.b16 %v59
    %v166 = vunpack.c.l.b16 %v60
    %v167 = vunpack.c.h.b16 %v60
    %v168 = vunpack.c.l.b16 %v61
    %v169 = vunpack.c.h.b16 %v61
    %v170 = vunpack.c.l.b16 %v62
    %v171 = vunpack.c.h.b16 %v62
    %v172 = vunpack.c.l.b16 %v63
    %v173 = vunpack.c.h.b16 %v63
    %v174 = vunpack.c.l.b16 %v64
    %v175 = vunpack.c.h.b16 %v64
    %v176 = vunpack.c.l.b16 %v65
    %v177 = vunpack.c.h.b16 %v65
    %v178 = vunpack.c.l.b16 %v66
    %v179 = vunpack.c.h.b16 %v66
    %v180 = vunpack.c.l.b16 %v67
    %v181 = vunpack.c.h.b16 %v67
    %v182 = vpack.c.b16 %v126, %v118
    %v183 = vpack.c.b16 %v127, %v119
    %v184 = vpack.c.b16 %v128, %v120
    %v185 = vpack.c.b16 %v129, %v121
    %v186 = vpack.c.b16 %v130, %v122
    %v187 = vpack.c.b16 %v131, %v123
    %v188 = vpack.c.b16 %v132, %v124
    %v189 = vpack.c.b16 %v133, %v125
    %v190 = vpack.c.b16 %v142, %v134
    %v191 = vpack.c.b16 %v143, %v135
    %v192 = vpack.c.b16 %v144, %v136
    %v193 = vpack.c.b16 %v145, %v137
    %v194 = vpack.c.b16 %v146, %v138
    %v195 = vpack.c.b16 %v147, %v139
    %v196 = vpack.c.b16 %v148, %v140
    %v197 = vpack.c.b16 %v149, %v141
    %v198 = vpack.c.b16 %v158, %v150
    %v199 = vpack.c.b16 %v159, %v151
    %v200 = vpack.c.b16 %v160, %v152
    %v201 = vpack.c.b16 %v161, %v153
    %v202 = vpack.c.b16 %v162, %v154
    %v203 = vpack.c.b16 %v163, %v155
    %v204 = vpack.c.b16 %v164, %v156
    %v205 = vpack.c.b16 %v165, %v157
    %v206 = vpack.c.b16 %v174, %v166
    %v207 = vpack.c.b16 %v175, %v167
    %v208 = vpack.c.b16 %v176, %v168
    %v209 = vpack.c.b16 %v177, %v169
    %v210 = vpack.c.b16 %v178, %v170
    %v211 = vpack.c.b16 %v179, %v171
    %v212 = vpack.c.b16 %v180, %v172
    %v213 = vpack.c.b16 %v181, %v173
    %vm246 = vcmask 523264
    %v248 = vsel %vm246, %v35, 0
    %250 = vmatpush.bf16.msra.mxu0 0
    %251 = vmatpush.bf16.msra.mxu0 0
    %252 = vmatpush.bf16.msra.mxu0 0
    %253 = vmatpush.bf16.msra.mxu0 0
    %254 = vmatpush.bf16.msra.mxu0 %v206
    %255 = vmatpush.bf16.msra.mxu0 %v198
    %256 = vmatpush.bf16.msra.mxu0 %v190
    %257 = vmatpush.bf16.msra.mxu0 %v182
    %258 = vmatmul.bf16.gmra.mxu0 %v248
    %v259 = vpop.f32.mrf.mxu0
    %v260 = vadd.f32 %v70, %v259
    %v261 = vpop.f32.mrf.mxu0
    %262 = vdwg.mxu0
    %263 = vmatpush.bf16.msra.mxu0 0
    %264 = vmatpush.bf16.msra.mxu0 0
    %265 = vmatpush.bf16.msra.mxu0 0
    %266 = vmatpush.bf16.msra.mxu0 0
    %267 = vmatpush.bf16.msra.mxu0 %v207
    %268 = vmatpush.bf16.msra.mxu0 %v199
    %269 = vmatpush.bf16.msra.mxu0 %v191
    %270 = vmatpush.bf16.msra.mxu0 %v183
    %271 = vmatmul.bf16.gmra.mxu0 %v248
    %v272 = vpop.f32.mrf.mxu0
    %v273 = vadd.f32 %v71, %v272
    %v274 = vpop.f32.mrf.mxu0
    %275 = vdwg.mxu0
    %276 = vmatpush.bf16.msra.mxu0 0
    %277 = vmatpush.bf16.msra.mxu0 0
    %278 = vmatpush.bf16.msra.mxu0 0
    %279 = vmatpush.bf16.msra.mxu0 0
    %280 = vmatpush.bf16.msra.mxu0 %v208
    %281 = vmatpush.bf16.msra.mxu0 %v200
    %282 = vmatpush.bf16.msra.mxu0 %v192
    %283 = vmatpush.bf16.msra.mxu0 %v184
    %284 = vmatmul.bf16.gmra.mxu0 %v248
    %v285 = vpop.f32.mrf.mxu0
    %v286 = vadd.f32 %v72, %v285
    %v287 = vpop.f32.mrf.mxu0
    %288 = vdwg.mxu0
    %289 = vmatpush.bf16.msra.mxu0 0
    %290 = vmatpush.bf16.msra.mxu0 0
    %291 = vmatpush.bf16.msra.mxu0 0
    %292 = vmatpush.bf16.msra.mxu0 0
    %293 = vmatpush.bf16.msra.mxu0 %v209
    %294 = vmatpush.bf16.msra.mxu0 %v201
    %295 = vmatpush.bf16.msra.mxu0 %v193
    %296 = vmatpush.bf16.msra.mxu0 %v185
    %297 = vmatmul.bf16.gmra.mxu0 %v248
    %v298 = vpop.f32.mrf.mxu0
    %v299 = vadd.f32 %v73, %v298
    %v300 = vpop.f32.mrf.mxu0
    %301 = vdwg.mxu0
    %302 = vmatpush.bf16.msra.mxu0 0
    %303 = vmatpush.bf16.msra.mxu0 0
    %304 = vmatpush.bf16.msra.mxu0 0
    %305 = vmatpush.bf16.msra.mxu0 0
    %306 = vmatpush.bf16.msra.mxu0 %v210
    %307 = vmatpush.bf16.msra.mxu0 %v202
    %308 = vmatpush.bf16.msra.mxu0 %v194
    %309 = vmatpush.bf16.msra.mxu0 %v186
    %310 = vmatmul.bf16.gmra.mxu0 %v248
    %v311 = vpop.f32.mrf.mxu0
    %v312 = vadd.f32 %v74, %v311
    %v313 = vpop.f32.mrf.mxu0
    %314 = vdwg.mxu0
    %315 = vmatpush.bf16.msra.mxu0 0
    %316 = vmatpush.bf16.msra.mxu0 0
    %317 = vmatpush.bf16.msra.mxu0 0
    %318 = vmatpush.bf16.msra.mxu0 0
    %319 = vmatpush.bf16.msra.mxu0 %v211
    %320 = vmatpush.bf16.msra.mxu0 %v203
    %321 = vmatpush.bf16.msra.mxu0 %v195
    %322 = vmatpush.bf16.msra.mxu0 %v187
    %323 = vmatmul.bf16.gmra.mxu0 %v248
    %v324 = vpop.f32.mrf.mxu0
    %v325 = vadd.f32 %v75, %v324
    %v326 = vpop.f32.mrf.mxu0
    %327 = vdwg.mxu0
    %328 = vmatpush.bf16.msra.mxu0 0
    %329 = vmatpush.bf16.msra.mxu0 0
    %330 = vmatpush.bf16.msra.mxu0 0
    %331 = vmatpush.bf16.msra.mxu0 0
    %332 = vmatpush.bf16.msra.mxu0 %v212
    %333 = vmatpush.bf16.msra.mxu0 %v204
    %334 = vmatpush.bf16.msra.mxu0 %v196
    %335 = vmatpush.bf16.msra.mxu0 %v188
    %336 = vmatmul.bf16.gmra.mxu0 %v248
    %v337 = vpop.f32.mrf.mxu0
    %v338 = vadd.f32 %v76, %v337
    %v339 = vpop.f32.mrf.mxu0
    %340 = vdwg.mxu0
    %341 = vmatpush.bf16.msra.mxu0 0
    %342 = vmatpush.bf16.msra.mxu0 0
    %343 = vmatpush.bf16.msra.mxu0 0
    %344 = vmatpush.bf16.msra.mxu0 0
    %345 = vmatpush.bf16.msra.mxu0 %v213
    %346 = vmatpush.bf16.msra.mxu0 %v205
    %347 = vmatpush.bf16.msra.mxu0 %v197
    %348 = vmatpush.bf16.msra.mxu0 %v189
    %349 = vmatmul.bf16.gmra.mxu0 %v248
    %v350 = vpop.f32.mrf.mxu0
    %v351 = vadd.f32 %v77, %v350
    %v352 = vpop.f32.mrf.mxu0
    %353 = vdwg.mxu0
    %v354 = vmax.f32 %v260, 0.0
    %v355 = vmax.f32 %v273, 0.0
    %v356 = vmax.f32 %v286, 0.0
    %v357 = vmax.f32 %v299, 0.0
    %v358 = vmax.f32 %v312, 0.0
    %v359 = vmax.f32 %v325, 0.0
    %v360 = vmax.f32 %v338, 0.0
    %v361 = vmax.f32 %v351, 0.0
    %v362 = vpack.c.bf16 %v354, %v354
    %v363 = vpack.c.bf16 %v355, %v355
    %v364 = vpack.c.bf16 %v356, %v356
    %v365 = vpack.c.bf16 %v357, %v357
    %v366 = vpack.c.bf16 %v358, %v358
    %v367 = vpack.c.bf16 %v359, %v359
    %v368 = vpack.c.bf16 %v360, %v360
    %v369 = vpack.c.bf16 %v361, %v361
    %v370 = vld [vmem:[%s3] sm:$0xff]
    %v371 = vld [vmem:[%s3 + $0x8] sm:$0xff]
    %v372 = vld [vmem:[%s3 + $0x10] sm:$0xff]
    %v373 = vld [vmem:[%s3 + $0x18] sm:$0xff]
    %v374 = vld [vmem:[%s3 + $0x20] sm:$0xff]
    %v375 = vld [vmem:[%s3 + $0x28] sm:$0xff]
    %v376 = vld [vmem:[%s3 + $0x30] sm:$0xff]
    %v377 = vld [vmem:[%s3 + $0x38] sm:$0xff]
    %v378 = vld [vmem:[%s3 + $0x40] sm:$0xff]
    %v379 = vld [vmem:[%s3 + $0x48] sm:$0xff]
    %v380 = vld [vmem:[%s3 + $0x50] sm:$0xff]
    %v381 = vld [vmem:[%s3 + $0x58] sm:$0xff]
    %v382 = vld [vmem:[%s3 + $0x60] sm:$0xff]
    %v383 = vld [vmem:[%s3 + $0x68] sm:$0xff]
    %v384 = vld [vmem:[%s3 + $0x70] sm:$0xff]
    %v385 = vld [vmem:[%s3 + $0x78] sm:$0xff]
    %v386 = vld [vmem:[%s3 + $0x80] sm:$0xff]
    %v387 = vld [vmem:[%s3 + $0x88] sm:$0xff]
    %v388 = vld [vmem:[%s3 + $0x90] sm:$0xff]
    %v389 = vld [vmem:[%s3 + $0x98] sm:$0xff]
    %v390 = vld [vmem:[%s3 + $0xa0] sm:$0xff]
    %v391 = vld [vmem:[%s3 + $0xa8] sm:$0xff]
    %v392 = vld [vmem:[%s3 + $0xb0] sm:$0xff]
    %v393 = vld [vmem:[%s3 + $0xb8] sm:$0xff]
    %v394 = vld [vmem:[%s3 + $0xc0] sm:$0xff]
    %v395 = vld [vmem:[%s3 + $0xc8] sm:$0xff]
    %v396 = vld [vmem:[%s3 + $0xd0] sm:$0xff]
    %v397 = vld [vmem:[%s3 + $0xd8] sm:$0xff]
    %v398 = vld [vmem:[%s3 + $0xe0] sm:$0xff]
    %v399 = vld [vmem:[%s3 + $0xe8] sm:$0xff]
    %v400 = vld [vmem:[%s3 + $0xf0] sm:$0xff]
    %v401 = vld [vmem:[%s3 + $0xf8] sm:$0xff]
    %v402 = vld [vmem:[%s3 + $0x100] sm:$0xff]
    %v403 = vld [vmem:[%s3 + $0x108] sm:$0xff]
    %v404 = vld [vmem:[%s3 + $0x110] sm:$0xff]
    %v405 = vld [vmem:[%s3 + $0x118] sm:$0xff]
    %v406 = vld [vmem:[%s3 + $0x120] sm:$0xff]
    %v407 = vld [vmem:[%s3 + $0x128] sm:$0xff]
    %v408 = vld [vmem:[%s3 + $0x130] sm:$0xff]
    %v409 = vld [vmem:[%s3 + $0x138] sm:$0xff]
    %v410 = vld [vmem:[%s3 + $0x140] sm:$0xff]
    %v411 = vld [vmem:[%s3 + $0x148] sm:$0xff]
    %v412 = vld [vmem:[%s3 + $0x150] sm:$0xff]
    %v413 = vld [vmem:[%s3 + $0x158] sm:$0xff]
    %v414 = vld [vmem:[%s3 + $0x160] sm:$0xff]
    %v415 = vld [vmem:[%s3 + $0x168] sm:$0xff]
    %v416 = vld [vmem:[%s3 + $0x170] sm:$0xff]
    %v417 = vld [vmem:[%s3 + $0x178] sm:$0xff]
    %v418 = vld [vmem:[%s3 + $0x180] sm:$0xff]
    %v419 = vld [vmem:[%s3 + $0x188] sm:$0xff]
    %v420 = vld [vmem:[%s3 + $0x190] sm:$0xff]
    %v421 = vld [vmem:[%s3 + $0x198] sm:$0xff]
    %v422 = vld [vmem:[%s3 + $0x1a0] sm:$0xff]
    %v423 = vld [vmem:[%s3 + $0x1a8] sm:$0xff]
    %v424 = vld [vmem:[%s3 + $0x1b0] sm:$0xff]
    %v425 = vld [vmem:[%s3 + $0x1b8] sm:$0xff]
    %v426 = vld [vmem:[%s3 + $0x1c0] sm:$0xff]
    %v427 = vld [vmem:[%s3 + $0x1c8] sm:$0xff]
    %v428 = vld [vmem:[%s3 + $0x1d0] sm:$0xff]
    %v429 = vld [vmem:[%s3 + $0x1d8] sm:$0xff]
    %v430 = vld [vmem:[%s3 + $0x1e0] sm:$0xff]
    %v431 = vld [vmem:[%s3 + $0x1e8] sm:$0xff]
    %v432 = vld [vmem:[%s3 + $0x1f0] sm:$0xff]
    %v433 = vld [vmem:[%s3 + $0x1f8] sm:$0xff]
    %v434 = vld [vmem:[%s3 + $0x200] sm:$0xff]
    %v435 = vld [vmem:[%s3 + $0x208] sm:$0xff]
    %v436 = vld [vmem:[%s3 + $0x210] sm:$0xff]
    %v437 = vld [vmem:[%s3 + $0x218] sm:$0xff]
    %v438 = vld [vmem:[%s3 + $0x220] sm:$0xff]
    %v439 = vld [vmem:[%s3 + $0x228] sm:$0xff]
    %v440 = vld [vmem:[%s3 + $0x230] sm:$0xff]
    %v441 = vld [vmem:[%s3 + $0x238] sm:$0xff]
    %v442 = vld [vmem:[%s3 + $0x240] sm:$0xff]
    %v443 = vld [vmem:[%s3 + $0x248] sm:$0xff]
    %v444 = vld [vmem:[%s3 + $0x250] sm:$0xff]
    %v445 = vld [vmem:[%s3 + $0x258] sm:$0xff]
    %v446 = vld [vmem:[%s3 + $0x260] sm:$0xff]
    %v447 = vld [vmem:[%s3 + $0x268] sm:$0xff]
    %v448 = vld [vmem:[%s3 + $0x270] sm:$0xff]
    %v449 = vld [vmem:[%s3 + $0x278] sm:$0xff]
    %v450 = vld [vmem:[%s3 + $0x280] sm:$0xff]
    %v451 = vld [vmem:[%s3 + $0x288] sm:$0xff]
    %v452 = vld [vmem:[%s3 + $0x290] sm:$0xff]
    %v453 = vld [vmem:[%s3 + $0x298] sm:$0xff]
    %v454 = vld [vmem:[%s3 + $0x2a0] sm:$0xff]
    %v455 = vld [vmem:[%s3 + $0x2a8] sm:$0xff]
    %v456 = vld [vmem:[%s3 + $0x2b0] sm:$0xff]
    %v457 = vld [vmem:[%s3 + $0x2b8] sm:$0xff]
    %v458 = vld [vmem:[%s3 + $0x2c0] sm:$0xff]
    %v459 = vld [vmem:[%s3 + $0x2c8] sm:$0xff]
    %v460 = vld [vmem:[%s3 + $0x2d0] sm:$0xff]
    %v461 = vld [vmem:[%s3 + $0x2d8] sm:$0xff]
    %v462 = vld [vmem:[%s3 + $0x2e0] sm:$0xff]
    %v463 = vld [vmem:[%s3 + $0x2e8] sm:$0xff]
    %v464 = vld [vmem:[%s3 + $0x2f0] sm:$0xff]
    %v465 = vld [vmem:[%s3 + $0x2f8] sm:$0xff]
    %v466 = vld [vmem:[%s3 + $0x300] sm:$0xff]
    %v467 = vld [vmem:[%s3 + $0x308] sm:$0xff]
    %v468 = vld [vmem:[%s3 + $0x310] sm:$0xff]
    %v469 = vld [vmem:[%s3 + $0x318] sm:$0xff]
    %v470 = vld [vmem:[%s3 + $0x320] sm:$0xff]
    %v471 = vld [vmem:[%s3 + $0x328] sm:$0xff]
    %v472 = vld [vmem:[%s3 + $0x330] sm:$0xff]
    %v473 = vld [vmem:[%s3 + $0x338] sm:$0xff]
    %v474 = vld [vmem:[%s3 + $0x340] sm:$0xff]
    %v475 = vld [vmem:[%s3 + $0x348] sm:$0xff]
    %v476 = vld [vmem:[%s3 + $0x350] sm:$0xff]
    %v477 = vld [vmem:[%s3 + $0x358] sm:$0xff]
    %v478 = vld [vmem:[%s3 + $0x360] sm:$0xff]
    %v479 = vld [vmem:[%s3 + $0x368] sm:$0xff]
    %v480 = vld [vmem:[%s3 + $0x370] sm:$0xff]
    %v481 = vld [vmem:[%s3 + $0x378] sm:$0xff]
    %v482 = vld [vmem:[%s3 + $0x380] sm:$0xff]
    %v483 = vld [vmem:[%s3 + $0x388] sm:$0xff]
    %v484 = vld [vmem:[%s3 + $0x390] sm:$0xff]
    %v485 = vld [vmem:[%s3 + $0x398] sm:$0xff]
    %v486 = vld [vmem:[%s3 + $0x3a0] sm:$0xff]
    %v487 = vld [vmem:[%s3 + $0x3a8] sm:$0xff]
    %v488 = vld [vmem:[%s3 + $0x3b0] sm:$0xff]
    %v489 = vld [vmem:[%s3 + $0x3b8] sm:$0xff]
    %v490 = vld [vmem:[%s3 + $0x3c0] sm:$0xff]
    %v491 = vld [vmem:[%s3 + $0x3c8] sm:$0xff]
    %v492 = vld [vmem:[%s3 + $0x3d0] sm:$0xff]
    %v493 = vld [vmem:[%s3 + $0x3d8] sm:$0xff]
    %v494 = vld [vmem:[%s3 + $0x3e0] sm:$0xff]
    %v495 = vld [vmem:[%s3 + $0x3e8] sm:$0xff]
    %v496 = vld [vmem:[%s3 + $0x3f0] sm:$0xff]
    %v497 = vld [vmem:[%s3 + $0x3f8] sm:$0xff]
    %v498 = vld [vmem:[%s3 + $0x400] sm:$0xff]
    %v499 = vld [vmem:[%s3 + $0x408] sm:$0xff]
    %v500 = vld [vmem:[%s3 + $0x410] sm:$0xff]
    %v501 = vld [vmem:[%s3 + $0x418] sm:$0xff]
    %v502 = vld [vmem:[%s3 + $0x420] sm:$0xff]
    %v503 = vld [vmem:[%s3 + $0x428] sm:$0xff]
    %v504 = vld [vmem:[%s3 + $0x430] sm:$0xff]
    %v505 = vld [vmem:[%s3 + $0x438] sm:$0xff]
    %v506 = vld [vmem:[%s3 + $0x440] sm:$0xff]
    %v507 = vld [vmem:[%s3 + $0x448] sm:$0xff]
    %v508 = vld [vmem:[%s3 + $0x450] sm:$0xff]
    %v509 = vld [vmem:[%s3 + $0x458] sm:$0xff]
    %v510 = vld [vmem:[%s3 + $0x460] sm:$0xff]
    %v511 = vld [vmem:[%s3 + $0x468] sm:$0xff]
    %v512 = vld [vmem:[%s3 + $0x470] sm:$0xff]
    %v513 = vld [vmem:[%s3 + $0x478] sm:$0xff]
    %v514 = vld [vmem:[%s3 + $0x480] sm:$0xff]
    %v515 = vld [vmem:[%s3 + $0x488] sm:$0xff]
    %v516 = vld [vmem:[%s3 + $0x490] sm:$0xff]
    %v517 = vld [vmem:[%s3 + $0x498] sm:$0xff]
    %v518 = vld [vmem:[%s3 + $0x4a0] sm:$0xff]
    %v519 = vld [vmem:[%s3 + $0x4a8] sm:$0xff]
    %v520 = vld [vmem:[%s3 + $0x4b0] sm:$0xff]
    %v521 = vld [vmem:[%s3 + $0x4b8] sm:$0xff]
    %v522 = vld [vmem:[%s3 + $0x4c0] sm:$0xff]
    %v523 = vld [vmem:[%s3 + $0x4c8] sm:$0xff]
    %v524 = vld [vmem:[%s3 + $0x4d0] sm:$0xff]
    %v525 = vld [vmem:[%s3 + $0x4d8] sm:$0xff]
    %v526 = vld [vmem:[%s3 + $0x4e0] sm:$0xff]
    %v527 = vld [vmem:[%s3 + $0x4e8] sm:$0xff]
    %v528 = vld [vmem:[%s3 + $0x4f0] sm:$0xff]
    %v529 = vld [vmem:[%s3 + $0x4f8] sm:$0xff]
    %v530 = vld [vmem:[%s3 + $0x500] sm:$0xff]
    %v531 = vld [vmem:[%s3 + $0x508] sm:$0xff]
    %v532 = vld [vmem:[%s3 + $0x510] sm:$0xff]
    %v533 = vld [vmem:[%s3 + $0x518] sm:$0xff]
    %v534 = vld [vmem:[%s3 + $0x520] sm:$0xff]
    %v535 = vld [vmem:[%s3 + $0x528] sm:$0xff]
    %v536 = vld [vmem:[%s3 + $0x530] sm:$0xff]
    %v537 = vld [vmem:[%s3 + $0x538] sm:$0xff]
    %v538 = vld [vmem:[%s3 + $0x540] sm:$0xff]
    %v539 = vld [vmem:[%s3 + $0x548] sm:$0xff]
    %v540 = vld [vmem:[%s3 + $0x550] sm:$0xff]
    %v541 = vld [vmem:[%s3 + $0x558] sm:$0xff]
    %v542 = vld [vmem:[%s3 + $0x560] sm:$0xff]
    %v543 = vld [vmem:[%s3 + $0x568] sm:$0xff]
    %v544 = vld [vmem:[%s3 + $0x570] sm:$0xff]
    %v545 = vld [vmem:[%s3 + $0x578] sm:$0xff]
    %v546 = vld [vmem:[%s3 + $0x580] sm:$0xff]
    %v547 = vld [vmem:[%s3 + $0x588] sm:$0xff]
    %v548 = vld [vmem:[%s3 + $0x590] sm:$0xff]
    %v549 = vld [vmem:[%s3 + $0x598] sm:$0xff]
    %v550 = vld [vmem:[%s3 + $0x5a0] sm:$0xff]
    %v551 = vld [vmem:[%s3 + $0x5a8] sm:$0xff]
    %v552 = vld [vmem:[%s3 + $0x5b0] sm:$0xff]
    %v553 = vld [vmem:[%s3 + $0x5b8] sm:$0xff]
    %v554 = vld [vmem:[%s3 + $0x5c0] sm:$0xff]
    %v555 = vld [vmem:[%s3 + $0x5c8] sm:$0xff]
    %v556 = vld [vmem:[%s3 + $0x5d0] sm:$0xff]
    %v557 = vld [vmem:[%s3 + $0x5d8] sm:$0xff]
    %v558 = vld [vmem:[%s3 + $0x5e0] sm:$0xff]
    %v559 = vld [vmem:[%s3 + $0x5e8] sm:$0xff]
    %v560 = vld [vmem:[%s3 + $0x5f0] sm:$0xff]
    %v561 = vld [vmem:[%s3 + $0x5f8] sm:$0xff]
    %v562 = vld [vmem:[%s3 + $0x600] sm:$0xff]
    %v563 = vld [vmem:[%s3 + $0x608] sm:$0xff]
    %v564 = vld [vmem:[%s3 + $0x610] sm:$0xff]
    %v565 = vld [vmem:[%s3 + $0x618] sm:$0xff]
    %v566 = vld [vmem:[%s3 + $0x620] sm:$0xff]
    %v567 = vld [vmem:[%s3 + $0x628] sm:$0xff]
    %v568 = vld [vmem:[%s3 + $0x630] sm:$0xff]
    %v569 = vld [vmem:[%s3 + $0x638] sm:$0xff]
    %v570 = vld [vmem:[%s3 + $0x640] sm:$0xff]
    %v571 = vld [vmem:[%s3 + $0x648] sm:$0xff]
    %v572 = vld [vmem:[%s3 + $0x650] sm:$0xff]
    %v573 = vld [vmem:[%s3 + $0x658] sm:$0xff]
    %v574 = vld [vmem:[%s3 + $0x660] sm:$0xff]
    %v575 = vld [vmem:[%s3 + $0x668] sm:$0xff]
    %v576 = vld [vmem:[%s3 + $0x670] sm:$0xff]
    %v577 = vld [vmem:[%s3 + $0x678] sm:$0xff]
    %v578 = vld [vmem:[%s3 + $0x680] sm:$0xff]
    %v579 = vld [vmem:[%s3 + $0x688] sm:$0xff]
    %v580 = vld [vmem:[%s3 + $0x690] sm:$0xff]
    %v581 = vld [vmem:[%s3 + $0x698] sm:$0xff]
    %v582 = vld [vmem:[%s3 + $0x6a0] sm:$0xff]
    %v583 = vld [vmem:[%s3 + $0x6a8] sm:$0xff]
    %v584 = vld [vmem:[%s3 + $0x6b0] sm:$0xff]
    %v585 = vld [vmem:[%s3 + $0x6b8] sm:$0xff]
    %v586 = vld [vmem:[%s3 + $0x6c0] sm:$0xff]
    %v587 = vld [vmem:[%s3 + $0x6c8] sm:$0xff]
    %v588 = vld [vmem:[%s3 + $0x6d0] sm:$0xff]
    %v589 = vld [vmem:[%s3 + $0x6d8] sm:$0xff]
    %v590 = vld [vmem:[%s3 + $0x6e0] sm:$0xff]
    %v591 = vld [vmem:[%s3 + $0x6e8] sm:$0xff]
    %v592 = vld [vmem:[%s3 + $0x6f0] sm:$0xff]
    %v593 = vld [vmem:[%s3 + $0x6f8] sm:$0xff]
    %v594 = vld [vmem:[%s3 + $0x700] sm:$0xff]
    %v595 = vld [vmem:[%s3 + $0x708] sm:$0xff]
    %v596 = vld [vmem:[%s3 + $0x710] sm:$0xff]
    %v597 = vld [vmem:[%s3 + $0x718] sm:$0xff]
    %v598 = vld [vmem:[%s3 + $0x720] sm:$0xff]
    %v599 = vld [vmem:[%s3 + $0x728] sm:$0xff]
    %v600 = vld [vmem:[%s3 + $0x730] sm:$0xff]
    %v601 = vld [vmem:[%s3 + $0x738] sm:$0xff]
    %v602 = vld [vmem:[%s3 + $0x740] sm:$0xff]
    %v603 = vld [vmem:[%s3 + $0x748] sm:$0xff]
    %v604 = vld [vmem:[%s3 + $0x750] sm:$0xff]
    %v605 = vld [vmem:[%s3 + $0x758] sm:$0xff]
    %v606 = vld [vmem:[%s3 + $0x760] sm:$0xff]
    %v607 = vld [vmem:[%s3 + $0x768] sm:$0xff]
    %v608 = vld [vmem:[%s3 + $0x770] sm:$0xff]
    %v609 = vld [vmem:[%s3 + $0x778] sm:$0xff]
    %v610 = vld [vmem:[%s3 + $0x780] sm:$0xff]
    %v611 = vld [vmem:[%s3 + $0x788] sm:$0xff]
    %v612 = vld [vmem:[%s3 + $0x790] sm:$0xff]
    %v613 = vld [vmem:[%s3 + $0x798] sm:$0xff]
    %v614 = vld [vmem:[%s3 + $0x7a0] sm:$0xff]
    %v615 = vld [vmem:[%s3 + $0x7a8] sm:$0xff]
    %v616 = vld [vmem:[%s3 + $0x7b0] sm:$0xff]
    %v617 = vld [vmem:[%s3 + $0x7b8] sm:$0xff]
    %v618 = vld [vmem:[%s3 + $0x7c0] sm:$0xff]
    %v619 = vld [vmem:[%s3 + $0x7c8] sm:$0xff]
    %v620 = vld [vmem:[%s3 + $0x7d0] sm:$0xff]
    %v621 = vld [vmem:[%s3 + $0x7d8] sm:$0xff]
    %v622 = vld [vmem:[%s3 + $0x7e0] sm:$0xff]
    %v623 = vld [vmem:[%s3 + $0x7e8] sm:$0xff]
    %v624 = vld [vmem:[%s3 + $0x7f0] sm:$0xff]
    %v625 = vld [vmem:[%s3 + $0x7f8] sm:$0xff]
    %v626 = vld [vmem:[%s4] sm:$0xf]
    %v628 = vperm.slane %v626, 0
    %v629 = vperm.slane %v626, 1
    %v630 = vperm.slane %v626, 2
    %v631 = vperm.slane %v626, 3
    %v892 = vunpack.c.l.b16 %v370
    %v893 = vunpack.c.h.b16 %v370
    %v894 = vunpack.c.l.b16 %v371
    %v895 = vunpack.c.h.b16 %v371
    %v896 = vunpack.c.l.b16 %v372
    %v897 = vunpack.c.h.b16 %v372
    %v898 = vunpack.c.l.b16 %v373
    %v899 = vunpack.c.h.b16 %v373
    %v900 = vunpack.c.l.b16 %v374
    %v901 = vunpack.c.h.b16 %v374
    %v902 = vunpack.c.l.b16 %v375
    %v903 = vunpack.c.h.b16 %v375
    %v904 = vunpack.c.l.b16 %v376
    %v905 = vunpack.c.h.b16 %v376
    %v906 = vunpack.c.l.b16 %v377
    %v907 = vunpack.c.h.b16 %v377
    %v908 = vunpack.c.l.b16 %v378
    %v909 = vunpack.c.h.b16 %v378
    %v910 = vunpack.c.l.b16 %v379
    %v911 = vunpack.c.h.b16 %v379
    %v912 = vunpack.c.l.b16 %v380
    %v913 = vunpack.c.h.b16 %v380
    %v914 = vunpack.c.l.b16 %v381
    %v915 = vunpack.c.h.b16 %v381
    %v916 = vunpack.c.l.b16 %v382
    %v917 = vunpack.c.h.b16 %v382
    %v918 = vunpack.c.l.b16 %v383
    %v919 = vunpack.c.h.b16 %v383
    %v920 = vunpack.c.l.b16 %v384
    %v921 = vunpack.c.h.b16 %v384
    %v922 = vunpack.c.l.b16 %v385
    %v923 = vunpack.c.h.b16 %v385
    %v924 = vunpack.c.l.b16 %v386
    %v925 = vunpack.c.h.b16 %v386
    %v926 = vunpack.c.l.b16 %v387
    %v927 = vunpack.c.h.b16 %v387
    %v928 = vunpack.c.l.b16 %v388
    %v929 = vunpack.c.h.b16 %v388
    %v930 = vunpack.c.l.b16 %v389
    %v931 = vunpack.c.h.b16 %v389
    %v932 = vunpack.c.l.b16 %v390
    %v933 = vunpack.c.h.b16 %v390
    %v934 = vunpack.c.l.b16 %v391
    %v935 = vunpack.c.h.b16 %v391
    %v936 = vunpack.c.l.b16 %v392
    %v937 = vunpack.c.h.b16 %v392
    %v938 = vunpack.c.l.b16 %v393
    %v939 = vunpack.c.h.b16 %v393
    %v940 = vunpack.c.l.b16 %v394
    %v941 = vunpack.c.h.b16 %v394
    %v942 = vunpack.c.l.b16 %v395
    %v943 = vunpack.c.h.b16 %v395
    %v944 = vunpack.c.l.b16 %v396
    %v945 = vunpack.c.h.b16 %v396
    %v946 = vunpack.c.l.b16 %v397
    %v947 = vunpack.c.h.b16 %v397
    %v948 = vunpack.c.l.b16 %v398
    %v949 = vunpack.c.h.b16 %v398
    %v950 = vunpack.c.l.b16 %v399
    %v951 = vunpack.c.h.b16 %v399
    %v952 = vunpack.c.l.b16 %v400
    %v953 = vunpack.c.h.b16 %v400
    %v954 = vunpack.c.l.b16 %v401
    %v955 = vunpack.c.h.b16 %v401
    %v956 = vunpack.c.l.b16 %v402
    %v957 = vunpack.c.h.b16 %v402
    %v958 = vunpack.c.l.b16 %v403
    %v959 = vunpack.c.h.b16 %v403
    %v960 = vunpack.c.l.b16 %v404
    %v961 = vunpack.c.h.b16 %v404
    %v962 = vunpack.c.l.b16 %v405
    %v963 = vunpack.c.h.b16 %v405
    %v964 = vunpack.c.l.b16 %v406
    %v965 = vunpack.c.h.b16 %v406
    %v966 = vunpack.c.l.b16 %v407
    %v967 = vunpack.c.h.b16 %v407
    %v968 = vunpack.c.l.b16 %v408
    %v969 = vunpack.c.h.b16 %v408
    %v970 = vunpack.c.l.b16 %v409
    %v971 = vunpack.c.h.b16 %v409
    %v972 = vunpack.c.l.b16 %v410
    %v973 = vunpack.c.h.b16 %v410
    %v974 = vunpack.c.l.b16 %v411
    %v975 = vunpack.c.h.b16 %v411
    %v976 = vunpack.c.l.b16 %v412
    %v977 = vunpack.c.h.b16 %v412
    %v978 = vunpack.c.l.b16 %v413
    %v979 = vunpack.c.h.b16 %v413
    %v980 = vunpack.c.l.b16 %v414
    %v981 = vunpack.c.h.b16 %v414
    %v982 = vunpack.c.l.b16 %v415
    %v983 = vunpack.c.h.b16 %v415
    %v984 = vunpack.c.l.b16 %v416
    %v985 = vunpack.c.h.b16 %v416
    %v986 = vunpack.c.l.b16 %v417
    %v987 = vunpack.c.h.b16 %v417
    %v988 = vunpack.c.l.b16 %v418
    %v989 = vunpack.c.h.b16 %v418
    %v990 = vunpack.c.l.b16 %v419
    %v991 = vunpack.c.h.b16 %v419
    %v992 = vunpack.c.l.b16 %v420
    %v993 = vunpack.c.h.b16 %v420
    %v994 = vunpack.c.l.b16 %v421
    %v995 = vunpack.c.h.b16 %v421
    %v996 = vunpack.c.l.b16 %v422
    %v997 = vunpack.c.h.b16 %v422
    %v998 = vunpack.c.l.b16 %v423
    %v999 = vunpack.c.h.b16 %v423
    %v1000 = vunpack.c.l.b16 %v424
    %v1001 = vunpack.c.h.b16 %v424
    %v1002 = vunpack.c.l.b16 %v425
    %v1003 = vunpack.c.h.b16 %v425
    %v1004 = vunpack.c.l.b16 %v426
    %v1005 = vunpack.c.h.b16 %v426
    %v1006 = vunpack.c.l.b16 %v427
    %v1007 = vunpack.c.h.b16 %v427
    %v1008 = vunpack.c.l.b16 %v428
    %v1009 = vunpack.c.h.b16 %v428
    %v1010 = vunpack.c.l.b16 %v429
    %v1011 = vunpack.c.h.b16 %v429
    %v1012 = vunpack.c.l.b16 %v430
    %v1013 = vunpack.c.h.b16 %v430
    %v1014 = vunpack.c.l.b16 %v431
    %v1015 = vunpack.c.h.b16 %v431
    %v1016 = vunpack.c.l.b16 %v432
    %v1017 = vunpack.c.h.b16 %v432
    %v1018 = vunpack.c.l.b16 %v433
    %v1019 = vunpack.c.h.b16 %v433
    %v1020 = vunpack.c.l.b16 %v434
    %v1021 = vunpack.c.h.b16 %v434
    %v1022 = vunpack.c.l.b16 %v435
    %v1023 = vunpack.c.h.b16 %v435
    %v1024 = vunpack.c.l.b16 %v436
    %v1025 = vunpack.c.h.b16 %v436
    %v1026 = vunpack.c.l.b16 %v437
    %v1027 = vunpack.c.h.b16 %v437
    %v1028 = vunpack.c.l.b16 %v438
    %v1029 = vunpack.c.h.b16 %v438
    %v1030 = vunpack.c.l.b16 %v439
    %v1031 = vunpack.c.h.b16 %v439
    %v1032 = vunpack.c.l.b16 %v440
    %v1033 = vunpack.c.h.b16 %v440
    %v1034 = vunpack.c.l.b16 %v441
    %v1035 = vunpack.c.h.b16 %v441
    %v1036 = vunpack.c.l.b16 %v442
    %v1037 = vunpack.c.h.b16 %v442
    %v1038 = vunpack.c.l.b16 %v443
    %v1039 = vunpack.c.h.b16 %v443
    %v1040 = vunpack.c.l.b16 %v444
    %v1041 = vunpack.c.h.b16 %v444
    %v1042 = vunpack.c.l.b16 %v445
    %v1043 = vunpack.c.h.b16 %v445
    %v1044 = vunpack.c.l.b16 %v446
    %v1045 = vunpack.c.h.b16 %v446
    %v1046 = vunpack.c.l.b16 %v447
    %v1047 = vunpack.c.h.b16 %v447
    %v1048 = vunpack.c.l.b16 %v448
    %v1049 = vunpack.c.h.b16 %v448
    %v1050 = vunpack.c.l.b16 %v449
    %v1051 = vunpack.c.h.b16 %v449
    %v1052 = vunpack.c.l.b16 %v450
    %v1053 = vunpack.c.h.b16 %v450
    %v1054 = vunpack.c.l.b16 %v451
    %v1055 = vunpack.c.h.b16 %v451
    %v1056 = vunpack.c.l.b16 %v452
    %v1057 = vunpack.c.h.b16 %v452
    %v1058 = vunpack.c.l.b16 %v453
    %v1059 = vunpack.c.h.b16 %v453
    %v1060 = vunpack.c.l.b16 %v454
    %v1061 = vunpack.c.h.b16 %v454
    %v1062 = vunpack.c.l.b16 %v455
    %v1063 = vunpack.c.h.b16 %v455
    %v1064 = vunpack.c.l.b16 %v456
    %v1065 = vunpack.c.h.b16 %v456
    %v1066 = vunpack.c.l.b16 %v457
    %v1067 = vunpack.c.h.b16 %v457
    %v1068 = vunpack.c.l.b16 %v458
    %v1069 = vunpack.c.h.b16 %v458
    %v1070 = vunpack.c.l.b16 %v459
    %v1071 = vunpack.c.h.b16 %v459
    %v1072 = vunpack.c.l.b16 %v460
    %v1073 = vunpack.c.h.b16 %v460
    %v1074 = vunpack.c.l.b16 %v461
    %v1075 = vunpack.c.h.b16 %v461
    %v1076 = vunpack.c.l.b16 %v462
    %v1077 = vunpack.c.h.b16 %v462
    %v1078 = vunpack.c.l.b16 %v463
    %v1079 = vunpack.c.h.b16 %v463
    %v1080 = vunpack.c.l.b16 %v464
    %v1081 = vunpack.c.h.b16 %v464
    %v1082 = vunpack.c.l.b16 %v465
    %v1083 = vunpack.c.h.b16 %v465
    %v1084 = vunpack.c.l.b16 %v466
    %v1085 = vunpack.c.h.b16 %v466
    %v1086 = vunpack.c.l.b16 %v467
    %v1087 = vunpack.c.h.b16 %v467
    %v1088 = vunpack.c.l.b16 %v468
    %v1089 = vunpack.c.h.b16 %v468
    %v1090 = vunpack.c.l.b16 %v469
    %v1091 = vunpack.c.h.b16 %v469
    %v1092 = vunpack.c.l.b16 %v470
    %v1093 = vunpack.c.h.b16 %v470
    %v1094 = vunpack.c.l.b16 %v471
    %v1095 = vunpack.c.h.b16 %v471
    %v1096 = vunpack.c.l.b16 %v472
    %v1097 = vunpack.c.h.b16 %v472
    %v1098 = vunpack.c.l.b16 %v473
    %v1099 = vunpack.c.h.b16 %v473
    %v1100 = vunpack.c.l.b16 %v474
    %v1101 = vunpack.c.h.b16 %v474
    %v1102 = vunpack.c.l.b16 %v475
    %v1103 = vunpack.c.h.b16 %v475
    %v1104 = vunpack.c.l.b16 %v476
    %v1105 = vunpack.c.h.b16 %v476
    %v1106 = vunpack.c.l.b16 %v477
    %v1107 = vunpack.c.h.b16 %v477
    %v1108 = vunpack.c.l.b16 %v478
    %v1109 = vunpack.c.h.b16 %v478
    %v1110 = vunpack.c.l.b16 %v479
    %v1111 = vunpack.c.h.b16 %v479
    %v1112 = vunpack.c.l.b16 %v480
    %v1113 = vunpack.c.h.b16 %v480
    %v1114 = vunpack.c.l.b16 %v481
    %v1115 = vunpack.c.h.b16 %v481
    %v1116 = vunpack.c.l.b16 %v482
    %v1117 = vunpack.c.h.b16 %v482
    %v1118 = vunpack.c.l.b16 %v483
    %v1119 = vunpack.c.h.b16 %v483
    %v1120 = vunpack.c.l.b16 %v484
    %v1121 = vunpack.c.h.b16 %v484
    %v1122 = vunpack.c.l.b16 %v485
    %v1123 = vunpack.c.h.b16 %v485
    %v1124 = vunpack.c.l.b16 %v486
    %v1125 = vunpack.c.h.b16 %v486
    %v1126 = vunpack.c.l.b16 %v487
    %v1127 = vunpack.c.h.b16 %v487
    %v1128 = vunpack.c.l.b16 %v488
    %v1129 = vunpack.c.h.b16 %v488
    %v1130 = vunpack.c.l.b16 %v489
    %v1131 = vunpack.c.h.b16 %v489
    %v1132 = vunpack.c.l.b16 %v490
    %v1133 = vunpack.c.h.b16 %v490
    %v1134 = vunpack.c.l.b16 %v491
    %v1135 = vunpack.c.h.b16 %v491
    %v1136 = vunpack.c.l.b16 %v492
    %v1137 = vunpack.c.h.b16 %v492
    %v1138 = vunpack.c.l.b16 %v493
    %v1139 = vunpack.c.h.b16 %v493
    %v1140 = vunpack.c.l.b16 %v494
    %v1141 = vunpack.c.h.b16 %v494
    %v1142 = vunpack.c.l.b16 %v495
    %v1143 = vunpack.c.h.b16 %v495
    %v1144 = vunpack.c.l.b16 %v496
    %v1145 = vunpack.c.h.b16 %v496
    %v1146 = vunpack.c.l.b16 %v497
    %v1147 = vunpack.c.h.b16 %v497
    %v1148 = vunpack.c.l.b16 %v498
    %v1149 = vunpack.c.h.b16 %v498
    %v1150 = vunpack.c.l.b16 %v499
    %v1151 = vunpack.c.h.b16 %v499
    %v1152 = vunpack.c.l.b16 %v500
    %v1153 = vunpack.c.h.b16 %v500
    %v1154 = vunpack.c.l.b16 %v501
    %v1155 = vunpack.c.h.b16 %v501
    %v1156 = vunpack.c.l.b16 %v502
    %v1157 = vunpack.c.h.b16 %v502
    %v1158 = vunpack.c.l.b16 %v503
    %v1159 = vunpack.c.h.b16 %v503
    %v1160 = vunpack.c.l.b16 %v504
    %v1161 = vunpack.c.h.b16 %v504
    %v1162 = vunpack.c.l.b16 %v505
    %v1163 = vunpack.c.h.b16 %v505
    %v1164 = vunpack.c.l.b16 %v506
    %v1165 = vunpack.c.h.b16 %v506
    %v1166 = vunpack.c.l.b16 %v507
    %v1167 = vunpack.c.h.b16 %v507
    %v1168 = vunpack.c.l.b16 %v508
    %v1169 = vunpack.c.h.b16 %v508
    %v1170 = vunpack.c.l.b16 %v509
    %v1171 = vunpack.c.h.b16 %v509
    %v1172 = vunpack.c.l.b16 %v510
    %v1173 = vunpack.c.h.b16 %v510
    %v1174 = vunpack.c.l.b16 %v511
    %v1175 = vunpack.c.h.b16 %v511
    %v1176 = vunpack.c.l.b16 %v512
    %v1177 = vunpack.c.h.b16 %v512
    %v1178 = vunpack.c.l.b16 %v513
    %v1179 = vunpack.c.h.b16 %v513
    %v1180 = vunpack.c.l.b16 %v514
    %v1181 = vunpack.c.h.b16 %v514
    %v1182 = vunpack.c.l.b16 %v515
    %v1183 = vunpack.c.h.b16 %v515
    %v1184 = vunpack.c.l.b16 %v516
    %v1185 = vunpack.c.h.b16 %v516
    %v1186 = vunpack.c.l.b16 %v517
    %v1187 = vunpack.c.h.b16 %v517
    %v1188 = vunpack.c.l.b16 %v518
    %v1189 = vunpack.c.h.b16 %v518
    %v1190 = vunpack.c.l.b16 %v519
    %v1191 = vunpack.c.h.b16 %v519
    %v1192 = vunpack.c.l.b16 %v520
    %v1193 = vunpack.c.h.b16 %v520
    %v1194 = vunpack.c.l.b16 %v521
    %v1195 = vunpack.c.h.b16 %v521
    %v1196 = vunpack.c.l.b16 %v522
    %v1197 = vunpack.c.h.b16 %v522
    %v1198 = vunpack.c.l.b16 %v523
    %v1199 = vunpack.c.h.b16 %v523
    %v1200 = vunpack.c.l.b16 %v524
    %v1201 = vunpack.c.h.b16 %v524
    %v1202 = vunpack.c.l.b16 %v525
    %v1203 = vunpack.c.h.b16 %v525
    %v1204 = vunpack.c.l.b16 %v526
    %v1205 = vunpack.c.h.b16 %v526
    %v1206 = vunpack.c.l.b16 %v527
    %v1207 = vunpack.c.h.b16 %v527
    %v1208 = vunpack.c.l.b16 %v528
    %v1209 = vunpack.c.h.b16 %v528
    %v1210 = vunpack.c.l.b16 %v529
    %v1211 = vunpack.c.h.b16 %v529
    %v1212 = vunpack.c.l.b16 %v530
    %v1213 = vunpack.c.h.b16 %v530
    %v1214 = vunpack.c.l.b16 %v531
    %v1215 = vunpack.c.h.b16 %v531
    %v1216 = vunpack.c.l.b16 %v532
    %v1217 = vunpack.c.h.b16 %v532
    %v1218 = vunpack.c.l.b16 %v533
    %v1219 = vunpack.c.h.b16 %v533
    %v1220 = vunpack.c.l.b16 %v534
    %v1221 = vunpack.c.h.b16 %v534
    %v1222 = vunpack.c.l.b16 %v535
    %v1223 = vunpack.c.h.b16 %v535
    %v1224 = vunpack.c.l.b16 %v536
    %v1225 = vunpack.c.h.b16 %v536
    %v1226 = vunpack.c.l.b16 %v537
    %v1227 = vunpack.c.h.b16 %v537
    %v1228 = vunpack.c.l.b16 %v538
    %v1229 = vunpack.c.h.b16 %v538
    %v1230 = vunpack.c.l.b16 %v539
    %v1231 = vunpack.c.h.b16 %v539
    %v1232 = vunpack.c.l.b16 %v540
    %v1233 = vunpack.c.h.b16 %v540
    %v1234 = vunpack.c.l.b16 %v541
    %v1235 = vunpack.c.h.b16 %v541
    %v1236 = vunpack.c.l.b16 %v542
    %v1237 = vunpack.c.h.b16 %v542
    %v1238 = vunpack.c.l.b16 %v543
    %v1239 = vunpack.c.h.b16 %v543
    %v1240 = vunpack.c.l.b16 %v544
    %v1241 = vunpack.c.h.b16 %v544
    %v1242 = vunpack.c.l.b16 %v545
    %v1243 = vunpack.c.h.b16 %v545
    %v1244 = vunpack.c.l.b16 %v546
    %v1245 = vunpack.c.h.b16 %v546
    %v1246 = vunpack.c.l.b16 %v547
    %v1247 = vunpack.c.h.b16 %v547
    %v1248 = vunpack.c.l.b16 %v548
    %v1249 = vunpack.c.h.b16 %v548
    %v1250 = vunpack.c.l.b16 %v549
    %v1251 = vunpack.c.h.b16 %v549
    %v1252 = vunpack.c.l.b16 %v550
    %v1253 = vunpack.c.h.b16 %v550
    %v1254 = vunpack.c.l.b16 %v551
    %v1255 = vunpack.c.h.b16 %v551
    %v1256 = vunpack.c.l.b16 %v552
    %v1257 = vunpack.c.h.b16 %v552
    %v1258 = vunpack.c.l.b16 %v553
    %v1259 = vunpack.c.h.b16 %v553
    %v1260 = vunpack.c.l.b16 %v554
    %v1261 = vunpack.c.h.b16 %v554
    %v1262 = vunpack.c.l.b16 %v555
    %v1263 = vunpack.c.h.b16 %v555
    %v1264 = vunpack.c.l.b16 %v556
    %v1265 = vunpack.c.h.b16 %v556
    %v1266 = vunpack.c.l.b16 %v557
    %v1267 = vunpack.c.h.b16 %v557
    %v1268 = vunpack.c.l.b16 %v558
    %v1269 = vunpack.c.h.b16 %v558
    %v1270 = vunpack.c.l.b16 %v559
    %v1271 = vunpack.c.h.b16 %v559
    %v1272 = vunpack.c.l.b16 %v560
    %v1273 = vunpack.c.h.b16 %v560
    %v1274 = vunpack.c.l.b16 %v561
    %v1275 = vunpack.c.h.b16 %v561
    %v1276 = vunpack.c.l.b16 %v562
    %v1277 = vunpack.c.h.b16 %v562
    %v1278 = vunpack.c.l.b16 %v563
    %v1279 = vunpack.c.h.b16 %v563
    %v1280 = vunpack.c.l.b16 %v564
    %v1281 = vunpack.c.h.b16 %v564
    %v1282 = vunpack.c.l.b16 %v565
    %v1283 = vunpack.c.h.b16 %v565
    %v1284 = vunpack.c.l.b16 %v566
    %v1285 = vunpack.c.h.b16 %v566
    %v1286 = vunpack.c.l.b16 %v567
    %v1287 = vunpack.c.h.b16 %v567
    %v1288 = vunpack.c.l.b16 %v568
    %v1289 = vunpack.c.h.b16 %v568
    %v1290 = vunpack.c.l.b16 %v569
    %v1291 = vunpack.c.h.b16 %v569
    %v1292 = vunpack.c.l.b16 %v570
    %v1293 = vunpack.c.h.b16 %v570
    %v1294 = vunpack.c.l.b16 %v571
    %v1295 = vunpack.c.h.b16 %v571
    %v1296 = vunpack.c.l.b16 %v572
    %v1297 = vunpack.c.h.b16 %v572
    %v1298 = vunpack.c.l.b16 %v573
    %v1299 = vunpack.c.h.b16 %v573
    %v1300 = vunpack.c.l.b16 %v574
    %v1301 = vunpack.c.h.b16 %v574
    %v1302 = vunpack.c.l.b16 %v575
    %v1303 = vunpack.c.h.b16 %v575
    %v1304 = vunpack.c.l.b16 %v576
    %v1305 = vunpack.c.h.b16 %v576
    %v1306 = vunpack.c.l.b16 %v577
    %v1307 = vunpack.c.h.b16 %v577
    %v1308 = vunpack.c.l.b16 %v578
    %v1309 = vunpack.c.h.b16 %v578
    %v1310 = vunpack.c.l.b16 %v579
    %v1311 = vunpack.c.h.b16 %v579
    %v1312 = vunpack.c.l.b16 %v580
    %v1313 = vunpack.c.h.b16 %v580
    %v1314 = vunpack.c.l.b16 %v581
    %v1315 = vunpack.c.h.b16 %v581
    %v1316 = vunpack.c.l.b16 %v582
    %v1317 = vunpack.c.h.b16 %v582
    %v1318 = vunpack.c.l.b16 %v583
    %v1319 = vunpack.c.h.b16 %v583
    %v1320 = vunpack.c.l.b16 %v584
    %v1321 = vunpack.c.h.b16 %v584
    %v1322 = vunpack.c.l.b16 %v585
    %v1323 = vunpack.c.h.b16 %v585
    %v1324 = vunpack.c.l.b16 %v586
    %v1325 = vunpack.c.h.b16 %v586
    %v1326 = vunpack.c.l.b16 %v587
    %v1327 = vunpack.c.h.b16 %v587
    %v1328 = vunpack.c.l.b16 %v588
    %v1329 = vunpack.c.h.b16 %v588
    %v1330 = vunpack.c.l.b16 %v589
    %v1331 = vunpack.c.h.b16 %v589
    %v1332 = vunpack.c.l.b16 %v590
    %v1333 = vunpack.c.h.b16 %v590
    %v1334 = vunpack.c.l.b16 %v591
    %v1335 = vunpack.c.h.b16 %v591
    %v1336 = vunpack.c.l.b16 %v592
    %v1337 = vunpack.c.h.b16 %v592
    %v1338 = vunpack.c.l.b16 %v593
    %v1339 = vunpack.c.h.b16 %v593
    %v1340 = vunpack.c.l.b16 %v594
    %v1341 = vunpack.c.h.b16 %v594
    %v1342 = vunpack.c.l.b16 %v595
    %v1343 = vunpack.c.h.b16 %v595
    %v1344 = vunpack.c.l.b16 %v596
    %v1345 = vunpack.c.h.b16 %v596
    %v1346 = vunpack.c.l.b16 %v597
    %v1347 = vunpack.c.h.b16 %v597
    %v1348 = vunpack.c.l.b16 %v598
    %v1349 = vunpack.c.h.b16 %v598
    %v1350 = vunpack.c.l.b16 %v599
    %v1351 = vunpack.c.h.b16 %v599
    %v1352 = vunpack.c.l.b16 %v600
    %v1353 = vunpack.c.h.b16 %v600
    %v1354 = vunpack.c.l.b16 %v601
    %v1355 = vunpack.c.h.b16 %v601
    %v1356 = vunpack.c.l.b16 %v602
    %v1357 = vunpack.c.h.b16 %v602
    %v1358 = vunpack.c.l.b16 %v603
    %v1359 = vunpack.c.h.b16 %v603
    %v1360 = vunpack.c.l.b16 %v604
    %v1361 = vunpack.c.h.b16 %v604
    %v1362 = vunpack.c.l.b16 %v605
    %v1363 = vunpack.c.h.b16 %v605
    %v1364 = vunpack.c.l.b16 %v606
    %v1365 = vunpack.c.h.b16 %v606
    %v1366 = vunpack.c.l.b16 %v607
    %v1367 = vunpack.c.h.b16 %v607
    %v1368 = vunpack.c.l.b16 %v608
    %v1369 = vunpack.c.h.b16 %v608
    %v1370 = vunpack.c.l.b16 %v609
    %v1371 = vunpack.c.h.b16 %v609
    %v1372 = vunpack.c.l.b16 %v610
    %v1373 = vunpack.c.h.b16 %v610
    %v1374 = vunpack.c.l.b16 %v611
    %v1375 = vunpack.c.h.b16 %v611
    %v1376 = vunpack.c.l.b16 %v612
    %v1377 = vunpack.c.h.b16 %v612
    %v1378 = vunpack.c.l.b16 %v613
    %v1379 = vunpack.c.h.b16 %v613
    %v1380 = vunpack.c.l.b16 %v614
    %v1381 = vunpack.c.h.b16 %v614
    %v1382 = vunpack.c.l.b16 %v615
    %v1383 = vunpack.c.h.b16 %v615
    %v1384 = vunpack.c.l.b16 %v616
    %v1385 = vunpack.c.h.b16 %v616
    %v1386 = vunpack.c.l.b16 %v617
    %v1387 = vunpack.c.h.b16 %v617
    %v1388 = vunpack.c.l.b16 %v618
    %v1389 = vunpack.c.h.b16 %v618
    %v1390 = vunpack.c.l.b16 %v619
    %v1391 = vunpack.c.h.b16 %v619
    %v1392 = vunpack.c.l.b16 %v620
    %v1393 = vunpack.c.h.b16 %v620
    %v1394 = vunpack.c.l.b16 %v621
    %v1395 = vunpack.c.h.b16 %v621
    %v1396 = vunpack.c.l.b16 %v622
    %v1397 = vunpack.c.h.b16 %v622
    %v1398 = vunpack.c.l.b16 %v623
    %v1399 = vunpack.c.h.b16 %v623
    %v1400 = vunpack.c.l.b16 %v624
    %v1401 = vunpack.c.h.b16 %v624
    %v1402 = vunpack.c.l.b16 %v625
    %v1403 = vunpack.c.h.b16 %v625
    %v1404 = vpack.c.b16 %v896, %v892
    %v1405 = vpack.c.b16 %v897, %v893
    %v1406 = vpack.c.b16 %v898, %v894
    %v1407 = vpack.c.b16 %v899, %v895
    %v1408 = vpack.c.b16 %v904, %v900
    %v1409 = vpack.c.b16 %v905, %v901
    %v1410 = vpack.c.b16 %v906, %v902
    %v1411 = vpack.c.b16 %v907, %v903
    %v1412 = vpack.c.b16 %v912, %v908
    %v1413 = vpack.c.b16 %v913, %v909
    %v1414 = vpack.c.b16 %v914, %v910
    %v1415 = vpack.c.b16 %v915, %v911
    %v1416 = vpack.c.b16 %v920, %v916
    %v1417 = vpack.c.b16 %v921, %v917
    %v1418 = vpack.c.b16 %v922, %v918
    %v1419 = vpack.c.b16 %v923, %v919
    %v1420 = vpack.c.b16 %v928, %v924
    %v1421 = vpack.c.b16 %v929, %v925
    %v1422 = vpack.c.b16 %v930, %v926
    %v1423 = vpack.c.b16 %v931, %v927
    %v1424 = vpack.c.b16 %v936, %v932
    %v1425 = vpack.c.b16 %v937, %v933
    %v1426 = vpack.c.b16 %v938, %v934
    %v1427 = vpack.c.b16 %v939, %v935
    %v1428 = vpack.c.b16 %v944, %v940
    %v1429 = vpack.c.b16 %v945, %v941
    %v1430 = vpack.c.b16 %v946, %v942
    %v1431 = vpack.c.b16 %v947, %v943
    %v1432 = vpack.c.b16 %v952, %v948
    %v1433 = vpack.c.b16 %v953, %v949
    %v1434 = vpack.c.b16 %v954, %v950
    %v1435 = vpack.c.b16 %v955, %v951
    %v1436 = vpack.c.b16 %v960, %v956
    %v1437 = vpack.c.b16 %v961, %v957
    %v1438 = vpack.c.b16 %v962, %v958
    %v1439 = vpack.c.b16 %v963, %v959
    %v1440 = vpack.c.b16 %v968, %v964
    %v1441 = vpack.c.b16 %v969, %v965
    %v1442 = vpack.c.b16 %v970, %v966
    %v1443 = vpack.c.b16 %v971, %v967
    %v1444 = vpack.c.b16 %v976, %v972
    %v1445 = vpack.c.b16 %v977, %v973
    %v1446 = vpack.c.b16 %v978, %v974
    %v1447 = vpack.c.b16 %v979, %v975
    %v1448 = vpack.c.b16 %v984, %v980
    %v1449 = vpack.c.b16 %v985, %v981
    %v1450 = vpack.c.b16 %v986, %v982
    %v1451 = vpack.c.b16 %v987, %v983
    %v1452 = vpack.c.b16 %v992, %v988
    %v1453 = vpack.c.b16 %v993, %v989
    %v1454 = vpack.c.b16 %v994, %v990
    %v1455 = vpack.c.b16 %v995, %v991
    %v1456 = vpack.c.b16 %v1000, %v996
    %v1457 = vpack.c.b16 %v1001, %v997
    %v1458 = vpack.c.b16 %v1002, %v998
    %v1459 = vpack.c.b16 %v1003, %v999
    %v1460 = vpack.c.b16 %v1008, %v1004
    %v1461 = vpack.c.b16 %v1009, %v1005
    %v1462 = vpack.c.b16 %v1010, %v1006
    %v1463 = vpack.c.b16 %v1011, %v1007
    %v1464 = vpack.c.b16 %v1016, %v1012
    %v1465 = vpack.c.b16 %v1017, %v1013
    %v1466 = vpack.c.b16 %v1018, %v1014
    %v1467 = vpack.c.b16 %v1019, %v1015
    %v1468 = vpack.c.b16 %v1024, %v1020
    %v1469 = vpack.c.b16 %v1025, %v1021
    %v1470 = vpack.c.b16 %v1026, %v1022
    %v1471 = vpack.c.b16 %v1027, %v1023
    %v1472 = vpack.c.b16 %v1032, %v1028
    %v1473 = vpack.c.b16 %v1033, %v1029
    %v1474 = vpack.c.b16 %v1034, %v1030
    %v1475 = vpack.c.b16 %v1035, %v1031
    %v1476 = vpack.c.b16 %v1040, %v1036
    %v1477 = vpack.c.b16 %v1041, %v1037
    %v1478 = vpack.c.b16 %v1042, %v1038
    %v1479 = vpack.c.b16 %v1043, %v1039
    %v1480 = vpack.c.b16 %v1048, %v1044
    %v1481 = vpack.c.b16 %v1049, %v1045
    %v1482 = vpack.c.b16 %v1050, %v1046
    %v1483 = vpack.c.b16 %v1051, %v1047
    %v1484 = vpack.c.b16 %v1056, %v1052
    %v1485 = vpack.c.b16 %v1057, %v1053
    %v1486 = vpack.c.b16 %v1058, %v1054
    %v1487 = vpack.c.b16 %v1059, %v1055
    %v1488 = vpack.c.b16 %v1064, %v1060
    %v1489 = vpack.c.b16 %v1065, %v1061
    %v1490 = vpack.c.b16 %v1066, %v1062
    %v1491 = vpack.c.b16 %v1067, %v1063
    %v1492 = vpack.c.b16 %v1072, %v1068
    %v1493 = vpack.c.b16 %v1073, %v1069
    %v1494 = vpack.c.b16 %v1074, %v1070
    %v1495 = vpack.c.b16 %v1075, %v1071
    %v1496 = vpack.c.b16 %v1080, %v1076
    %v1497 = vpack.c.b16 %v1081, %v1077
    %v1498 = vpack.c.b16 %v1082, %v1078
    %v1499 = vpack.c.b16 %v1083, %v1079
    %v1500 = vpack.c.b16 %v1088, %v1084
    %v1501 = vpack.c.b16 %v1089, %v1085
    %v1502 = vpack.c.b16 %v1090, %v1086
    %v1503 = vpack.c.b16 %v1091, %v1087
    %v1504 = vpack.c.b16 %v1096, %v1092
    %v1505 = vpack.c.b16 %v1097, %v1093
    %v1506 = vpack.c.b16 %v1098, %v1094
    %v1507 = vpack.c.b16 %v1099, %v1095
    %v1508 = vpack.c.b16 %v1104, %v1100
    %v1509 = vpack.c.b16 %v1105, %v1101
    %v1510 = vpack.c.b16 %v1106, %v1102
    %v1511 = vpack.c.b16 %v1107, %v1103
    %v1512 = vpack.c.b16 %v1112, %v1108
    %v1513 = vpack.c.b16 %v1113, %v1109
    %v1514 = vpack.c.b16 %v1114, %v1110
    %v1515 = vpack.c.b16 %v1115, %v1111
    %v1516 = vpack.c.b16 %v1120, %v1116
    %v1517 = vpack.c.b16 %v1121, %v1117
    %v1518 = vpack.c.b16 %v1122, %v1118
    %v1519 = vpack.c.b16 %v1123, %v1119
    %v1520 = vpack.c.b16 %v1128, %v1124
    %v1521 = vpack.c.b16 %v1129, %v1125
    %v1522 = vpack.c.b16 %v1130, %v1126
    %v1523 = vpack.c.b16 %v1131, %v1127
    %v1524 = vpack.c.b16 %v1136, %v1132
    %v1525 = vpack.c.b16 %v1137, %v1133
    %v1526 = vpack.c.b16 %v1138, %v1134
    %v1527 = vpack.c.b16 %v1139, %v1135
    %v1528 = vpack.c.b16 %v1144, %v1140
    %v1529 = vpack.c.b16 %v1145, %v1141
    %v1530 = vpack.c.b16 %v1146, %v1142
    %v1531 = vpack.c.b16 %v1147, %v1143
    %v1532 = vpack.c.b16 %v1152, %v1148
    %v1533 = vpack.c.b16 %v1153, %v1149
    %v1534 = vpack.c.b16 %v1154, %v1150
    %v1535 = vpack.c.b16 %v1155, %v1151
    %v1536 = vpack.c.b16 %v1160, %v1156
    %v1537 = vpack.c.b16 %v1161, %v1157
    %v1538 = vpack.c.b16 %v1162, %v1158
    %v1539 = vpack.c.b16 %v1163, %v1159
    %v1540 = vpack.c.b16 %v1168, %v1164
    %v1541 = vpack.c.b16 %v1169, %v1165
    %v1542 = vpack.c.b16 %v1170, %v1166
    %v1543 = vpack.c.b16 %v1171, %v1167
    %v1544 = vpack.c.b16 %v1176, %v1172
    %v1545 = vpack.c.b16 %v1177, %v1173
    %v1546 = vpack.c.b16 %v1178, %v1174
    %v1547 = vpack.c.b16 %v1179, %v1175
    %v1548 = vpack.c.b16 %v1184, %v1180
    %v1549 = vpack.c.b16 %v1185, %v1181
    %v1550 = vpack.c.b16 %v1186, %v1182
    %v1551 = vpack.c.b16 %v1187, %v1183
    %v1552 = vpack.c.b16 %v1192, %v1188
    %v1553 = vpack.c.b16 %v1193, %v1189
    %v1554 = vpack.c.b16 %v1194, %v1190
    %v1555 = vpack.c.b16 %v1195, %v1191
    %v1556 = vpack.c.b16 %v1200, %v1196
    %v1557 = vpack.c.b16 %v1201, %v1197
    %v1558 = vpack.c.b16 %v1202, %v1198
    %v1559 = vpack.c.b16 %v1203, %v1199
    %v1560 = vpack.c.b16 %v1208, %v1204
    %v1561 = vpack.c.b16 %v1209, %v1205
    %v1562 = vpack.c.b16 %v1210, %v1206
    %v1563 = vpack.c.b16 %v1211, %v1207
    %v1564 = vpack.c.b16 %v1216, %v1212
    %v1565 = vpack.c.b16 %v1217, %v1213
    %v1566 = vpack.c.b16 %v1218, %v1214
    %v1567 = vpack.c.b16 %v1219, %v1215
    %v1568 = vpack.c.b16 %v1224, %v1220
    %v1569 = vpack.c.b16 %v1225, %v1221
    %v1570 = vpack.c.b16 %v1226, %v1222
    %v1571 = vpack.c.b16 %v1227, %v1223
    %v1572 = vpack.c.b16 %v1232, %v1228
    %v1573 = vpack.c.b16 %v1233, %v1229
    %v1574 = vpack.c.b16 %v1234, %v1230
    %v1575 = vpack.c.b16 %v1235, %v1231
    %v1576 = vpack.c.b16 %v1240, %v1236
    %v1577 = vpack.c.b16 %v1241, %v1237
    %v1578 = vpack.c.b16 %v1242, %v1238
    %v1579 = vpack.c.b16 %v1243, %v1239
    %v1580 = vpack.c.b16 %v1248, %v1244
    %v1581 = vpack.c.b16 %v1249, %v1245
    %v1582 = vpack.c.b16 %v1250, %v1246
    %v1583 = vpack.c.b16 %v1251, %v1247
    %v1584 = vpack.c.b16 %v1256, %v1252
    %v1585 = vpack.c.b16 %v1257, %v1253
    %v1586 = vpack.c.b16 %v1258, %v1254
    %v1587 = vpack.c.b16 %v1259, %v1255
    %v1588 = vpack.c.b16 %v1264, %v1260
    %v1589 = vpack.c.b16 %v1265, %v1261
    %v1590 = vpack.c.b16 %v1266, %v1262
    %v1591 = vpack.c.b16 %v1267, %v1263
    %v1592 = vpack.c.b16 %v1272, %v1268
    %v1593 = vpack.c.b16 %v1273, %v1269
    %v1594 = vpack.c.b16 %v1274, %v1270
    %v1595 = vpack.c.b16 %v1275, %v1271
    %v1596 = vpack.c.b16 %v1280, %v1276
    %v1597 = vpack.c.b16 %v1281, %v1277
    %v1598 = vpack.c.b16 %v1282, %v1278
    %v1599 = vpack.c.b16 %v1283, %v1279
    %v1600 = vpack.c.b16 %v1288, %v1284
    %v1601 = vpack.c.b16 %v1289, %v1285
    %v1602 = vpack.c.b16 %v1290, %v1286
    %v1603 = vpack.c.b16 %v1291, %v1287
    %v1604 = vpack.c.b16 %v1296, %v1292
    %v1605 = vpack.c.b16 %v1297, %v1293
    %v1606 = vpack.c.b16 %v1298, %v1294
    %v1607 = vpack.c.b16 %v1299, %v1295
    %v1608 = vpack.c.b16 %v1304, %v1300
    %v1609 = vpack.c.b16 %v1305, %v1301
    %v1610 = vpack.c.b16 %v1306, %v1302
    %v1611 = vpack.c.b16 %v1307, %v1303
    %v1612 = vpack.c.b16 %v1312, %v1308
    %v1613 = vpack.c.b16 %v1313, %v1309
    %v1614 = vpack.c.b16 %v1314, %v1310
    %v1615 = vpack.c.b16 %v1315, %v1311
    %v1616 = vpack.c.b16 %v1320, %v1316
    %v1617 = vpack.c.b16 %v1321, %v1317
    %v1618 = vpack.c.b16 %v1322, %v1318
    %v1619 = vpack.c.b16 %v1323, %v1319
    %v1620 = vpack.c.b16 %v1328, %v1324
    %v1621 = vpack.c.b16 %v1329, %v1325
    %v1622 = vpack.c.b16 %v1330, %v1326
    %v1623 = vpack.c.b16 %v1331, %v1327
    %v1624 = vpack.c.b16 %v1336, %v1332
    %v1625 = vpack.c.b16 %v1337, %v1333
    %v1626 = vpack.c.b16 %v1338, %v1334
    %v1627 = vpack.c.b16 %v1339, %v1335
    %v1628 = vpack.c.b16 %v1344, %v1340
    %v1629 = vpack.c.b16 %v1345, %v1341
    %v1630 = vpack.c.b16 %v1346, %v1342
    %v1631 = vpack.c.b16 %v1347, %v1343
    %v1632 = vpack.c.b16 %v1352, %v1348
    %v1633 = vpack.c.b16 %v1353, %v1349
    %v1634 = vpack.c.b16 %v1354, %v1350
    %v1635 = vpack.c.b16 %v1355, %v1351
    %v1636 = vpack.c.b16 %v1360, %v1356
    %v1637 = vpack.c.b16 %v1361, %v1357
    %v1638 = vpack.c.b16 %v1362, %v1358
    %v1639 = vpack.c.b16 %v1363, %v1359
    %v1640 = vpack.c.b16 %v1368, %v1364
    %v1641 = vpack.c.b16 %v1369, %v1365
    %v1642 = vpack.c.b16 %v1370, %v1366
    %v1643 = vpack.c.b16 %v1371, %v1367
    %v1644 = vpack.c.b16 %v1376, %v1372
    %v1645 = vpack.c.b16 %v1377, %v1373
    %v1646 = vpack.c.b16 %v1378, %v1374
    %v1647 = vpack.c.b16 %v1379, %v1375
    %v1648 = vpack.c.b16 %v1384, %v1380
    %v1649 = vpack.c.b16 %v1385, %v1381
    %v1650 = vpack.c.b16 %v1386, %v1382
    %v1651 = vpack.c.b16 %v1387, %v1383
    %v1652 = vpack.c.b16 %v1392, %v1388
    %v1653 = vpack.c.b16 %v1393, %v1389
    %v1654 = vpack.c.b16 %v1394, %v1390
    %v1655 = vpack.c.b16 %v1395, %v1391
    %v1656 = vpack.c.b16 %v1400, %v1396
    %v1657 = vpack.c.b16 %v1401, %v1397
    %v1658 = vpack.c.b16 %v1402, %v1398
    %v1659 = vpack.c.b16 %v1403, %v1399
    %1916 = vmatpush.bf16.msra.mxu0 %v1432
    %1917 = vmatpush.bf16.msra.mxu0 %v1428
    %1918 = vmatpush.bf16.msra.mxu0 %v1424
    %1919 = vmatpush.bf16.msra.mxu0 %v1420
    %1920 = vmatpush.bf16.msra.mxu0 %v1416
    %1921 = vmatpush.bf16.msra.mxu0 %v1412
    %1922 = vmatpush.bf16.msra.mxu0 %v1408
    %1923 = vmatpush.bf16.msra.mxu0 %v1404
    %1924 = vmatmul.bf16.gmra.mxu0 %v362
    %v1925 = vpop.f32.mrf.mxu0
    %v1926 = vadd.f32 %v628, %v1925
    %v1927 = vpop.f32.mrf.mxu0
    %1928 = vdwg.mxu0
    %1929 = vmatpush.bf16.msra.mxu0 %v1464
    %1930 = vmatpush.bf16.msra.mxu0 %v1460
    %1931 = vmatpush.bf16.msra.mxu0 %v1456
    %1932 = vmatpush.bf16.msra.mxu0 %v1452
    %1933 = vmatpush.bf16.msra.mxu0 %v1448
    %1934 = vmatpush.bf16.msra.mxu0 %v1444
    %1935 = vmatpush.bf16.msra.mxu0 %v1440
    %1936 = vmatpush.bf16.msra.mxu0 %v1436
    %1937 = vmatmul.bf16.gmra.mxu0 %v363
    %v1938 = vpop.f32.mrf.mxu0
    %v1939 = vadd.f32 %v1926, %v1938
    %v1940 = vpop.f32.mrf.mxu0
    %1941 = vdwg.mxu0
    %1942 = vmatpush.bf16.msra.mxu0 %v1496
    %1943 = vmatpush.bf16.msra.mxu0 %v1492
    %1944 = vmatpush.bf16.msra.mxu0 %v1488
    %1945 = vmatpush.bf16.msra.mxu0 %v1484
    %1946 = vmatpush.bf16.msra.mxu0 %v1480
    %1947 = vmatpush.bf16.msra.mxu0 %v1476
    %1948 = vmatpush.bf16.msra.mxu0 %v1472
    %1949 = vmatpush.bf16.msra.mxu0 %v1468
    %1950 = vmatmul.bf16.gmra.mxu0 %v364
    %v1951 = vpop.f32.mrf.mxu0
    %v1952 = vadd.f32 %v1939, %v1951
    %v1953 = vpop.f32.mrf.mxu0
    %1954 = vdwg.mxu0
    %1955 = vmatpush.bf16.msra.mxu0 %v1528
    %1956 = vmatpush.bf16.msra.mxu0 %v1524
    %1957 = vmatpush.bf16.msra.mxu0 %v1520
    %1958 = vmatpush.bf16.msra.mxu0 %v1516
    %1959 = vmatpush.bf16.msra.mxu0 %v1512
    %1960 = vmatpush.bf16.msra.mxu0 %v1508
    %1961 = vmatpush.bf16.msra.mxu0 %v1504
    %1962 = vmatpush.bf16.msra.mxu0 %v1500
    %1963 = vmatmul.bf16.gmra.mxu0 %v365
    %v1964 = vpop.f32.mrf.mxu0
    %v1965 = vadd.f32 %v1952, %v1964
    %v1966 = vpop.f32.mrf.mxu0
    %1967 = vdwg.mxu0
    %1968 = vmatpush.bf16.msra.mxu0 %v1560
    %1969 = vmatpush.bf16.msra.mxu0 %v1556
    %1970 = vmatpush.bf16.msra.mxu0 %v1552
    %1971 = vmatpush.bf16.msra.mxu0 %v1548
    %1972 = vmatpush.bf16.msra.mxu0 %v1544
    %1973 = vmatpush.bf16.msra.mxu0 %v1540
    %1974 = vmatpush.bf16.msra.mxu0 %v1536
    %1975 = vmatpush.bf16.msra.mxu0 %v1532
    %1976 = vmatmul.bf16.gmra.mxu0 %v366
    %v1977 = vpop.f32.mrf.mxu0
    %v1978 = vadd.f32 %v1965, %v1977
    %v1979 = vpop.f32.mrf.mxu0
    %1980 = vdwg.mxu0
    %1981 = vmatpush.bf16.msra.mxu0 %v1592
    %1982 = vmatpush.bf16.msra.mxu0 %v1588
    %1983 = vmatpush.bf16.msra.mxu0 %v1584
    %1984 = vmatpush.bf16.msra.mxu0 %v1580
    %1985 = vmatpush.bf16.msra.mxu0 %v1576
    %1986 = vmatpush.bf16.msra.mxu0 %v1572
    %1987 = vmatpush.bf16.msra.mxu0 %v1568
    %1988 = vmatpush.bf16.msra.mxu0 %v1564
    %1989 = vmatmul.bf16.gmra.mxu0 %v367
    %v1990 = vpop.f32.mrf.mxu0
    %v1991 = vadd.f32 %v1978, %v1990
    %v1992 = vpop.f32.mrf.mxu0
    %1993 = vdwg.mxu0
    %1994 = vmatpush.bf16.msra.mxu0 %v1624
    %1995 = vmatpush.bf16.msra.mxu0 %v1620
    %1996 = vmatpush.bf16.msra.mxu0 %v1616
    %1997 = vmatpush.bf16.msra.mxu0 %v1612
    %1998 = vmatpush.bf16.msra.mxu0 %v1608
    %1999 = vmatpush.bf16.msra.mxu0 %v1604
    %2000 = vmatpush.bf16.msra.mxu0 %v1600
    %2001 = vmatpush.bf16.msra.mxu0 %v1596
    %2002 = vmatmul.bf16.gmra.mxu0 %v368
    %v2003 = vpop.f32.mrf.mxu0
    %v2004 = vadd.f32 %v1991, %v2003
    %v2005 = vpop.f32.mrf.mxu0
    %2006 = vdwg.mxu0
    %2007 = vmatpush.bf16.msra.mxu0 %v1656
    %2008 = vmatpush.bf16.msra.mxu0 %v1652
    %2009 = vmatpush.bf16.msra.mxu0 %v1648
    %2010 = vmatpush.bf16.msra.mxu0 %v1644
    %2011 = vmatpush.bf16.msra.mxu0 %v1640
    %2012 = vmatpush.bf16.msra.mxu0 %v1636
    %2013 = vmatpush.bf16.msra.mxu0 %v1632
    %2014 = vmatpush.bf16.msra.mxu0 %v1628
    %2015 = vmatmul.bf16.gmra.mxu0 %v369
    %v2016 = vpop.f32.mrf.mxu0
    %v2017 = vadd.f32 %v2004, %v2016
    %v2018 = vpop.f32.mrf.mxu0
    %2019 = vdwg.mxu0
    %2020 = vmatpush.bf16.msra.mxu0 %v1433
    %2021 = vmatpush.bf16.msra.mxu0 %v1429
    %2022 = vmatpush.bf16.msra.mxu0 %v1425
    %2023 = vmatpush.bf16.msra.mxu0 %v1421
    %2024 = vmatpush.bf16.msra.mxu0 %v1417
    %2025 = vmatpush.bf16.msra.mxu0 %v1413
    %2026 = vmatpush.bf16.msra.mxu0 %v1409
    %2027 = vmatpush.bf16.msra.mxu0 %v1405
    %2028 = vmatmul.bf16.gmra.mxu0 %v362
    %v2029 = vpop.f32.mrf.mxu0
    %v2030 = vadd.f32 %v629, %v2029
    %v2031 = vpop.f32.mrf.mxu0
    %2032 = vdwg.mxu0
    %2033 = vmatpush.bf16.msra.mxu0 %v1465
    %2034 = vmatpush.bf16.msra.mxu0 %v1461
    %2035 = vmatpush.bf16.msra.mxu0 %v1457
    %2036 = vmatpush.bf16.msra.mxu0 %v1453
    %2037 = vmatpush.bf16.msra.mxu0 %v1449
    %2038 = vmatpush.bf16.msra.mxu0 %v1445
    %2039 = vmatpush.bf16.msra.mxu0 %v1441
    %2040 = vmatpush.bf16.msra.mxu0 %v1437
    %2041 = vmatmul.bf16.gmra.mxu0 %v363
    %v2042 = vpop.f32.mrf.mxu0
    %v2043 = vadd.f32 %v2030, %v2042
    %v2044 = vpop.f32.mrf.mxu0
    %2045 = vdwg.mxu0
    %2046 = vmatpush.bf16.msra.mxu0 %v1497
    %2047 = vmatpush.bf16.msra.mxu0 %v1493
    %2048 = vmatpush.bf16.msra.mxu0 %v1489
    %2049 = vmatpush.bf16.msra.mxu0 %v1485
    %2050 = vmatpush.bf16.msra.mxu0 %v1481
    %2051 = vmatpush.bf16.msra.mxu0 %v1477
    %2052 = vmatpush.bf16.msra.mxu0 %v1473
    %2053 = vmatpush.bf16.msra.mxu0 %v1469
    %2054 = vmatmul.bf16.gmra.mxu0 %v364
    %v2055 = vpop.f32.mrf.mxu0
    %v2056 = vadd.f32 %v2043, %v2055
    %v2057 = vpop.f32.mrf.mxu0
    %2058 = vdwg.mxu0
    %2059 = vmatpush.bf16.msra.mxu0 %v1529
    %2060 = vmatpush.bf16.msra.mxu0 %v1525
    %2061 = vmatpush.bf16.msra.mxu0 %v1521
    %2062 = vmatpush.bf16.msra.mxu0 %v1517
    %2063 = vmatpush.bf16.msra.mxu0 %v1513
    %2064 = vmatpush.bf16.msra.mxu0 %v1509
    %2065 = vmatpush.bf16.msra.mxu0 %v1505
    %2066 = vmatpush.bf16.msra.mxu0 %v1501
    %2067 = vmatmul.bf16.gmra.mxu0 %v365
    %v2068 = vpop.f32.mrf.mxu0
    %v2069 = vadd.f32 %v2056, %v2068
    %v2070 = vpop.f32.mrf.mxu0
    %2071 = vdwg.mxu0
    %2072 = vmatpush.bf16.msra.mxu0 %v1561
    %2073 = vmatpush.bf16.msra.mxu0 %v1557
    %2074 = vmatpush.bf16.msra.mxu0 %v1553
    %2075 = vmatpush.bf16.msra.mxu0 %v1549
    %2076 = vmatpush.bf16.msra.mxu0 %v1545
    %2077 = vmatpush.bf16.msra.mxu0 %v1541
    %2078 = vmatpush.bf16.msra.mxu0 %v1537
    %2079 = vmatpush.bf16.msra.mxu0 %v1533
    %2080 = vmatmul.bf16.gmra.mxu0 %v366
    %v2081 = vpop.f32.mrf.mxu0
    %v2082 = vadd.f32 %v2069, %v2081
    %v2083 = vpop.f32.mrf.mxu0
    %2084 = vdwg.mxu0
    %2085 = vmatpush.bf16.msra.mxu0 %v1593
    %2086 = vmatpush.bf16.msra.mxu0 %v1589
    %2087 = vmatpush.bf16.msra.mxu0 %v1585
    %2088 = vmatpush.bf16.msra.mxu0 %v1581
    %2089 = vmatpush.bf16.msra.mxu0 %v1577
    %2090 = vmatpush.bf16.msra.mxu0 %v1573
    %2091 = vmatpush.bf16.msra.mxu0 %v1569
    %2092 = vmatpush.bf16.msra.mxu0 %v1565
    %2093 = vmatmul.bf16.gmra.mxu0 %v367
    %v2094 = vpop.f32.mrf.mxu0
    %v2095 = vadd.f32 %v2082, %v2094
    %v2096 = vpop.f32.mrf.mxu0
    %2097 = vdwg.mxu0
    %2098 = vmatpush.bf16.msra.mxu0 %v1625
    %2099 = vmatpush.bf16.msra.mxu0 %v1621
    %2100 = vmatpush.bf16.msra.mxu0 %v1617
    %2101 = vmatpush.bf16.msra.mxu0 %v1613
    %2102 = vmatpush.bf16.msra.mxu0 %v1609
    %2103 = vmatpush.bf16.msra.mxu0 %v1605
    %2104 = vmatpush.bf16.msra.mxu0 %v1601
    %2105 = vmatpush.bf16.msra.mxu0 %v1597
    %2106 = vmatmul.bf16.gmra.mxu0 %v368
    %v2107 = vpop.f32.mrf.mxu0
    %v2108 = vadd.f32 %v2095, %v2107
    %v2109 = vpop.f32.mrf.mxu0
    %2110 = vdwg.mxu0
    %2111 = vmatpush.bf16.msra.mxu0 %v1657
    %2112 = vmatpush.bf16.msra.mxu0 %v1653
    %2113 = vmatpush.bf16.msra.mxu0 %v1649
    %2114 = vmatpush.bf16.msra.mxu0 %v1645
    %2115 = vmatpush.bf16.msra.mxu0 %v1641
    %2116 = vmatpush.bf16.msra.mxu0 %v1637
    %2117 = vmatpush.bf16.msra.mxu0 %v1633
    %2118 = vmatpush.bf16.msra.mxu0 %v1629
    %2119 = vmatmul.bf16.gmra.mxu0 %v369
    %v2120 = vpop.f32.mrf.mxu0
    %v2121 = vadd.f32 %v2108, %v2120
    %v2122 = vpop.f32.mrf.mxu0
    %2123 = vdwg.mxu0
    %2124 = vmatpush.bf16.msra.mxu0 %v1434
    %2125 = vmatpush.bf16.msra.mxu0 %v1430
    %2126 = vmatpush.bf16.msra.mxu0 %v1426
    %2127 = vmatpush.bf16.msra.mxu0 %v1422
    %2128 = vmatpush.bf16.msra.mxu0 %v1418
    %2129 = vmatpush.bf16.msra.mxu0 %v1414
    %2130 = vmatpush.bf16.msra.mxu0 %v1410
    %2131 = vmatpush.bf16.msra.mxu0 %v1406
    %2132 = vmatmul.bf16.gmra.mxu0 %v362
    %v2133 = vpop.f32.mrf.mxu0
    %v2134 = vadd.f32 %v630, %v2133
    %v2135 = vpop.f32.mrf.mxu0
    %2136 = vdwg.mxu0
    %2137 = vmatpush.bf16.msra.mxu0 %v1466
    %2138 = vmatpush.bf16.msra.mxu0 %v1462
    %2139 = vmatpush.bf16.msra.mxu0 %v1458
    %2140 = vmatpush.bf16.msra.mxu0 %v1454
    %2141 = vmatpush.bf16.msra.mxu0 %v1450
    %2142 = vmatpush.bf16.msra.mxu0 %v1446
    %2143 = vmatpush.bf16.msra.mxu0 %v1442
    %2144 = vmatpush.bf16.msra.mxu0 %v1438
    %2145 = vmatmul.bf16.gmra.mxu0 %v363
    %v2146 = vpop.f32.mrf.mxu0
    %v2147 = vadd.f32 %v2134, %v2146
    %v2148 = vpop.f32.mrf.mxu0
    %2149 = vdwg.mxu0
    %2150 = vmatpush.bf16.msra.mxu0 %v1498
    %2151 = vmatpush.bf16.msra.mxu0 %v1494
    %2152 = vmatpush.bf16.msra.mxu0 %v1490
    %2153 = vmatpush.bf16.msra.mxu0 %v1486
    %2154 = vmatpush.bf16.msra.mxu0 %v1482
    %2155 = vmatpush.bf16.msra.mxu0 %v1478
    %2156 = vmatpush.bf16.msra.mxu0 %v1474
    %2157 = vmatpush.bf16.msra.mxu0 %v1470
    %2158 = vmatmul.bf16.gmra.mxu0 %v364
    %v2159 = vpop.f32.mrf.mxu0
    %v2160 = vadd.f32 %v2147, %v2159
    %v2161 = vpop.f32.mrf.mxu0
    %2162 = vdwg.mxu0
    %2163 = vmatpush.bf16.msra.mxu0 %v1530
    %2164 = vmatpush.bf16.msra.mxu0 %v1526
    %2165 = vmatpush.bf16.msra.mxu0 %v1522
    %2166 = vmatpush.bf16.msra.mxu0 %v1518
    %2167 = vmatpush.bf16.msra.mxu0 %v1514
    %2168 = vmatpush.bf16.msra.mxu0 %v1510
    %2169 = vmatpush.bf16.msra.mxu0 %v1506
    %2170 = vmatpush.bf16.msra.mxu0 %v1502
    %2171 = vmatmul.bf16.gmra.mxu0 %v365
    %v2172 = vpop.f32.mrf.mxu0
    %v2173 = vadd.f32 %v2160, %v2172
    %v2174 = vpop.f32.mrf.mxu0
    %2175 = vdwg.mxu0
    %2176 = vmatpush.bf16.msra.mxu0 %v1562
    %2177 = vmatpush.bf16.msra.mxu0 %v1558
    %2178 = vmatpush.bf16.msra.mxu0 %v1554
    %2179 = vmatpush.bf16.msra.mxu0 %v1550
    %2180 = vmatpush.bf16.msra.mxu0 %v1546
    %2181 = vmatpush.bf16.msra.mxu0 %v1542
    %2182 = vmatpush.bf16.msra.mxu0 %v1538
    %2183 = vmatpush.bf16.msra.mxu0 %v1534
    %2184 = vmatmul.bf16.gmra.mxu0 %v366
    %v2185 = vpop.f32.mrf.mxu0
    %v2186 = vadd.f32 %v2173, %v2185
    %v2187 = vpop.f32.mrf.mxu0
    %2188 = vdwg.mxu0
    %2189 = vmatpush.bf16.msra.mxu0 %v1594
    %2190 = vmatpush.bf16.msra.mxu0 %v1590
    %2191 = vmatpush.bf16.msra.mxu0 %v1586
    %2192 = vmatpush.bf16.msra.mxu0 %v1582
    %2193 = vmatpush.bf16.msra.mxu0 %v1578
    %2194 = vmatpush.bf16.msra.mxu0 %v1574
    %2195 = vmatpush.bf16.msra.mxu0 %v1570
    %2196 = vmatpush.bf16.msra.mxu0 %v1566
    %2197 = vmatmul.bf16.gmra.mxu0 %v367
    %v2198 = vpop.f32.mrf.mxu0
    %v2199 = vadd.f32 %v2186, %v2198
    %v2200 = vpop.f32.mrf.mxu0
    %2201 = vdwg.mxu0
    %2202 = vmatpush.bf16.msra.mxu0 %v1626
    %2203 = vmatpush.bf16.msra.mxu0 %v1622
    %2204 = vmatpush.bf16.msra.mxu0 %v1618
    %2205 = vmatpush.bf16.msra.mxu0 %v1614
    %2206 = vmatpush.bf16.msra.mxu0 %v1610
    %2207 = vmatpush.bf16.msra.mxu0 %v1606
    %2208 = vmatpush.bf16.msra.mxu0 %v1602
    %2209 = vmatpush.bf16.msra.mxu0 %v1598
    %2210 = vmatmul.bf16.gmra.mxu0 %v368
    %v2211 = vpop.f32.mrf.mxu0
    %v2212 = vadd.f32 %v2199, %v2211
    %v2213 = vpop.f32.mrf.mxu0
    %2214 = vdwg.mxu0
    %2215 = vmatpush.bf16.msra.mxu0 %v1658
    %2216 = vmatpush.bf16.msra.mxu0 %v1654
    %2217 = vmatpush.bf16.msra.mxu0 %v1650
    %2218 = vmatpush.bf16.msra.mxu0 %v1646
    %2219 = vmatpush.bf16.msra.mxu0 %v1642
    %2220 = vmatpush.bf16.msra.mxu0 %v1638
    %2221 = vmatpush.bf16.msra.mxu0 %v1634
    %2222 = vmatpush.bf16.msra.mxu0 %v1630
    %2223 = vmatmul.bf16.gmra.mxu0 %v369
    %v2224 = vpop.f32.mrf.mxu0
    %v2225 = vadd.f32 %v2212, %v2224
    %v2226 = vpop.f32.mrf.mxu0
    %2227 = vdwg.mxu0
    %2228 = vmatpush.bf16.msra.mxu0 %v1435
    %2229 = vmatpush.bf16.msra.mxu0 %v1431
    %2230 = vmatpush.bf16.msra.mxu0 %v1427
    %2231 = vmatpush.bf16.msra.mxu0 %v1423
    %2232 = vmatpush.bf16.msra.mxu0 %v1419
    %2233 = vmatpush.bf16.msra.mxu0 %v1415
    %2234 = vmatpush.bf16.msra.mxu0 %v1411
    %2235 = vmatpush.bf16.msra.mxu0 %v1407
    %2236 = vmatmul.bf16.gmra.mxu0 %v362
    %v2237 = vpop.f32.mrf.mxu0
    %v2238 = vadd.f32 %v631, %v2237
    %v2239 = vpop.f32.mrf.mxu0
    %2240 = vdwg.mxu0
    %2241 = vmatpush.bf16.msra.mxu0 %v1467
    %2242 = vmatpush.bf16.msra.mxu0 %v1463
    %2243 = vmatpush.bf16.msra.mxu0 %v1459
    %2244 = vmatpush.bf16.msra.mxu0 %v1455
    %2245 = vmatpush.bf16.msra.mxu0 %v1451
    %2246 = vmatpush.bf16.msra.mxu0 %v1447
    %2247 = vmatpush.bf16.msra.mxu0 %v1443
    %2248 = vmatpush.bf16.msra.mxu0 %v1439
    %2249 = vmatmul.bf16.gmra.mxu0 %v363
    %v2250 = vpop.f32.mrf.mxu0
    %v2251 = vadd.f32 %v2238, %v2250
    %v2252 = vpop.f32.mrf.mxu0
    %2253 = vdwg.mxu0
    %2254 = vmatpush.bf16.msra.mxu0 %v1499
    %2255 = vmatpush.bf16.msra.mxu0 %v1495
    %2256 = vmatpush.bf16.msra.mxu0 %v1491
    %2257 = vmatpush.bf16.msra.mxu0 %v1487
    %2258 = vmatpush.bf16.msra.mxu0 %v1483
    %2259 = vmatpush.bf16.msra.mxu0 %v1479
    %2260 = vmatpush.bf16.msra.mxu0 %v1475
    %2261 = vmatpush.bf16.msra.mxu0 %v1471
    %2262 = vmatmul.bf16.gmra.mxu0 %v364
    %v2263 = vpop.f32.mrf.mxu0
    %v2264 = vadd.f32 %v2251, %v2263
    %v2265 = vpop.f32.mrf.mxu0
    %2266 = vdwg.mxu0
    %2267 = vmatpush.bf16.msra.mxu0 %v1531
    %2268 = vmatpush.bf16.msra.mxu0 %v1527
    %2269 = vmatpush.bf16.msra.mxu0 %v1523
    %2270 = vmatpush.bf16.msra.mxu0 %v1519
    %2271 = vmatpush.bf16.msra.mxu0 %v1515
    %2272 = vmatpush.bf16.msra.mxu0 %v1511
    %2273 = vmatpush.bf16.msra.mxu0 %v1507
    %2274 = vmatpush.bf16.msra.mxu0 %v1503
    %2275 = vmatmul.bf16.gmra.mxu0 %v365
    %v2276 = vpop.f32.mrf.mxu0
    %v2277 = vadd.f32 %v2264, %v2276
    %v2278 = vpop.f32.mrf.mxu0
    %2279 = vdwg.mxu0
    %2280 = vmatpush.bf16.msra.mxu0 %v1563
    %2281 = vmatpush.bf16.msra.mxu0 %v1559
    %2282 = vmatpush.bf16.msra.mxu0 %v1555
    %2283 = vmatpush.bf16.msra.mxu0 %v1551
    %2284 = vmatpush.bf16.msra.mxu0 %v1547
    %2285 = vmatpush.bf16.msra.mxu0 %v1543
    %2286 = vmatpush.bf16.msra.mxu0 %v1539
    %2287 = vmatpush.bf16.msra.mxu0 %v1535
    %2288 = vmatmul.bf16.gmra.mxu0 %v366
    %v2289 = vpop.f32.mrf.mxu0
    %v2290 = vadd.f32 %v2277, %v2289
    %v2291 = vpop.f32.mrf.mxu0
    %2292 = vdwg.mxu0
    %2293 = vmatpush.bf16.msra.mxu0 %v1595
    %2294 = vmatpush.bf16.msra.mxu0 %v1591
    %2295 = vmatpush.bf16.msra.mxu0 %v1587
    %2296 = vmatpush.bf16.msra.mxu0 %v1583
    %2297 = vmatpush.bf16.msra.mxu0 %v1579
    %2298 = vmatpush.bf16.msra.mxu0 %v1575
    %2299 = vmatpush.bf16.msra.mxu0 %v1571
    %2300 = vmatpush.bf16.msra.mxu0 %v1567
    %2301 = vmatmul.bf16.gmra.mxu0 %v367
    %v2302 = vpop.f32.mrf.mxu0
    %v2303 = vadd.f32 %v2290, %v2302
    %v2304 = vpop.f32.mrf.mxu0
    %2305 = vdwg.mxu0
    %2306 = vmatpush.bf16.msra.mxu0 %v1627
    %2307 = vmatpush.bf16.msra.mxu0 %v1623
    %2308 = vmatpush.bf16.msra.mxu0 %v1619
    %2309 = vmatpush.bf16.msra.mxu0 %v1615
    %2310 = vmatpush.bf16.msra.mxu0 %v1611
    %2311 = vmatpush.bf16.msra.mxu0 %v1607
    %2312 = vmatpush.bf16.msra.mxu0 %v1603
    %2313 = vmatpush.bf16.msra.mxu0 %v1599
    %2314 = vmatmul.bf16.gmra.mxu0 %v368
    %v2315 = vpop.f32.mrf.mxu0
    %v2316 = vadd.f32 %v2303, %v2315
    %v2317 = vpop.f32.mrf.mxu0
    %2318 = vdwg.mxu0
    %2319 = vmatpush.bf16.msra.mxu0 %v1659
    %2320 = vmatpush.bf16.msra.mxu0 %v1655
    %2321 = vmatpush.bf16.msra.mxu0 %v1651
    %2322 = vmatpush.bf16.msra.mxu0 %v1647
    %2323 = vmatpush.bf16.msra.mxu0 %v1643
    %2324 = vmatpush.bf16.msra.mxu0 %v1639
    %2325 = vmatpush.bf16.msra.mxu0 %v1635
    %2326 = vmatpush.bf16.msra.mxu0 %v1631
    %2327 = vmatmul.bf16.gmra.mxu0 %v369
    %v2328 = vpop.f32.mrf.mxu0
    %v2329 = vadd.f32 %v2316, %v2328
    %v2330 = vpop.f32.mrf.mxu0
    %2331 = vdwg.mxu0
    %v2332 = vmax.f32 %v2017, 0.0
    %v2333 = vmax.f32 %v2121, 0.0
    %v2334 = vmax.f32 %v2225, 0.0
    %v2335 = vmax.f32 %v2329, 0.0
    %v2336 = vpack.c.bf16 %v2332, %v2332
    %v2337 = vpack.c.bf16 %v2333, %v2333
    %v2338 = vpack.c.bf16 %v2334, %v2334
    %v2339 = vpack.c.bf16 %v2335, %v2335
    %v2340 = vld [vmem:[%s5] sm:$0xff]
    %v2341 = vld [vmem:[%s5 + $0x8] sm:$0xff]
    %v2342 = vld [vmem:[%s5 + $0x10] sm:$0xff]
    %v2343 = vld [vmem:[%s5 + $0x18] sm:$0xff]
    %v2344 = vld [vmem:[%s5 + $0x20] sm:$0xff]
    %v2345 = vld [vmem:[%s5 + $0x28] sm:$0xff]
    %v2346 = vld [vmem:[%s5 + $0x30] sm:$0xff]
    %v2347 = vld [vmem:[%s5 + $0x38] sm:$0xff]
    %v2348 = vld [vmem:[%s5 + $0x40] sm:$0xff]
    %v2349 = vld [vmem:[%s5 + $0x48] sm:$0xff]
    %v2350 = vld [vmem:[%s5 + $0x50] sm:$0xff]
    %v2351 = vld [vmem:[%s5 + $0x58] sm:$0xff]
    %v2352 = vld [vmem:[%s5 + $0x60] sm:$0xff]
    %v2353 = vld [vmem:[%s5 + $0x68] sm:$0xff]
    %v2354 = vld [vmem:[%s5 + $0x70] sm:$0xff]
    %v2355 = vld [vmem:[%s5 + $0x78] sm:$0xff]
    %v2356 = vld [vmem:[%s5 + $0x80] sm:$0xff]
    %v2357 = vld [vmem:[%s5 + $0x88] sm:$0xff]
    %v2358 = vld [vmem:[%s5 + $0x90] sm:$0xff]
    %v2359 = vld [vmem:[%s5 + $0x98] sm:$0xff]
    %v2360 = vld [vmem:[%s5 + $0xa0] sm:$0xff]
    %v2361 = vld [vmem:[%s5 + $0xa8] sm:$0xff]
    %v2362 = vld [vmem:[%s5 + $0xb0] sm:$0xff]
    %v2363 = vld [vmem:[%s5 + $0xb8] sm:$0xff]
    %v2364 = vld [vmem:[%s5 + $0xc0] sm:$0xff]
    %v2365 = vld [vmem:[%s5 + $0xc8] sm:$0xff]
    %v2366 = vld [vmem:[%s5 + $0xd0] sm:$0xff]
    %v2367 = vld [vmem:[%s5 + $0xd8] sm:$0xff]
    %v2368 = vld [vmem:[%s5 + $0xe0] sm:$0xff]
    %v2369 = vld [vmem:[%s5 + $0xe8] sm:$0xff]
    %v2370 = vld [vmem:[%s5 + $0xf0] sm:$0xff]
    %v2371 = vld [vmem:[%s5 + $0xf8] sm:$0xff]
    %v2372 = vld [vmem:[%s5 + $0x100] sm:$0xff]
    %v2373 = vld [vmem:[%s5 + $0x108] sm:$0xff]
    %v2374 = vld [vmem:[%s5 + $0x110] sm:$0xff]
    %v2375 = vld [vmem:[%s5 + $0x118] sm:$0xff]
    %v2376 = vld [vmem:[%s5 + $0x120] sm:$0xff]
    %v2377 = vld [vmem:[%s5 + $0x128] sm:$0xff]
    %v2378 = vld [vmem:[%s5 + $0x130] sm:$0xff]
    %v2379 = vld [vmem:[%s5 + $0x138] sm:$0xff]
    %v2380 = vld [vmem:[%s5 + $0x140] sm:$0xff]
    %v2381 = vld [vmem:[%s5 + $0x148] sm:$0xff]
    %v2382 = vld [vmem:[%s5 + $0x150] sm:$0xff]
    %v2383 = vld [vmem:[%s5 + $0x158] sm:$0xff]
    %v2384 = vld [vmem:[%s5 + $0x160] sm:$0xff]
    %v2385 = vld [vmem:[%s5 + $0x168] sm:$0xff]
    %v2386 = vld [vmem:[%s5 + $0x170] sm:$0xff]
    %v2387 = vld [vmem:[%s5 + $0x178] sm:$0xff]
    %v2388 = vld [vmem:[%s5 + $0x180] sm:$0xff]
    %v2389 = vld [vmem:[%s5 + $0x188] sm:$0xff]
    %v2390 = vld [vmem:[%s5 + $0x190] sm:$0xff]
    %v2391 = vld [vmem:[%s5 + $0x198] sm:$0xff]
    %v2392 = vld [vmem:[%s5 + $0x1a0] sm:$0xff]
    %v2393 = vld [vmem:[%s5 + $0x1a8] sm:$0xff]
    %v2394 = vld [vmem:[%s5 + $0x1b0] sm:$0xff]
    %v2395 = vld [vmem:[%s5 + $0x1b8] sm:$0xff]
    %v2396 = vld [vmem:[%s5 + $0x1c0] sm:$0xff]
    %v2397 = vld [vmem:[%s5 + $0x1c8] sm:$0xff]
    %v2398 = vld [vmem:[%s5 + $0x1d0] sm:$0xff]
    %v2399 = vld [vmem:[%s5 + $0x1d8] sm:$0xff]
    %v2400 = vld [vmem:[%s5 + $0x1e0] sm:$0xff]
    %v2401 = vld [vmem:[%s5 + $0x1e8] sm:$0xff]
    %v2402 = vld [vmem:[%s5 + $0x1f0] sm:$0xff]
    %v2403 = vld [vmem:[%s5 + $0x1f8] sm:$0xff]
    %v2404 = vld [vmem:[%s6] sm:$0x3]
    %v2406 = vperm.slane %v2404, 0
    %v2407 = vperm.slane %v2404, 1
    %v2474 = vunpack.c.l.b16 %v2340
    %v2475 = vunpack.c.h.b16 %v2340
    %v2476 = vunpack.c.l.b16 %v2341
    %v2477 = vunpack.c.h.b16 %v2341
    %v2478 = vunpack.c.l.b16 %v2342
    %v2479 = vunpack.c.h.b16 %v2342
    %v2480 = vunpack.c.l.b16 %v2343
    %v2481 = vunpack.c.h.b16 %v2343
    %v2482 = vunpack.c.l.b16 %v2344
    %v2483 = vunpack.c.h.b16 %v2344
    %v2484 = vunpack.c.l.b16 %v2345
    %v2485 = vunpack.c.h.b16 %v2345
    %v2486 = vunpack.c.l.b16 %v2346
    %v2487 = vunpack.c.h.b16 %v2346
    %v2488 = vunpack.c.l.b16 %v2347
    %v2489 = vunpack.c.h.b16 %v2347
    %v2490 = vunpack.c.l.b16 %v2348
    %v2491 = vunpack.c.h.b16 %v2348
    %v2492 = vunpack.c.l.b16 %v2349
    %v2493 = vunpack.c.h.b16 %v2349
    %v2494 = vunpack.c.l.b16 %v2350
    %v2495 = vunpack.c.h.b16 %v2350
    %v2496 = vunpack.c.l.b16 %v2351
    %v2497 = vunpack.c.h.b16 %v2351
    %v2498 = vunpack.c.l.b16 %v2352
    %v2499 = vunpack.c.h.b16 %v2352
    %v2500 = vunpack.c.l.b16 %v2353
    %v2501 = vunpack.c.h.b16 %v2353
    %v2502 = vunpack.c.l.b16 %v2354
    %v2503 = vunpack.c.h.b16 %v2354
    %v2504 = vunpack.c.l.b16 %v2355
    %v2505 = vunpack.c.h.b16 %v2355
    %v2506 = vunpack.c.l.b16 %v2356
    %v2507 = vunpack.c.h.b16 %v2356
    %v2508 = vunpack.c.l.b16 %v2357
    %v2509 = vunpack.c.h.b16 %v2357
    %v2510 = vunpack.c.l.b16 %v2358
    %v2511 = vunpack.c.h.b16 %v2358
    %v2512 = vunpack.c.l.b16 %v2359
    %v2513 = vunpack.c.h.b16 %v2359
    %v2514 = vunpack.c.l.b16 %v2360
    %v2515 = vunpack.c.h.b16 %v2360
    %v2516 = vunpack.c.l.b16 %v2361
    %v2517 = vunpack.c.h.b16 %v2361
    %v2518 = vunpack.c.l.b16 %v2362
    %v2519 = vunpack.c.h.b16 %v2362
    %v2520 = vunpack.c.l.b16 %v2363
    %v2521 = vunpack.c.h.b16 %v2363
    %v2522 = vunpack.c.l.b16 %v2364
    %v2523 = vunpack.c.h.b16 %v2364
    %v2524 = vunpack.c.l.b16 %v2365
    %v2525 = vunpack.c.h.b16 %v2365
    %v2526 = vunpack.c.l.b16 %v2366
    %v2527 = vunpack.c.h.b16 %v2366
    %v2528 = vunpack.c.l.b16 %v2367
    %v2529 = vunpack.c.h.b16 %v2367
    %v2530 = vunpack.c.l.b16 %v2368
    %v2531 = vunpack.c.h.b16 %v2368
    %v2532 = vunpack.c.l.b16 %v2369
    %v2533 = vunpack.c.h.b16 %v2369
    %v2534 = vunpack.c.l.b16 %v2370
    %v2535 = vunpack.c.h.b16 %v2370
    %v2536 = vunpack.c.l.b16 %v2371
    %v2537 = vunpack.c.h.b16 %v2371
    %v2538 = vunpack.c.l.b16 %v2372
    %v2539 = vunpack.c.h.b16 %v2372
    %v2540 = vunpack.c.l.b16 %v2373
    %v2541 = vunpack.c.h.b16 %v2373
    %v2542 = vunpack.c.l.b16 %v2374
    %v2543 = vunpack.c.h.b16 %v2374
    %v2544 = vunpack.c.l.b16 %v2375
    %v2545 = vunpack.c.h.b16 %v2375
    %v2546 = vunpack.c.l.b16 %v2376
    %v2547 = vunpack.c.h.b16 %v2376
    %v2548 = vunpack.c.l.b16 %v2377
    %v2549 = vunpack.c.h.b16 %v2377
    %v2550 = vunpack.c.l.b16 %v2378
    %v2551 = vunpack.c.h.b16 %v2378
    %v2552 = vunpack.c.l.b16 %v2379
    %v2553 = vunpack.c.h.b16 %v2379
    %v2554 = vunpack.c.l.b16 %v2380
    %v2555 = vunpack.c.h.b16 %v2380
    %v2556 = vunpack.c.l.b16 %v2381
    %v2557 = vunpack.c.h.b16 %v2381
    %v2558 = vunpack.c.l.b16 %v2382
    %v2559 = vunpack.c.h.b16 %v2382
    %v2560 = vunpack.c.l.b16 %v2383
    %v2561 = vunpack.c.h.b16 %v2383
    %v2562 = vunpack.c.l.b16 %v2384
    %v2563 = vunpack.c.h.b16 %v2384
    %v2564 = vunpack.c.l.b16 %v2385
    %v2565 = vunpack.c.h.b16 %v2385
    %v2566 = vunpack.c.l.b16 %v2386
    %v2567 = vunpack.c.h.b16 %v2386
    %v2568 = vunpack.c.l.b16 %v2387
    %v2569 = vunpack.c.h.b16 %v2387
    %v2570 = vunpack.c.l.b16 %v2388
    %v2571 = vunpack.c.h.b16 %v2388
    %v2572 = vunpack.c.l.b16 %v2389
    %v2573 = vunpack.c.h.b16 %v2389
    %v2574 = vunpack.c.l.b16 %v2390
    %v2575 = vunpack.c.h.b16 %v2390
    %v2576 = vunpack.c.l.b16 %v2391
    %v2577 = vunpack.c.h.b16 %v2391
    %v2578 = vunpack.c.l.b16 %v2392
    %v2579 = vunpack.c.h.b16 %v2392
    %v2580 = vunpack.c.l.b16 %v2393
    %v2581 = vunpack.c.h.b16 %v2393
    %v2582 = vunpack.c.l.b16 %v2394
    %v2583 = vunpack.c.h.b16 %v2394
    %v2584 = vunpack.c.l.b16 %v2395
    %v2585 = vunpack.c.h.b16 %v2395
    %v2586 = vunpack.c.l.b16 %v2396
    %v2587 = vunpack.c.h.b16 %v2396
    %v2588 = vunpack.c.l.b16 %v2397
    %v2589 = vunpack.c.h.b16 %v2397
    %v2590 = vunpack.c.l.b16 %v2398
    %v2591 = vunpack.c.h.b16 %v2398
    %v2592 = vunpack.c.l.b16 %v2399
    %v2593 = vunpack.c.h.b16 %v2399
    %v2594 = vunpack.c.l.b16 %v2400
    %v2595 = vunpack.c.h.b16 %v2400
    %v2596 = vunpack.c.l.b16 %v2401
    %v2597 = vunpack.c.h.b16 %v2401
    %v2598 = vunpack.c.l.b16 %v2402
    %v2599 = vunpack.c.h.b16 %v2402
    %v2600 = vunpack.c.l.b16 %v2403
    %v2601 = vunpack.c.h.b16 %v2403
    %v2602 = vpack.c.b16 %v2476, %v2474
    %v2603 = vpack.c.b16 %v2477, %v2475
    %v2604 = vpack.c.b16 %v2480, %v2478
    %v2605 = vpack.c.b16 %v2481, %v2479
    %v2606 = vpack.c.b16 %v2484, %v2482
    %v2607 = vpack.c.b16 %v2485, %v2483
    %v2608 = vpack.c.b16 %v2488, %v2486
    %v2609 = vpack.c.b16 %v2489, %v2487
    %v2610 = vpack.c.b16 %v2492, %v2490
    %v2611 = vpack.c.b16 %v2493, %v2491
    %v2612 = vpack.c.b16 %v2496, %v2494
    %v2613 = vpack.c.b16 %v2497, %v2495
    %v2614 = vpack.c.b16 %v2500, %v2498
    %v2615 = vpack.c.b16 %v2501, %v2499
    %v2616 = vpack.c.b16 %v2504, %v2502
    %v2617 = vpack.c.b16 %v2505, %v2503
    %v2618 = vpack.c.b16 %v2508, %v2506
    %v2619 = vpack.c.b16 %v2509, %v2507
    %v2620 = vpack.c.b16 %v2512, %v2510
    %v2621 = vpack.c.b16 %v2513, %v2511
    %v2622 = vpack.c.b16 %v2516, %v2514
    %v2623 = vpack.c.b16 %v2517, %v2515
    %v2624 = vpack.c.b16 %v2520, %v2518
    %v2625 = vpack.c.b16 %v2521, %v2519
    %v2626 = vpack.c.b16 %v2524, %v2522
    %v2627 = vpack.c.b16 %v2525, %v2523
    %v2628 = vpack.c.b16 %v2528, %v2526
    %v2629 = vpack.c.b16 %v2529, %v2527
    %v2630 = vpack.c.b16 %v2532, %v2530
    %v2631 = vpack.c.b16 %v2533, %v2531
    %v2632 = vpack.c.b16 %v2536, %v2534
    %v2633 = vpack.c.b16 %v2537, %v2535
    %v2634 = vpack.c.b16 %v2540, %v2538
    %v2635 = vpack.c.b16 %v2541, %v2539
    %v2636 = vpack.c.b16 %v2544, %v2542
    %v2637 = vpack.c.b16 %v2545, %v2543
    %v2638 = vpack.c.b16 %v2548, %v2546
    %v2639 = vpack.c.b16 %v2549, %v2547
    %v2640 = vpack.c.b16 %v2552, %v2550
    %v2641 = vpack.c.b16 %v2553, %v2551
    %v2642 = vpack.c.b16 %v2556, %v2554
    %v2643 = vpack.c.b16 %v2557, %v2555
    %v2644 = vpack.c.b16 %v2560, %v2558
    %v2645 = vpack.c.b16 %v2561, %v2559
    %v2646 = vpack.c.b16 %v2564, %v2562
    %v2647 = vpack.c.b16 %v2565, %v2563
    %v2648 = vpack.c.b16 %v2568, %v2566
    %v2649 = vpack.c.b16 %v2569, %v2567
    %v2650 = vpack.c.b16 %v2572, %v2570
    %v2651 = vpack.c.b16 %v2573, %v2571
    %v2652 = vpack.c.b16 %v2576, %v2574
    %v2653 = vpack.c.b16 %v2577, %v2575
    %v2654 = vpack.c.b16 %v2580, %v2578
    %v2655 = vpack.c.b16 %v2581, %v2579
    %v2656 = vpack.c.b16 %v2584, %v2582
    %v2657 = vpack.c.b16 %v2585, %v2583
    %v2658 = vpack.c.b16 %v2588, %v2586
    %v2659 = vpack.c.b16 %v2589, %v2587
    %v2660 = vpack.c.b16 %v2592, %v2590
    %v2661 = vpack.c.b16 %v2593, %v2591
    %v2662 = vpack.c.b16 %v2596, %v2594
    %v2663 = vpack.c.b16 %v2597, %v2595
    %v2664 = vpack.c.b16 %v2600, %v2598
    %v2665 = vpack.c.b16 %v2601, %v2599
    %2730 = vmatpush.bf16.msra.mxu0 %v2616
    %2731 = vmatpush.bf16.msra.mxu0 %v2614
    %2732 = vmatpush.bf16.msra.mxu0 %v2612
    %2733 = vmatpush.bf16.msra.mxu0 %v2610
    %2734 = vmatpush.bf16.msra.mxu0 %v2608
    %2735 = vmatpush.bf16.msra.mxu0 %v2606
    %2736 = vmatpush.bf16.msra.mxu0 %v2604
    %2737 = vmatpush.bf16.msra.mxu0 %v2602
    %2738 = vmatmul.bf16.gmra.mxu0 %v2336
    %v2739 = vpop.f32.mrf.mxu0
    %v2740 = vadd.f32 %v2406, %v2739
    %v2741 = vpop.f32.mrf.mxu0
    %2742 = vdwg.mxu0
    %2743 = vmatpush.bf16.msra.mxu0 %v2632
    %2744 = vmatpush.bf16.msra.mxu0 %v2630
    %2745 = vmatpush.bf16.msra.mxu0 %v2628
    %2746 = vmatpush.bf16.msra.mxu0 %v2626
    %2747 = vmatpush.bf16.msra.mxu0 %v2624
    %2748 = vmatpush.bf16.msra.mxu0 %v2622
    %2749 = vmatpush.bf16.msra.mxu0 %v2620
    %2750 = vmatpush.bf16.msra.mxu0 %v2618
    %2751 = vmatmul.bf16.gmra.mxu0 %v2337
    %v2752 = vpop.f32.mrf.mxu0
    %v2753 = vadd.f32 %v2740, %v2752
    %v2754 = vpop.f32.mrf.mxu0
    %2755 = vdwg.mxu0
    %2756 = vmatpush.bf16.msra.mxu0 %v2648
    %2757 = vmatpush.bf16.msra.mxu0 %v2646
    %2758 = vmatpush.bf16.msra.mxu0 %v2644
    %2759 = vmatpush.bf16.msra.mxu0 %v2642
    %2760 = vmatpush.bf16.msra.mxu0 %v2640
    %2761 = vmatpush.bf16.msra.mxu0 %v2638
    %2762 = vmatpush.bf16.msra.mxu0 %v2636
    %2763 = vmatpush.bf16.msra.mxu0 %v2634
    %2764 = vmatmul.bf16.gmra.mxu0 %v2338
    %v2765 = vpop.f32.mrf.mxu0
    %v2766 = vadd.f32 %v2753, %v2765
    %v2767 = vpop.f32.mrf.mxu0
    %2768 = vdwg.mxu0
    %2769 = vmatpush.bf16.msra.mxu0 %v2664
    %2770 = vmatpush.bf16.msra.mxu0 %v2662
    %2771 = vmatpush.bf16.msra.mxu0 %v2660
    %2772 = vmatpush.bf16.msra.mxu0 %v2658
    %2773 = vmatpush.bf16.msra.mxu0 %v2656
    %2774 = vmatpush.bf16.msra.mxu0 %v2654
    %2775 = vmatpush.bf16.msra.mxu0 %v2652
    %2776 = vmatpush.bf16.msra.mxu0 %v2650
    %2777 = vmatmul.bf16.gmra.mxu0 %v2339
    %v2778 = vpop.f32.mrf.mxu0
    %v2779 = vadd.f32 %v2766, %v2778
    %v2780 = vpop.f32.mrf.mxu0
    %2781 = vdwg.mxu0
    %2782 = vmatpush.bf16.msra.mxu0 %v2617
    %2783 = vmatpush.bf16.msra.mxu0 %v2615
    %2784 = vmatpush.bf16.msra.mxu0 %v2613
    %2785 = vmatpush.bf16.msra.mxu0 %v2611
    %2786 = vmatpush.bf16.msra.mxu0 %v2609
    %2787 = vmatpush.bf16.msra.mxu0 %v2607
    %2788 = vmatpush.bf16.msra.mxu0 %v2605
    %2789 = vmatpush.bf16.msra.mxu0 %v2603
    %2790 = vmatmul.bf16.gmra.mxu0 %v2336
    %v2791 = vpop.f32.mrf.mxu0
    %v2792 = vadd.f32 %v2407, %v2791
    %v2793 = vpop.f32.mrf.mxu0
    %2794 = vdwg.mxu0
    %2795 = vmatpush.bf16.msra.mxu0 %v2633
    %2796 = vmatpush.bf16.msra.mxu0 %v2631
    %2797 = vmatpush.bf16.msra.mxu0 %v2629
    %2798 = vmatpush.bf16.msra.mxu0 %v2627
    %2799 = vmatpush.bf16.msra.mxu0 %v2625
    %2800 = vmatpush.bf16.msra.mxu0 %v2623
    %2801 = vmatpush.bf16.msra.mxu0 %v2621
    %2802 = vmatpush.bf16.msra.mxu0 %v2619
    %2803 = vmatmul.bf16.gmra.mxu0 %v2337
    %v2804 = vpop.f32.mrf.mxu0
    %v2805 = vadd.f32 %v2792, %v2804
    %v2806 = vpop.f32.mrf.mxu0
    %2807 = vdwg.mxu0
    %2808 = vmatpush.bf16.msra.mxu0 %v2649
    %2809 = vmatpush.bf16.msra.mxu0 %v2647
    %2810 = vmatpush.bf16.msra.mxu0 %v2645
    %2811 = vmatpush.bf16.msra.mxu0 %v2643
    %2812 = vmatpush.bf16.msra.mxu0 %v2641
    %2813 = vmatpush.bf16.msra.mxu0 %v2639
    %2814 = vmatpush.bf16.msra.mxu0 %v2637
    %2815 = vmatpush.bf16.msra.mxu0 %v2635
    %2816 = vmatmul.bf16.gmra.mxu0 %v2338
    %v2817 = vpop.f32.mrf.mxu0
    %v2818 = vadd.f32 %v2805, %v2817
    %v2819 = vpop.f32.mrf.mxu0
    %2820 = vdwg.mxu0
    %2821 = vmatpush.bf16.msra.mxu0 %v2665
    %2822 = vmatpush.bf16.msra.mxu0 %v2663
    %2823 = vmatpush.bf16.msra.mxu0 %v2661
    %2824 = vmatpush.bf16.msra.mxu0 %v2659
    %2825 = vmatpush.bf16.msra.mxu0 %v2657
    %2826 = vmatpush.bf16.msra.mxu0 %v2655
    %2827 = vmatpush.bf16.msra.mxu0 %v2653
    %2828 = vmatpush.bf16.msra.mxu0 %v2651
    %2829 = vmatmul.bf16.gmra.mxu0 %v2339
    %v2830 = vpop.f32.mrf.mxu0
    %v2831 = vadd.f32 %v2818, %v2830
    %v2832 = vpop.f32.mrf.mxu0
    %2833 = vdwg.mxu0
    %v2834 = vmax.f32 %v2779, 0.0
    %v2835 = vmax.f32 %v2831, 0.0
    %v2836 = vpack.c.bf16 %v2834, %v2834
    %v2837 = vpack.c.bf16 %v2835, %v2835
    %v2838 = vld [vmem:[%s7] sm:$0xf]
    %v2839 = vld [vmem:[%s7 + $0x4] sm:$0xf]
    %v2840 = vld [vmem:[%s7 + $0x8] sm:$0xf]
    %v2841 = vld [vmem:[%s7 + $0xc] sm:$0xf]
    %v2842 = vld [vmem:[%s7 + $0x10] sm:$0xf]
    %v2843 = vld [vmem:[%s7 + $0x14] sm:$0xf]
    %v2844 = vld [vmem:[%s7 + $0x18] sm:$0xf]
    %v2845 = vld [vmem:[%s7 + $0x1c] sm:$0xf]
    %v2846 = vld [vmem:[%s7 + $0x20] sm:$0xf]
    %v2847 = vld [vmem:[%s7 + $0x24] sm:$0xf]
    %v2848 = vld [vmem:[%s7 + $0x28] sm:$0xf]
    %v2849 = vld [vmem:[%s7 + $0x2c] sm:$0xf]
    %v2850 = vld [vmem:[%s7 + $0x30] sm:$0xf]
    %v2851 = vld [vmem:[%s7 + $0x34] sm:$0xf]
    %v2852 = vld [vmem:[%s7 + $0x38] sm:$0xf]
    %v2853 = vld [vmem:[%s7 + $0x3c] sm:$0xf]
    %v2854 = vld [vmem:[%s7 + $0x40] sm:$0xf]
    %v2855 = vld [vmem:[%s7 + $0x44] sm:$0xf]
    %v2856 = vld [vmem:[%s7 + $0x48] sm:$0xf]
    %v2857 = vld [vmem:[%s7 + $0x4c] sm:$0xf]
    %v2858 = vld [vmem:[%s7 + $0x50] sm:$0xf]
    %v2859 = vld [vmem:[%s7 + $0x54] sm:$0xf]
    %v2860 = vld [vmem:[%s7 + $0x58] sm:$0xf]
    %v2861 = vld [vmem:[%s7 + $0x5c] sm:$0xf]
    %v2862 = vld [vmem:[%s7 + $0x60] sm:$0xf]
    %v2863 = vld [vmem:[%s7 + $0x64] sm:$0xf]
    %v2864 = vld [vmem:[%s7 + $0x68] sm:$0xf]
    %v2865 = vld [vmem:[%s7 + $0x6c] sm:$0xf]
    %v2866 = vld [vmem:[%s7 + $0x70] sm:$0xf]
    %v2867 = vld [vmem:[%s7 + $0x74] sm:$0xf]
    %v2868 = vld [vmem:[%s7 + $0x78] sm:$0xf]
    %v2869 = vld [vmem:[%s7 + $0x7c] sm:$0xf]
    %v2870 = vld [vmem:[%s8] sm:$0x1]
    %v2872 = vperm.slane %v2870, 0
    %v2906 = vunpack.c.l.b16 %v2838
    %v2907 = vunpack.c.l.b16 %v2839
    %v2908 = vunpack.c.l.b16 %v2840
    %v2909 = vunpack.c.l.b16 %v2841
    %v2910 = vunpack.c.l.b16 %v2842
    %v2911 = vunpack.c.l.b16 %v2843
    %v2912 = vunpack.c.l.b16 %v2844
    %v2913 = vunpack.c.l.b16 %v2845
    %v2914 = vunpack.c.l.b16 %v2846
    %v2915 = vunpack.c.l.b16 %v2847
    %v2916 = vunpack.c.l.b16 %v2848
    %v2917 = vunpack.c.l.b16 %v2849
    %v2918 = vunpack.c.l.b16 %v2850
    %v2919 = vunpack.c.l.b16 %v2851
    %v2920 = vunpack.c.l.b16 %v2852
    %v2921 = vunpack.c.l.b16 %v2853
    %v2922 = vunpack.c.l.b16 %v2854
    %v2923 = vunpack.c.l.b16 %v2855
    %v2924 = vunpack.c.l.b16 %v2856
    %v2925 = vunpack.c.l.b16 %v2857
    %v2926 = vunpack.c.l.b16 %v2858
    %v2927 = vunpack.c.l.b16 %v2859
    %v2928 = vunpack.c.l.b16 %v2860
    %v2929 = vunpack.c.l.b16 %v2861
    %v2930 = vunpack.c.l.b16 %v2862
    %v2931 = vunpack.c.l.b16 %v2863
    %v2932 = vunpack.c.l.b16 %v2864
    %v2933 = vunpack.c.l.b16 %v2865
    %v2934 = vunpack.c.l.b16 %v2866
    %v2935 = vunpack.c.l.b16 %v2867
    %v2936 = vunpack.c.l.b16 %v2868
    %v2937 = vunpack.c.l.b16 %v2869
    %v2938 = vpack.c.b16 %v2907, %v2906
    %v2939 = vpack.c.b16 %v2909, %v2908
    %v2940 = vpack.c.b16 %v2911, %v2910
    %v2941 = vpack.c.b16 %v2913, %v2912
    %v2942 = vpack.c.b16 %v2915, %v2914
    %v2943 = vpack.c.b16 %v2917, %v2916
    %v2944 = vpack.c.b16 %v2919, %v2918
    %v2945 = vpack.c.b16 %v2921, %v2920
    %v2946 = vpack.c.b16 %v2923, %v2922
    %v2947 = vpack.c.b16 %v2925, %v2924
    %v2948 = vpack.c.b16 %v2927, %v2926
    %v2949 = vpack.c.b16 %v2929, %v2928
    %v2950 = vpack.c.b16 %v2931, %v2930
    %v2951 = vpack.c.b16 %v2933, %v2932
    %v2952 = vpack.c.b16 %v2935, %v2934
    %v2953 = vpack.c.b16 %v2937, %v2936
    %2970 = vmatpush.bf16.msra.mxu0 %v2945
    %2971 = vmatpush.bf16.msra.mxu0 %v2944
    %2972 = vmatpush.bf16.msra.mxu0 %v2943
    %2973 = vmatpush.bf16.msra.mxu0 %v2942
    %2974 = vmatpush.bf16.msra.mxu0 %v2941
    %2975 = vmatpush.bf16.msra.mxu0 %v2940
    %2976 = vmatpush.bf16.msra.mxu0 %v2939
    %2977 = vmatpush.bf16.msra.mxu0 %v2938
    %2978 = vmatmul.bf16.gmra.mxu0 %v2836
    %v2979 = vpop.f32.mrf.mxu0
    %v2980 = vadd.f32 %v2872, %v2979
    %v2981 = vpop.f32.mrf.mxu0
    %2982 = vdwg.mxu0
    %2983 = vmatpush.bf16.msra.mxu0 %v2953
    %2984 = vmatpush.bf16.msra.mxu0 %v2952
    %2985 = vmatpush.bf16.msra.mxu0 %v2951
    %2986 = vmatpush.bf16.msra.mxu0 %v2950
    %2987 = vmatpush.bf16.msra.mxu0 %v2949
    %2988 = vmatpush.bf16.msra.mxu0 %v2948
    %2989 = vmatpush.bf16.msra.mxu0 %v2947
    %2990 = vmatpush.bf16.msra.mxu0 %v2946
    %2991 = vmatmul.bf16.gmra.mxu0 %v2837
    %v2992 = vpop.f32.mrf.mxu0
    %v2993 = vadd.f32 %v2980, %v2992
    %v2994 = vpop.f32.mrf.mxu0
    %2995 = vdwg.mxu0
    %2996 = vst [vmem:[#allocation2] sm:$0x3] %v2993
    // Predicated region
    $region38: #{faster_rcnn_encoder_forward.3} parent=1 // pred_check
      _
    $region39: #{faster_rcnn_encoder_forward.3} parent=1 // pred_check_branch
      %2998 = sbr.rel (0) target = $region41
    $region40: #{faster_rcnn_encoder_forward.3} parent=1 // pred_region
      %3000 = vsyncadd [#allocation3], 0
      %s3002 = sshll.u32 [#allocation2], 4
      %s3003 = int_to_ptr.vmem [resolvable:$true] %s3002
      %s3004 = sshll.u32 %s9, 4
      %s3005 = int_to_ptr.hbm [resolvable:$true] %s3004
      %3007 = dma.vmem_to_hbm [thread:$0]  %s3003, 32, %s3005, [#allocation3]
    $region41: #{faster_rcnn_encoder_forward.3} parent=1 // pred_fallthru
      _
    // Predicated region
    $region42: #{faster_rcnn_encoder_forward.3} parent=1 // pred_check
      _
    $region43: #{faster_rcnn_encoder_forward.3} parent=1 // pred_check_branch
      %3009 = sbr.rel (0) target = $region45
    $region44: #{faster_rcnn_encoder_forward.3} parent=1 // pred_region
      %3011 = dma.done [#allocation3], 32
    $region45: #{faster_rcnn_encoder_forward.3} parent=1 // pred_fallthru
      _
    %3012 = vsyncpa [#allocation3], 1

</llo_original>
